<compile_context>
chip_gen: v7x
topology: tpu7x:2x2x1
jax: 0.10.0
libtpu: 0.0.40
codegen_flags: <defaults>
</compile_context>

<pallas_src>
import functools

import jax
import jax.numpy as jnp
from jax.experimental import pallas as pl
from jax.experimental.pallas import tpu as pltpu

EPS_LN = 1e-5       # nn.LayerNorm default eps
EPS_ATTN = 1e-6     # SlotAttention epsilon
NUM_ITERS = 3


def _layernorm(x, g, b):
    mean = jnp.mean(x, axis=-1, keepdims=True)
    var = jnp.mean(jnp.square(x - mean), axis=-1, keepdims=True)
    return (x - mean) * jax.lax.rsqrt(var + EPS_LN) * g + b


def slot_attention_kernel(
    feat_ref, sinit_ref,                    # per-batch-block data
    wkv_ref, wslab_ref, w2_ref, vec_ref,    # packed, grid-invariant params
    slots_out, attn_out,
    *, num_iters, matmul_dtype,
):
    BB, N, F = feat_ref.shape
    S, D = sinit_ref.shape[1], sinit_ref.shape[2]
    M = w2_ref.shape[0]
    rows = BB * S

    # ---- hoisted loop-invariant parameter loads / casts / broadcasts -------
    ln_f_g = vec_ref[0:1, :F]
    ln_f_b = vec_ref[1:2, :F]
    ln_s_g = jnp.broadcast_to(vec_ref[2:3, :D], (rows, D))
    ln_s_b = jnp.broadcast_to(vec_ref[3:4, :D], (rows, D))
    ln_m_g = jnp.broadcast_to(vec_ref[4:5, :D], (rows, D))
    ln_m_b = jnp.broadcast_to(vec_ref[5:6, :D], (rows, D))
    b1 = jnp.broadcast_to(vec_ref[6:7, :M], (rows, M))
    b2 = jnp.broadcast_to(vec_ref[7:8, :D], (rows, D))

    wkv = wkv_ref[...].astype(matmul_dtype)          # [F, 2D]  (k | v)
    wsl = wslab_ref[...].astype(matmul_dtype)        # [D, 7D + M]
    wq = wsl[:, 0:D]                                 # attn scale pre-folded
    wi3 = wsl[:, D:4 * D]                            # (ir | iz | in)
    wh3 = wsl[:, 4 * D:7 * D]                        # (hr | hz | hn)
    w1 = wsl[:, 7 * D:7 * D + M]
    w2 = w2_ref[...].astype(matmul_dtype)            # [M, D]

    # ---- shared k / v projection: one fused, batch-flattened matmul --------
    f2 = feat_ref[...].reshape(BB * N, F)
    fn = _layernorm(f2, ln_f_g, ln_f_b)
    kv = jnp.dot(fn.astype(matmul_dtype), wkv,
                 preferred_element_type=jnp.float32)           # [BB*N, 2D]
    k = kv[:, :D].reshape(BB, N, D).astype(matmul_dtype)
    v = kv[:, D:].reshape(BB, N, D).astype(matmul_dtype)

    slots = sinit_ref[...].reshape(rows, D)                    # f32 [BB*S, D]

    attn = None
    # NOTE: the reference applies a straight-through trick on the last
    # iteration (slots.detach() + slots_init - slots_init.detach()), which is
    # a numerical no-op in the forward pass, so it is omitted here.
    # TODO(synk): gradient (straight-through / detach) semantics not modeled.
    for _ in range(num_iters):
        slots_prev = slots
        sn = _layernorm(slots, ln_s_g, ln_s_b)
        q = jnp.dot(sn.astype(matmul_dtype), wq,
                    preferred_element_type=jnp.float32)        # [BB*S, D]
        q3 = q.reshape(BB, S, D).astype(matmul_dtype)
        # logits[b, i, j] = sum_d q[b, i, d] * k[b, j, d]  (scale folded in wq)
        logits = jax.lax.dot_general(
            q3, k, (((2,), (2,)), ((0,), (0,))),
            preferred_element_type=jnp.float32)                # [BB, S, N]
        # softmax over the SLOT axis (dim=1 of [B, S, N])
        logits = logits - jnp.max(logits, axis=1, keepdims=True)
        e = jnp.exp(logits)
        attn = e * pl.reciprocal(jnp.sum(e, axis=1, keepdims=True), approx=True)
        attn_sum = jnp.sum(attn, axis=-1, keepdims=True) + EPS_ATTN
        attn_wm = attn * pl.reciprocal(attn_sum, approx=True)
        updates = jax.lax.dot_general(
            attn_wm.astype(matmul_dtype), v, (((2,), (1,)), ((0,), (0,))),
            preferred_element_type=jnp.float32)                # [BB, S, D]
        updates2 = updates.reshape(rows, D)

        # GRUCell with fused gate matmuls (bias_ih / bias_hh are zero in ref)
        gi = jnp.dot(updates2.astype(matmul_dtype), wi3,
                     preferred_element_type=jnp.float32)       # [BB*S, 3D]
        gh = jnp.dot(slots_prev.astype(matmul_dtype), wh3,
                     preferred_element_type=jnp.float32)       # [BB*S, 3D]
        r = jax.nn.sigmoid(gi[:, 0:D] + gh[:, 0:D])
        zg = jax.nn.sigmoid(gi[:, D:2 * D] + gh[:, D:2 * D])
        n = jnp.tanh(gi[:, 2 * D:3 * D] + r * gh[:, 2 * D:3 * D])
        slots = (1.0 - zg) * n + zg * slots_prev

        # residual MLP: slots + W2 @ relu(W1 @ LN(slots) + b1) + b2
        smn = _layernorm(slots, ln_m_g, ln_m_b)
        h = jax.nn.relu(jnp.dot(smn.astype(matmul_dtype), w1,
                                preferred_element_type=jnp.float32) + b1)
        slots = slots + jnp.dot(h.astype(matmul_dtype), w2,
                                preferred_element_type=jnp.float32) + b2

    slots_out[...] = slots.reshape(BB, S, D)
    attn_out[...] = attn


def pack_params(p, feat_size, slot_size, mlp_size):
    """Pack the 19 small parameter arrays into 4 tensors (host-side)."""
    D, F, M = slot_size, feat_size, mlp_size
    scale = D ** -0.5
    wkv = jnp.concatenate([p["wk"], p["wv"]], axis=1)                    # [F, 2D]
    w_slab = jnp.concatenate(
        [p["wq"] * scale,                                                # fold scale
         p["w_ir"], p["w_iz"], p["w_in"],
         p["w_hr"], p["w_hz"], p["w_hn"],
         p["w1"]], axis=1)                                               # [D, 7D+M]
    w2 = p["w2"]                                                         # [M, D]
    L = max(F, D, M)

    def row(x):
        x = x.reshape(1, -1)
        return jnp.pad(x, ((0, 0), (0, L - x.shape[1])))

    vec_slab = jnp.concatenate(
        [row(p["ln_f_g"]), row(p["ln_f_b"]),
         row(p["ln_s_g"]), row(p["ln_s_b"]),
         row(p["ln_m_g"]), row(p["ln_m_b"]),
         row(p["b1"]), row(p["b2"])], axis=0)                            # [8, L]
    return wkv, w_slab, w2, vec_slab


def slot_attention(features, slots_init, params, *, num_batch_blocks=None,
                   matmul_dtype=jnp.bfloat16, num_iters=NUM_ITERS):
    B, N, F = features.shape
    _, S, D = slots_init.shape
    M = params["w1"].shape[1]

    wkv, w_slab, w2, vec_slab = pack_params(params, F, D, M)

    # Keep >= 2 parallel grid steps so both v7x TensorCores get work; on
    # v5e/v6e (1 TC) the remaining 2-step grid overhead is negligible.
    if num_batch_blocks is None:
        num_batch_blocks = 2 if (B >= 2 and B % 2 == 0) else 1
    assert B % num_batch_blocks == 0, "batch must divide evenly into blocks"
    BB = B // num_batch_blocks

    kernel = functools.partial(slot_attention_kernel,
                               num_iters=num_iters, matmul_dtype=matmul_dtype)

    def full_spec(arr):
        nd = arr.ndim
        return pl.BlockSpec(arr.shape, lambda b, _n=nd: (0,) * _n)

    in_specs = [
        pl.BlockSpec((BB, N, F), lambda b: (b, 0, 0)),
        pl.BlockSpec((BB, S, D), lambda b: (b, 0, 0)),
        full_spec(wkv), full_spec(w_slab), full_spec(w2), full_spec(vec_slab),
    ]
    out_specs = [
        pl.BlockSpec((BB, S, D), lambda b: (b, 0, 0)),
        pl.BlockSpec((BB, S, N), lambda b: (b, 0, 0)),
    ]
    out_shape = [
        jax.ShapeDtypeStruct((B, S, D), jnp.float32),
        jax.ShapeDtypeStruct((B, S, N), jnp.float32),
    ]

    # NOTE: at production token counts, raise vmem_limit_bytes (v7x has only
    # 64 MiB physical VMEM) or tile N; at these shapes default VMEM is plenty.
    return pl.pallas_call(
        kernel,
        out_shape=out_shape,
        grid_spec=pltpu.PrefetchScalarGridSpec(
            num_scalar_prefetch=0,
            grid=(num_batch_blocks,),
            in_specs=in_specs,
            out_specs=out_specs,
        ),
        compiler_params=pltpu.CompilerParams(
            dimension_semantics=("parallel",)),
    )(features, slots_init, wkv, w_slab, w2, vec_slab)


def _xavier(key, shape, gain=1.0):
    fan_in, fan_out = shape[0], shape[1]
    limit = gain * (6.0 / (fan_in + fan_out)) ** 0.5
    return jax.random.uniform(key, shape, jnp.float32, -limit, limit)


def _kaiming(key, shape):
    # kaiming_uniform for relu: bound = sqrt(6 / fan_in)
    limit = (6.0 / shape[0]) ** 0.5
    return jax.random.uniform(key, shape, jnp.float32, -limit, limit)


def init_params(key, feat_size, slot_size, mlp_size):
    ks = jax.random.split(key, 16)
    return {
        "ln_f_g": jnp.ones((1, feat_size), jnp.float32),
        "ln_f_b": jnp.zeros((1, feat_size), jnp.float32),
        # projections stored already transposed so the kernel right-multiplies
        "wk": _xavier(ks[0], (feat_size, slot_size)),
        "wv": _xavier(ks[1], (feat_size, slot_size)),
        "wq": _xavier(ks[2], (slot_size, slot_size)),
        "ln_s_g": jnp.ones((1, slot_size), jnp.float32),
        "ln_s_b": jnp.zeros((1, slot_size), jnp.float32),
        # GRU weights per gate (r, z, n), transposed; biases are zeros in ref
        "w_ir": _xavier(ks[3], (slot_size, slot_size)),
        "w_iz": _xavier(ks[4], (slot_size, slot_size)),
        "w_in": _xavier(ks[5], (slot_size, slot_size)),
        "w_hr": _xavier(ks[6], (slot_size, slot_size)),
        "w_hz": _xavier(ks[7], (slot_size, slot_size)),
        "w_hn": _xavier(ks[8], (slot_size, slot_size)),
        "ln_m_g": jnp.ones((1, slot_size), jnp.float32),
        "ln_m_b": jnp.zeros((1, slot_size), jnp.float32),
        "w1": _kaiming(ks[9], (slot_size, mlp_size)),
        "b1": jnp.zeros((1, mlp_size), jnp.float32),
        "w2": _xavier(ks[10], (mlp_size, slot_size)),
        "b2": jnp.zeros((1, slot_size), jnp.float32),
    }


if __name__ == "__main__":
    # small but lane-aligned shapes consistent with the module's forward:
    # features [B, N, feat_size], slots [B, num_slots, slot_size]
    B, N, FEAT = 4, 128, 128
    NUM_SLOTS, SLOT, MLP = 8, 128, 128
    sigma = 0.1

    key = jax.random.PRNGKey(0)
    k_feat, k_param, k_emb, k_z = jax.random.split(key, 4)

    features = jax.random.normal(k_feat, (B, N, FEAT), jnp.float32)
    params = init_params(k_param, FEAT, SLOT, MLP)

    # slots_init = mu + z * sigma * mu  (mu = learned embedding, z ~ N(0,1))
    mu_w = _xavier(k_emb, (NUM_SLOTS, SLOT))
    mu = jnp.broadcast_to(mu_w[None], (B, NUM_SLOTS, SLOT))
    z = jax.random.normal(k_z, (B, NUM_SLOTS, SLOT), jnp.float32)
    slots_init = mu + z * sigma * mu

    slots, attn = slot_attention(features, slots_init, params)
    jax.block_until_ready((slots, attn))
    assert slots.shape == (B, NUM_SLOTS, SLOT)
    assert attn.shape == (B, NUM_SLOTS, N)
    print("KERNEL_OK")
</pallas_src>

<mosaic_0001>
module attributes {stable_mosaic.version = 11 : i64} {
  func.func @slot_attention_kernel(%arg0: i32, %arg1: memref<2x128x128xf32, #tpu.memory_space<vmem>>, %arg2: memref<2x8x128xf32, #tpu.memory_space<vmem>>, %arg3: memref<128x256xf32, #tpu.memory_space<vmem>>, %arg4: memref<128x1024xf32, #tpu.memory_space<vmem>>, %arg5: memref<128x128xf32, #tpu.memory_space<vmem>>, %arg6: memref<8x128xf32, #tpu.memory_space<vmem>>, %arg7: memref<2x8x128xf32, #tpu.memory_space<vmem>>, %arg8: memref<2x8x128xf32, #tpu.memory_space<vmem>>) attributes {dimension_semantics = [#tpu.dimension_semantics<parallel>], iteration_bounds = array<i64: 2>, scalar_prefetch = 0 : i64, scratch_operands = 0 : i64, tpu.core_type = #tpu.core_type<tc>, window_params = [{transform_indices = @transform_0, window_bounds = array<i64: 2, 128, 128>}, {transform_indices = @transform_1, window_bounds = array<i64: 2, 8, 128>}, {pipeline_mode = #tpu.pipeline_mode<synchronous>, transform_indices = @transform_2, window_bounds = array<i64: 128, 256>}, {pipeline_mode = #tpu.pipeline_mode<synchronous>, transform_indices = @transform_3, window_bounds = array<i64: 128, 1024>}, {pipeline_mode = #tpu.pipeline_mode<synchronous>, transform_indices = @transform_4, window_bounds = array<i64: 128, 128>}, {pipeline_mode = #tpu.pipeline_mode<synchronous>, transform_indices = @transform_5, window_bounds = array<i64: 8, 128>}, {transform_indices = @transform_6, window_bounds = array<i64: 2, 8, 128>}, {transform_indices = @transform_7, window_bounds = array<i64: 2, 8, 128>}]} {
    %c0 = arith.constant 0 : index
    %c0_0 = arith.constant 0 : index
    %0 = vector.load %arg6[%c0, %c0_0] : memref<8x128xf32, #tpu.memory_space<vmem>>, vector<1x128xf32>
    %c1 = arith.constant 1 : index
    %c0_1 = arith.constant 0 : index
    %1 = vector.load %arg6[%c1, %c0_1] : memref<8x128xf32, #tpu.memory_space<vmem>>, vector<1x128xf32>
    %c2 = arith.constant 2 : index
    %c0_2 = arith.constant 0 : index
    %2 = vector.load %arg6[%c2, %c0_2] : memref<8x128xf32, #tpu.memory_space<vmem>>, vector<1x128xf32>
    %3 = vector.shape_cast %2 : vector<1x128xf32> to vector<1x128xf32>
    %4 = vector.broadcast %3 : vector<1x128xf32> to vector<16x128xf32>
    %c3 = arith.constant 3 : index
    %c0_3 = arith.constant 0 : index
    %5 = vector.load %arg6[%c3, %c0_3] : memref<8x128xf32, #tpu.memory_space<vmem>>, vector<1x128xf32>
    %6 = vector.shape_cast %5 : vector<1x128xf32> to vector<1x128xf32>
    %7 = vector.broadcast %6 : vector<1x128xf32> to vector<16x128xf32>
    %c4 = arith.constant 4 : index
    %c0_4 = arith.constant 0 : index
    %8 = vector.load %arg6[%c4, %c0_4] : memref<8x128xf32, #tpu.memory_space<vmem>>, vector<1x128xf32>
    %9 = vector.shape_cast %8 : vector<1x128xf32> to vector<1x128xf32>
    %10 = vector.broadcast %9 : vector<1x128xf32> to vector<16x128xf32>
    %c5 = arith.constant 5 : index
    %c0_5 = arith.constant 0 : index
    %11 = vector.load %arg6[%c5, %c0_5] : memref<8x128xf32, #tpu.memory_space<vmem>>, vector<1x128xf32>
    %12 = vector.shape_cast %11 : vector<1x128xf32> to vector<1x128xf32>
    %13 = vector.broadcast %12 : vector<1x128xf32> to vector<16x128xf32>
    %c6 = arith.constant 6 : index
    %c0_6 = arith.constant 0 : index
    %14 = vector.load %arg6[%c6, %c0_6] : memref<8x128xf32, #tpu.memory_space<vmem>>, vector<1x128xf32>
    %15 = vector.shape_cast %14 : vector<1x128xf32> to vector<1x128xf32>
    %16 = vector.broadcast %15 : vector<1x128xf32> to vector<16x128xf32>
    %c7 = arith.constant 7 : index
    %c0_7 = arith.constant 0 : index
    %17 = vector.load %arg6[%c7, %c0_7] : memref<8x128xf32, #tpu.memory_space<vmem>>, vector<1x128xf32>
    %18 = vector.shape_cast %17 : vector<1x128xf32> to vector<1x128xf32>
    %19 = vector.broadcast %18 : vector<1x128xf32> to vector<16x128xf32>
    %c0_8 = arith.constant 0 : index
    %c0_9 = arith.constant 0 : index
    %20 = vector.load %arg3[%c0_8, %c0_9] : memref<128x256xf32, #tpu.memory_space<vmem>>, vector<128x256xf32>
    %21 = arith.truncf %20 : vector<128x256xf32> to vector<128x256xbf16>
    %c0_10 = arith.constant 0 : index
    %c0_11 = arith.constant 0 : index
    %22 = vector.load %arg4[%c0_10, %c0_11] : memref<128x1024xf32, #tpu.memory_space<vmem>>, vector<128x1024xf32>
    %23 = arith.truncf %22 : vector<128x1024xf32> to vector<128x1024xbf16>
    %24 = vector.extract_strided_slice %23 {offsets = [0, 0], sizes = [128, 128], strides = [1, 1]} : vector<128x1024xbf16> to vector<128x128xbf16>
    %25 = vector.extract_strided_slice %23 {offsets = [0, 128], sizes = [128, 384], strides = [1, 1]} : vector<128x1024xbf16> to vector<128x384xbf16>
    %26 = vector.extract_strided_slice %23 {offsets = [0, 512], sizes = [128, 384], strides = [1, 1]} : vector<128x1024xbf16> to vector<128x384xbf16>
    %27 = vector.extract_strided_slice %23 {offsets = [0, 896], sizes = [128, 128], strides = [1, 1]} : vector<128x1024xbf16> to vector<128x128xbf16>
    %c0_12 = arith.constant 0 : index
    %c0_13 = arith.constant 0 : index
    %28 = vector.load %arg5[%c0_12, %c0_13] : memref<128x128xf32, #tpu.memory_space<vmem>>, vector<128x128xf32>
    %29 = arith.truncf %28 : vector<128x128xf32> to vector<128x128xbf16>
    %c0_14 = arith.constant 0 : index
    %c0_15 = arith.constant 0 : index
    %c0_16 = arith.constant 0 : index
    %30 = vector.load %arg1[%c0_14, %c0_15, %c0_16] : memref<2x128x128xf32, #tpu.memory_space<vmem>>, vector<2x128x128xf32>
    %31 = vector.shape_cast %30 : vector<2x128x128xf32> to vector<256x128xf32>
    %cst = arith.constant dense<0.000000e+00> : vector<256xf32>
    %32 = vector.multi_reduction <add>, %31, %cst [1] : vector<256x128xf32> to vector<256xf32>
    %33 = vector.shape_cast %32 : vector<256xf32> to vector<256x1xf32>
    %cst_17 = arith.constant 1.280000e+02 : f32
    %34 = vector.broadcast %cst_17 : f32 to vector<256x1xf32>
    %35 = arith.divf %33, %34 : vector<256x1xf32>
    %36 = vector.broadcast %35 : vector<256x1xf32> to vector<256x128xf32>
    %37 = arith.subf %31, %36 : vector<256x128xf32>
    %38 = arith.mulf %37, %37 : vector<256x128xf32>
    %cst_18 = arith.constant dense<0.000000e+00> : vector<256xf32>
    %39 = vector.multi_reduction <add>, %38, %cst_18 [1] : vector<256x128xf32> to vector<256xf32>
    %40 = vector.shape_cast %39 : vector<256xf32> to vector<256x1xf32>
    %cst_19 = arith.constant 1.280000e+02 : f32
    %41 = vector.broadcast %cst_19 : f32 to vector<256x1xf32>
    %42 = arith.divf %40, %41 : vector<256x1xf32>
    %43 = vector.broadcast %35 : vector<256x1xf32> to vector<256x128xf32>
    %44 = arith.subf %31, %43 : vector<256x128xf32>
    %cst_20 = arith.constant 9.99999974E-6 : f32
    %45 = vector.broadcast %cst_20 : f32 to vector<256x1xf32>
    %46 = arith.addf %42, %45 : vector<256x1xf32>
    %47 = math.rsqrt %46 : vector<256x1xf32>
    %48 = vector.broadcast %47 : vector<256x1xf32> to vector<256x128xf32>
    %49 = arith.mulf %44, %48 : vector<256x128xf32>
    %50 = vector.broadcast %0 : vector<1x128xf32> to vector<256x128xf32>
    %51 = arith.mulf %49, %50 : vector<256x128xf32>
    %52 = vector.broadcast %1 : vector<1x128xf32> to vector<256x128xf32>
    %53 = arith.addf %51, %52 : vector<256x128xf32>
    %54 = arith.truncf %53 : vector<256x128xf32> to vector<256x128xbf16>
    %cst_21 = arith.constant dense<0.000000e+00> : vector<256x256xf32>
    %55 = tpu.matmul %54, %21, %cst_21 {dimension_numbers = #tpu.dot_dimension_numbers<[1], [0], [0], [1], [0, 0, 1, 1], [], []>} : vector<256x128xbf16>, vector<128x256xbf16>, vector<256x256xf32> -> vector<256x256xf32>
    %56 = vector.extract_strided_slice %55 {offsets = [0, 0], sizes = [256, 128], strides = [1, 1]} : vector<256x256xf32> to vector<256x128xf32>
    %57 = vector.shape_cast %56 : vector<256x128xf32> to vector<2x128x128xf32>
    %58 = arith.truncf %57 : vector<2x128x128xf32> to vector<2x128x128xbf16>
    %59 = vector.extract_strided_slice %55 {offsets = [0, 128], sizes = [256, 128], strides = [1, 1]} : vector<256x256xf32> to vector<256x128xf32>
    %60 = vector.shape_cast %59 : vector<256x128xf32> to vector<2x128x128xf32>
    %61 = arith.truncf %60 : vector<2x128x128xf32> to vector<2x128x128xbf16>
    %c0_22 = arith.constant 0 : index
    %c0_23 = arith.constant 0 : index
    %c0_24 = arith.constant 0 : index
    %62 = vector.load %arg2[%c0_22, %c0_23, %c0_24] : memref<2x8x128xf32, #tpu.memory_space<vmem>>, vector<2x8x128xf32>
    %63 = vector.shape_cast %62 : vector<2x8x128xf32> to vector<16x128xf32>
    %cst_25 = arith.constant dense<0.000000e+00> : vector<16xf32>
    %64 = vector.multi_reduction <add>, %63, %cst_25 [1] : vector<16x128xf32> to vector<16xf32>
    %65 = vector.shape_cast %64 : vector<16xf32> to vector<16x1xf32>
    %cst_26 = arith.constant 1.280000e+02 : f32
    %66 = vector.broadcast %cst_26 : f32 to vector<16x1xf32>
    %67 = arith.divf %65, %66 : vector<16x1xf32>
    %68 = vector.broadcast %67 : vector<16x1xf32> to vector<16x128xf32>
    %69 = arith.subf %63, %68 : vector<16x128xf32>
    %70 = arith.mulf %69, %69 : vector<16x128xf32>
    %cst_27 = arith.constant dense<0.000000e+00> : vector<16xf32>
    %71 = vector.multi_reduction <add>, %70, %cst_27 [1] : vector<16x128xf32> to vector<16xf32>
    %72 = vector.shape_cast %71 : vector<16xf32> to vector<16x1xf32>
    %cst_28 = arith.constant 1.280000e+02 : f32
    %73 = vector.broadcast %cst_28 : f32 to vector<16x1xf32>
    %74 = arith.divf %72, %73 : vector<16x1xf32>
    %75 = vector.broadcast %67 : vector<16x1xf32> to vector<16x128xf32>
    %76 = arith.subf %63, %75 : vector<16x128xf32>
    %cst_29 = arith.constant 9.99999974E-6 : f32
    %77 = vector.broadcast %cst_29 : f32 to vector<16x1xf32>
    %78 = arith.addf %74, %77 : vector<16x1xf32>
    %79 = math.rsqrt %78 : vector<16x1xf32>
    %80 = vector.broadcast %79 : vector<16x1xf32> to vector<16x128xf32>
    %81 = arith.mulf %76, %80 : vector<16x128xf32>
    %82 = arith.mulf %81, %4 : vector<16x128xf32>
    %83 = arith.addf %82, %7 : vector<16x128xf32>
    %84 = arith.truncf %83 : vector<16x128xf32> to vector<16x128xbf16>
    %cst_30 = arith.constant dense<0.000000e+00> : vector<16x128xf32>
    %85 = tpu.matmul %84, %24, %cst_30 {dimension_numbers = #tpu.dot_dimension_numbers<[1], [0], [0], [1], [0, 0, 1, 1], [], []>} : vector<16x128xbf16>, vector<128x128xbf16>, vector<16x128xf32> -> vector<16x128xf32>
    %86 = vector.shape_cast %85 : vector<16x128xf32> to vector<2x8x128xf32>
    %87 = arith.truncf %86 : vector<2x8x128xf32> to vector<2x8x128xbf16>
    %cst_31 = arith.constant dense<0.000000e+00> : vector<2x8x128xf32>
    %88 = tpu.matmul %87, %58, %cst_31 {dimension_numbers = #tpu.dot_dimension_numbers<[2], [2], [1], [1], [0, 0, 0, 1, 1, 1], [0], [0]>} : vector<2x8x128xbf16>, vector<2x128x128xbf16>, vector<2x8x128xf32> -> vector<2x8x128xf32>
    %cst_32 = arith.constant dense<0xFF800000> : vector<2x128xf32>
    %89 = vector.multi_reduction <maximumf>, %88, %cst_32 [1] : vector<2x8x128xf32> to vector<2x128xf32>
    %90 = vector.shape_cast %89 : vector<2x128xf32> to vector<2x1x128xf32>
    %91 = vector.broadcast %90 : vector<2x1x128xf32> to vector<2x8x128xf32>
    %92 = arith.subf %88, %91 : vector<2x8x128xf32>
    %93 = math.exp %92 : vector<2x8x128xf32>
    %cst_33 = arith.constant dense<0.000000e+00> : vector<2x128xf32>
    %94 = vector.multi_reduction <add>, %93, %cst_33 [1] : vector<2x8x128xf32> to vector<2x128xf32>
    %95 = vector.shape_cast %94 : vector<2x128xf32> to vector<2x1x128xf32>
    %96 = tpu.reciprocal %95 {approx = true} : vector<2x1x128xf32> -> vector<2x1x128xf32>
    %97 = vector.broadcast %96 : vector<2x1x128xf32> to vector<2x8x128xf32>
    %98 = arith.mulf %93, %97 : vector<2x8x128xf32>
    %cst_34 = arith.constant dense<0.000000e+00> : vector<2x8xf32>
    %99 = vector.multi_reduction <add>, %98, %cst_34 [2] : vector<2x8x128xf32> to vector<2x8xf32>
    %100 = vector.shape_cast %99 : vector<2x8xf32> to vector<2x8x1xf32>
    %cst_35 = arith.constant 9.99999997E-7 : f32
    %101 = vector.broadcast %cst_35 : f32 to vector<2x8x1xf32>
    %102 = arith.addf %100, %101 : vector<2x8x1xf32>
    %103 = tpu.reciprocal %102 {approx = true} : vector<2x8x1xf32> -> vector<2x8x1xf32>
    %104 = vector.broadcast %103 : vector<2x8x1xf32> to vector<2x8x128xf32>
    %105 = arith.mulf %98, %104 : vector<2x8x128xf32>
    %106 = arith.truncf %105 : vector<2x8x128xf32> to vector<2x8x128xbf16>
    %cst_36 = arith.constant dense<0.000000e+00> : vector<2x8x128xf32>
    %107 = tpu.matmul %106, %61, %cst_36 {dimension_numbers = #tpu.dot_dimension_numbers<[2], [1], [1], [2], [0, 0, 0, 1, 1, 2], [0], [0]>} : vector<2x8x128xbf16>, vector<2x128x128xbf16>, vector<2x8x128xf32> -> vector<2x8x128xf32>
    %108 = vector.shape_cast %107 : vector<2x8x128xf32> to vector<16x128xf32>
    %109 = arith.truncf %108 : vector<16x128xf32> to vector<16x128xbf16>
    %cst_37 = arith.constant dense<0.000000e+00> : vector<16x384xf32>
    %110 = tpu.matmul %109, %25, %cst_37 {dimension_numbers = #tpu.dot_dimension_numbers<[1], [0], [0], [1], [0, 0, 1, 1], [], []>} : vector<16x128xbf16>, vector<128x384xbf16>, vector<16x384xf32> -> vector<16x384xf32>
    %111 = arith.truncf %63 : vector<16x128xf32> to vector<16x128xbf16>
    %cst_38 = arith.constant dense<0.000000e+00> : vector<16x384xf32>
    %112 = tpu.matmul %111, %26, %cst_38 {dimension_numbers = #tpu.dot_dimension_numbers<[1], [0], [0], [1], [0, 0, 1, 1], [], []>} : vector<16x128xbf16>, vector<128x384xbf16>, vector<16x384xf32> -> vector<16x384xf32>
    %113 = vector.extract_strided_slice %110 {offsets = [0, 0], sizes = [16, 128], strides = [1, 1]} : vector<16x384xf32> to vector<16x128xf32>
    %114 = vector.extract_strided_slice %112 {offsets = [0, 0], sizes = [16, 128], strides = [1, 1]} : vector<16x384xf32> to vector<16x128xf32>
    %115 = arith.addf %113, %114 : vector<16x128xf32>
    %116 = arith.negf %115 : vector<16x128xf32>
    %117 = math.exp %116 : vector<16x128xf32>
    %cst_39 = arith.constant 1.000000e+00 : f32
    %118 = vector.broadcast %cst_39 : f32 to vector<16x128xf32>
    %119 = arith.addf %118, %117 : vector<16x128xf32>
    %120 = arith.divf %118, %119 : vector<16x128xf32>
    %121 = vector.extract_strided_slice %110 {offsets = [0, 128], sizes = [16, 128], strides = [1, 1]} : vector<16x384xf32> to vector<16x128xf32>
    %122 = vector.extract_strided_slice %112 {offsets = [0, 128], sizes = [16, 128], strides = [1, 1]} : vector<16x384xf32> to vector<16x128xf32>
    %123 = arith.addf %121, %122 : vector<16x128xf32>
    %124 = arith.negf %123 : vector<16x128xf32>
    %125 = math.exp %124 : vector<16x128xf32>
    %cst_40 = arith.constant 1.000000e+00 : f32
    %126 = vector.broadcast %cst_40 : f32 to vector<16x128xf32>
    %127 = arith.addf %126, %125 : vector<16x128xf32>
    %128 = arith.divf %126, %127 : vector<16x128xf32>
    %129 = vector.extract_strided_slice %110 {offsets = [0, 256], sizes = [16, 128], strides = [1, 1]} : vector<16x384xf32> to vector<16x128xf32>
    %130 = vector.extract_strided_slice %112 {offsets = [0, 256], sizes = [16, 128], strides = [1, 1]} : vector<16x384xf32> to vector<16x128xf32>
    %131 = arith.mulf %120, %130 : vector<16x128xf32>
    %132 = arith.addf %129, %131 : vector<16x128xf32>
    %133 = math.tanh %132 : vector<16x128xf32>
    %cst_41 = arith.constant 1.000000e+00 : f32
    %134 = vector.broadcast %cst_41 : f32 to vector<16x128xf32>
    %135 = arith.subf %134, %128 : vector<16x128xf32>
    %136 = arith.mulf %135, %133 : vector<16x128xf32>
    %137 = arith.mulf %128, %63 : vector<16x128xf32>
    %138 = arith.addf %136, %137 : vector<16x128xf32>
    %cst_42 = arith.constant dense<0.000000e+00> : vector<16xf32>
    %139 = vector.multi_reduction <add>, %138, %cst_42 [1] : vector<16x128xf32> to vector<16xf32>
    %140 = vector.shape_cast %139 : vector<16xf32> to vector<16x1xf32>
    %cst_43 = arith.constant 1.280000e+02 : f32
    %141 = vector.broadcast %cst_43 : f32 to vector<16x1xf32>
    %142 = arith.divf %140, %141 : vector<16x1xf32>
    %143 = vector.broadcast %142 : vector<16x1xf32> to vector<16x128xf32>
    %144 = arith.subf %138, %143 : vector<16x128xf32>
    %145 = arith.mulf %144, %144 : vector<16x128xf32>
    %cst_44 = arith.constant dense<0.000000e+00> : vector<16xf32>
    %146 = vector.multi_reduction <add>, %145, %cst_44 [1] : vector<16x128xf32> to vector<16xf32>
    %147 = vector.shape_cast %146 : vector<16xf32> to vector<16x1xf32>
    %cst_45 = arith.constant 1.280000e+02 : f32
    %148 = vector.broadcast %cst_45 : f32 to vector<16x1xf32>
    %149 = arith.divf %147, %148 : vector<16x1xf32>
    %150 = vector.broadcast %142 : vector<16x1xf32> to vector<16x128xf32>
    %151 = arith.subf %138, %150 : vector<16x128xf32>
    %cst_46 = arith.constant 9.99999974E-6 : f32
    %152 = vector.broadcast %cst_46 : f32 to vector<16x1xf32>
    %153 = arith.addf %149, %152 : vector<16x1xf32>
    %154 = math.rsqrt %153 : vector<16x1xf32>
    %155 = vector.broadcast %154 : vector<16x1xf32> to vector<16x128xf32>
    %156 = arith.mulf %151, %155 : vector<16x128xf32>
    %157 = arith.mulf %156, %10 : vector<16x128xf32>
    %158 = arith.addf %157, %13 : vector<16x128xf32>
    %159 = arith.truncf %158 : vector<16x128xf32> to vector<16x128xbf16>
    %cst_47 = arith.constant dense<0.000000e+00> : vector<16x128xf32>
    %160 = tpu.matmul %159, %27, %cst_47 {dimension_numbers = #tpu.dot_dimension_numbers<[1], [0], [0], [1], [0, 0, 1, 1], [], []>} : vector<16x128xbf16>, vector<128x128xbf16>, vector<16x128xf32> -> vector<16x128xf32>
    %161 = arith.addf %160, %16 : vector<16x128xf32>
    %cst_48 = arith.constant 0.000000e+00 : f32
    %162 = vector.broadcast %cst_48 : f32 to vector<16x128xf32>
    %163 = arith.maximumf %161, %162 : vector<16x128xf32>
    %164 = arith.truncf %163 : vector<16x128xf32> to vector<16x128xbf16>
    %cst_49 = arith.constant dense<0.000000e+00> : vector<16x128xf32>
    %165 = tpu.matmul %164, %29, %cst_49 {dimension_numbers = #tpu.dot_dimension_numbers<[1], [0], [0], [1], [0, 0, 1, 1], [], []>} : vector<16x128xbf16>, vector<128x128xbf16>, vector<16x128xf32> -> vector<16x128xf32>
    %166 = arith.addf %138, %165 : vector<16x128xf32>
    %167 = arith.addf %166, %19 : vector<16x128xf32>
    %cst_50 = arith.constant dense<0.000000e+00> : vector<16xf32>
    %168 = vector.multi_reduction <add>, %167, %cst_50 [1] : vector<16x128xf32> to vector<16xf32>
    %169 = vector.shape_cast %168 : vector<16xf32> to vector<16x1xf32>
    %cst_51 = arith.constant 1.280000e+02 : f32
    %170 = vector.broadcast %cst_51 : f32 to vector<16x1xf32>
    %171 = arith.divf %169, %170 : vector<16x1xf32>
    %172 = vector.broadcast %171 : vector<16x1xf32> to vector<16x128xf32>
    %173 = arith.subf %167, %172 : vector<16x128xf32>
    %174 = arith.mulf %173, %173 : vector<16x128xf32>
    %cst_52 = arith.constant dense<0.000000e+00> : vector<16xf32>
    %175 = vector.multi_reduction <add>, %174, %cst_52 [1] : vector<16x128xf32> to vector<16xf32>
    %176 = vector.shape_cast %175 : vector<16xf32> to vector<16x1xf32>
    %cst_53 = arith.constant 1.280000e+02 : f32
    %177 = vector.broadcast %cst_53 : f32 to vector<16x1xf32>
    %178 = arith.divf %176, %177 : vector<16x1xf32>
    %179 = vector.broadcast %171 : vector<16x1xf32> to vector<16x128xf32>
    %180 = arith.subf %167, %179 : vector<16x128xf32>
    %cst_54 = arith.constant 9.99999974E-6 : f32
    %181 = vector.broadcast %cst_54 : f32 to vector<16x1xf32>
    %182 = arith.addf %178, %181 : vector<16x1xf32>
    %183 = math.rsqrt %182 : vector<16x1xf32>
    %184 = vector.broadcast %183 : vector<16x1xf32> to vector<16x128xf32>
    %185 = arith.mulf %180, %184 : vector<16x128xf32>
    %186 = arith.mulf %185, %4 : vector<16x128xf32>
    %187 = arith.addf %186, %7 : vector<16x128xf32>
    %188 = arith.truncf %187 : vector<16x128xf32> to vector<16x128xbf16>
    %cst_55 = arith.constant dense<0.000000e+00> : vector<16x128xf32>
    %189 = tpu.matmul %188, %24, %cst_55 {dimension_numbers = #tpu.dot_dimension_numbers<[1], [0], [0], [1], [0, 0, 1, 1], [], []>} : vector<16x128xbf16>, vector<128x128xbf16>, vector<16x128xf32> -> vector<16x128xf32>
    %190 = vector.shape_cast %189 : vector<16x128xf32> to vector<2x8x128xf32>
    %191 = arith.truncf %190 : vector<2x8x128xf32> to vector<2x8x128xbf16>
    %cst_56 = arith.constant dense<0.000000e+00> : vector<2x8x128xf32>
    %192 = tpu.matmul %191, %58, %cst_56 {dimension_numbers = #tpu.dot_dimension_numbers<[2], [2], [1], [1], [0, 0, 0, 1, 1, 1], [0], [0]>} : vector<2x8x128xbf16>, vector<2x128x128xbf16>, vector<2x8x128xf32> -> vector<2x8x128xf32>
    %cst_57 = arith.constant dense<0xFF800000> : vector<2x128xf32>
    %193 = vector.multi_reduction <maximumf>, %192, %cst_57 [1] : vector<2x8x128xf32> to vector<2x128xf32>
    %194 = vector.shape_cast %193 : vector<2x128xf32> to vector<2x1x128xf32>
    %195 = vector.broadcast %194 : vector<2x1x128xf32> to vector<2x8x128xf32>
    %196 = arith.subf %192, %195 : vector<2x8x128xf32>
    %197 = math.exp %196 : vector<2x8x128xf32>
    %cst_58 = arith.constant dense<0.000000e+00> : vector<2x128xf32>
    %198 = vector.multi_reduction <add>, %197, %cst_58 [1] : vector<2x8x128xf32> to vector<2x128xf32>
    %199 = vector.shape_cast %198 : vector<2x128xf32> to vector<2x1x128xf32>
    %200 = tpu.reciprocal %199 {approx = true} : vector<2x1x128xf32> -> vector<2x1x128xf32>
    %201 = vector.broadcast %200 : vector<2x1x128xf32> to vector<2x8x128xf32>
    %202 = arith.mulf %197, %201 : vector<2x8x128xf32>
    %cst_59 = arith.constant dense<0.000000e+00> : vector<2x8xf32>
    %203 = vector.multi_reduction <add>, %202, %cst_59 [2] : vector<2x8x128xf32> to vector<2x8xf32>
    %204 = vector.shape_cast %203 : vector<2x8xf32> to vector<2x8x1xf32>
    %cst_60 = arith.constant 9.99999997E-7 : f32
    %205 = vector.broadcast %cst_60 : f32 to vector<2x8x1xf32>
    %206 = arith.addf %204, %205 : vector<2x8x1xf32>
    %207 = tpu.reciprocal %206 {approx = true} : vector<2x8x1xf32> -> vector<2x8x1xf32>
    %208 = vector.broadcast %207 : vector<2x8x1xf32> to vector<2x8x128xf32>
    %209 = arith.mulf %202, %208 : vector<2x8x128xf32>
    %210 = arith.truncf %209 : vector<2x8x128xf32> to vector<2x8x128xbf16>
    %cst_61 = arith.constant dense<0.000000e+00> : vector<2x8x128xf32>
    %211 = tpu.matmul %210, %61, %cst_61 {dimension_numbers = #tpu.dot_dimension_numbers<[2], [1], [1], [2], [0, 0, 0, 1, 1, 2], [0], [0]>} : vector<2x8x128xbf16>, vector<2x128x128xbf16>, vector<2x8x128xf32> -> vector<2x8x128xf32>
    %212 = vector.shape_cast %211 : vector<2x8x128xf32> to vector<16x128xf32>
    %213 = arith.truncf %212 : vector<16x128xf32> to vector<16x128xbf16>
    %cst_62 = arith.constant dense<0.000000e+00> : vector<16x384xf32>
    %214 = tpu.matmul %213, %25, %cst_62 {dimension_numbers = #tpu.dot_dimension_numbers<[1], [0], [0], [1], [0, 0, 1, 1], [], []>} : vector<16x128xbf16>, vector<128x384xbf16>, vector<16x384xf32> -> vector<16x384xf32>
    %215 = arith.truncf %167 : vector<16x128xf32> to vector<16x128xbf16>
    %cst_63 = arith.constant dense<0.000000e+00> : vector<16x384xf32>
    %216 = tpu.matmul %215, %26, %cst_63 {dimension_numbers = #tpu.dot_dimension_numbers<[1], [0], [0], [1], [0, 0, 1, 1], [], []>} : vector<16x128xbf16>, vector<128x384xbf16>, vector<16x384xf32> -> vector<16x384xf32>
    %217 = vector.extract_strided_slice %214 {offsets = [0, 0], sizes = [16, 128], strides = [1, 1]} : vector<16x384xf32> to vector<16x128xf32>
    %218 = vector.extract_strided_slice %216 {offsets = [0, 0], sizes = [16, 128], strides = [1, 1]} : vector<16x384xf32> to vector<16x128xf32>
    %219 = arith.addf %217, %218 : vector<16x128xf32>
    %220 = arith.negf %219 : vector<16x128xf32>
    %221 = math.exp %220 : vector<16x128xf32>
    %cst_64 = arith.constant 1.000000e+00 : f32
    %222 = vector.broadcast %cst_64 : f32 to vector<16x128xf32>
    %223 = arith.addf %222, %221 : vector<16x128xf32>
    %224 = arith.divf %222, %223 : vector<16x128xf32>
    %225 = vector.extract_strided_slice %214 {offsets = [0, 128], sizes = [16, 128], strides = [1, 1]} : vector<16x384xf32> to vector<16x128xf32>
    %226 = vector.extract_strided_slice %216 {offsets = [0, 128], sizes = [16, 128], strides = [1, 1]} : vector<16x384xf32> to vector<16x128xf32>
    %227 = arith.addf %225, %226 : vector<16x128xf32>
    %228 = arith.negf %227 : vector<16x128xf32>
    %229 = math.exp %228 : vector<16x128xf32>
    %cst_65 = arith.constant 1.000000e+00 : f32
    %230 = vector.broadcast %cst_65 : f32 to vector<16x128xf32>
    %231 = arith.addf %230, %229 : vector<16x128xf32>
    %232 = arith.divf %230, %231 : vector<16x128xf32>
    %233 = vector.extract_strided_slice %214 {offsets = [0, 256], sizes = [16, 128], strides = [1, 1]} : vector<16x384xf32> to vector<16x128xf32>
    %234 = vector.extract_strided_slice %216 {offsets = [0, 256], sizes = [16, 128], strides = [1, 1]} : vector<16x384xf32> to vector<16x128xf32>
    %235 = arith.mulf %224, %234 : vector<16x128xf32>
    %236 = arith.addf %233, %235 : vector<16x128xf32>
    %237 = math.tanh %236 : vector<16x128xf32>
    %cst_66 = arith.constant 1.000000e+00 : f32
    %238 = vector.broadcast %cst_66 : f32 to vector<16x128xf32>
    %239 = arith.subf %238, %232 : vector<16x128xf32>
    %240 = arith.mulf %239, %237 : vector<16x128xf32>
    %241 = arith.mulf %232, %167 : vector<16x128xf32>
    %242 = arith.addf %240, %241 : vector<16x128xf32>
    %cst_67 = arith.constant dense<0.000000e+00> : vector<16xf32>
    %243 = vector.multi_reduction <add>, %242, %cst_67 [1] : vector<16x128xf32> to vector<16xf32>
    %244 = vector.shape_cast %243 : vector<16xf32> to vector<16x1xf32>
    %cst_68 = arith.constant 1.280000e+02 : f32
    %245 = vector.broadcast %cst_68 : f32 to vector<16x1xf32>
    %246 = arith.divf %244, %245 : vector<16x1xf32>
    %247 = vector.broadcast %246 : vector<16x1xf32> to vector<16x128xf32>
    %248 = arith.subf %242, %247 : vector<16x128xf32>
    %249 = arith.mulf %248, %248 : vector<16x128xf32>
    %cst_69 = arith.constant dense<0.000000e+00> : vector<16xf32>
    %250 = vector.multi_reduction <add>, %249, %cst_69 [1] : vector<16x128xf32> to vector<16xf32>
    %251 = vector.shape_cast %250 : vector<16xf32> to vector<16x1xf32>
    %cst_70 = arith.constant 1.280000e+02 : f32
    %252 = vector.broadcast %cst_70 : f32 to vector<16x1xf32>
    %253 = arith.divf %251, %252 : vector<16x1xf32>
    %254 = vector.broadcast %246 : vector<16x1xf32> to vector<16x128xf32>
    %255 = arith.subf %242, %254 : vector<16x128xf32>
    %cst_71 = arith.constant 9.99999974E-6 : f32
    %256 = vector.broadcast %cst_71 : f32 to vector<16x1xf32>
    %257 = arith.addf %253, %256 : vector<16x1xf32>
    %258 = math.rsqrt %257 : vector<16x1xf32>
    %259 = vector.broadcast %258 : vector<16x1xf32> to vector<16x128xf32>
    %260 = arith.mulf %255, %259 : vector<16x128xf32>
    %261 = arith.mulf %260, %10 : vector<16x128xf32>
    %262 = arith.addf %261, %13 : vector<16x128xf32>
    %263 = arith.truncf %262 : vector<16x128xf32> to vector<16x128xbf16>
    %cst_72 = arith.constant dense<0.000000e+00> : vector<16x128xf32>
    %264 = tpu.matmul %263, %27, %cst_72 {dimension_numbers = #tpu.dot_dimension_numbers<[1], [0], [0], [1], [0, 0, 1, 1], [], []>} : vector<16x128xbf16>, vector<128x128xbf16>, vector<16x128xf32> -> vector<16x128xf32>
    %265 = arith.addf %264, %16 : vector<16x128xf32>
    %cst_73 = arith.constant 0.000000e+00 : f32
    %266 = vector.broadcast %cst_73 : f32 to vector<16x128xf32>
    %267 = arith.maximumf %265, %266 : vector<16x128xf32>
    %268 = arith.truncf %267 : vector<16x128xf32> to vector<16x128xbf16>
    %cst_74 = arith.constant dense<0.000000e+00> : vector<16x128xf32>
    %269 = tpu.matmul %268, %29, %cst_74 {dimension_numbers = #tpu.dot_dimension_numbers<[1], [0], [0], [1], [0, 0, 1, 1], [], []>} : vector<16x128xbf16>, vector<128x128xbf16>, vector<16x128xf32> -> vector<16x128xf32>
    %270 = arith.addf %242, %269 : vector<16x128xf32>
    %271 = arith.addf %270, %19 : vector<16x128xf32>
    %cst_75 = arith.constant dense<0.000000e+00> : vector<16xf32>
    %272 = vector.multi_reduction <add>, %271, %cst_75 [1] : vector<16x128xf32> to vector<16xf32>
    %273 = vector.shape_cast %272 : vector<16xf32> to vector<16x1xf32>
    %cst_76 = arith.constant 1.280000e+02 : f32
    %274 = vector.broadcast %cst_76 : f32 to vector<16x1xf32>
    %275 = arith.divf %273, %274 : vector<16x1xf32>
    %276 = vector.broadcast %275 : vector<16x1xf32> to vector<16x128xf32>
    %277 = arith.subf %271, %276 : vector<16x128xf32>
    %278 = arith.mulf %277, %277 : vector<16x128xf32>
    %cst_77 = arith.constant dense<0.000000e+00> : vector<16xf32>
    %279 = vector.multi_reduction <add>, %278, %cst_77 [1] : vector<16x128xf32> to vector<16xf32>
    %280 = vector.shape_cast %279 : vector<16xf32> to vector<16x1xf32>
    %cst_78 = arith.constant 1.280000e+02 : f32
    %281 = vector.broadcast %cst_78 : f32 to vector<16x1xf32>
    %282 = arith.divf %280, %281 : vector<16x1xf32>
    %283 = vector.broadcast %275 : vector<16x1xf32> to vector<16x128xf32>
    %284 = arith.subf %271, %283 : vector<16x128xf32>
    %cst_79 = arith.constant 9.99999974E-6 : f32
    %285 = vector.broadcast %cst_79 : f32 to vector<16x1xf32>
    %286 = arith.addf %282, %285 : vector<16x1xf32>
    %287 = math.rsqrt %286 : vector<16x1xf32>
    %288 = vector.broadcast %287 : vector<16x1xf32> to vector<16x128xf32>
    %289 = arith.mulf %284, %288 : vector<16x128xf32>
    %290 = arith.mulf %289, %4 : vector<16x128xf32>
    %291 = arith.addf %290, %7 : vector<16x128xf32>
    %292 = arith.truncf %291 : vector<16x128xf32> to vector<16x128xbf16>
    %cst_80 = arith.constant dense<0.000000e+00> : vector<16x128xf32>
    %293 = tpu.matmul %292, %24, %cst_80 {dimension_numbers = #tpu.dot_dimension_numbers<[1], [0], [0], [1], [0, 0, 1, 1], [], []>} : vector<16x128xbf16>, vector<128x128xbf16>, vector<16x128xf32> -> vector<16x128xf32>
    %294 = vector.shape_cast %293 : vector<16x128xf32> to vector<2x8x128xf32>
    %295 = arith.truncf %294 : vector<2x8x128xf32> to vector<2x8x128xbf16>
    %cst_81 = arith.constant dense<0.000000e+00> : vector<2x8x128xf32>
    %296 = tpu.matmul %295, %58, %cst_81 {dimension_numbers = #tpu.dot_dimension_numbers<[2], [2], [1], [1], [0, 0, 0, 1, 1, 1], [0], [0]>} : vector<2x8x128xbf16>, vector<2x128x128xbf16>, vector<2x8x128xf32> -> vector<2x8x128xf32>
    %cst_82 = arith.constant dense<0xFF800000> : vector<2x128xf32>
    %297 = vector.multi_reduction <maximumf>, %296, %cst_82 [1] : vector<2x8x128xf32> to vector<2x128xf32>
    %298 = vector.shape_cast %297 : vector<2x128xf32> to vector<2x1x128xf32>
    %299 = vector.broadcast %298 : vector<2x1x128xf32> to vector<2x8x128xf32>
    %300 = arith.subf %296, %299 : vector<2x8x128xf32>
    %301 = math.exp %300 : vector<2x8x128xf32>
    %cst_83 = arith.constant dense<0.000000e+00> : vector<2x128xf32>
    %302 = vector.multi_reduction <add>, %301, %cst_83 [1] : vector<2x8x128xf32> to vector<2x128xf32>
    %303 = vector.shape_cast %302 : vector<2x128xf32> to vector<2x1x128xf32>
    %304 = tpu.reciprocal %303 {approx = true} : vector<2x1x128xf32> -> vector<2x1x128xf32>
    %305 = vector.broadcast %304 : vector<2x1x128xf32> to vector<2x8x128xf32>
    %306 = arith.mulf %301, %305 : vector<2x8x128xf32>
    %cst_84 = arith.constant dense<0.000000e+00> : vector<2x8xf32>
    %307 = vector.multi_reduction <add>, %306, %cst_84 [2] : vector<2x8x128xf32> to vector<2x8xf32>
    %308 = vector.shape_cast %307 : vector<2x8xf32> to vector<2x8x1xf32>
    %cst_85 = arith.constant 9.99999997E-7 : f32
    %309 = vector.broadcast %cst_85 : f32 to vector<2x8x1xf32>
    %310 = arith.addf %308, %309 : vector<2x8x1xf32>
    %311 = tpu.reciprocal %310 {approx = true} : vector<2x8x1xf32> -> vector<2x8x1xf32>
    %312 = vector.broadcast %311 : vector<2x8x1xf32> to vector<2x8x128xf32>
    %313 = arith.mulf %306, %312 : vector<2x8x128xf32>
    %314 = arith.truncf %313 : vector<2x8x128xf32> to vector<2x8x128xbf16>
    %cst_86 = arith.constant dense<0.000000e+00> : vector<2x8x128xf32>
    %315 = tpu.matmul %314, %61, %cst_86 {dimension_numbers = #tpu.dot_dimension_numbers<[2], [1], [1], [2], [0, 0, 0, 1, 1, 2], [0], [0]>} : vector<2x8x128xbf16>, vector<2x128x128xbf16>, vector<2x8x128xf32> -> vector<2x8x128xf32>
    %316 = vector.shape_cast %315 : vector<2x8x128xf32> to vector<16x128xf32>
    %317 = arith.truncf %316 : vector<16x128xf32> to vector<16x128xbf16>
    %cst_87 = arith.constant dense<0.000000e+00> : vector<16x384xf32>
    %318 = tpu.matmul %317, %25, %cst_87 {dimension_numbers = #tpu.dot_dimension_numbers<[1], [0], [0], [1], [0, 0, 1, 1], [], []>} : vector<16x128xbf16>, vector<128x384xbf16>, vector<16x384xf32> -> vector<16x384xf32>
    %319 = arith.truncf %271 : vector<16x128xf32> to vector<16x128xbf16>
    %cst_88 = arith.constant dense<0.000000e+00> : vector<16x384xf32>
    %320 = tpu.matmul %319, %26, %cst_88 {dimension_numbers = #tpu.dot_dimension_numbers<[1], [0], [0], [1], [0, 0, 1, 1], [], []>} : vector<16x128xbf16>, vector<128x384xbf16>, vector<16x384xf32> -> vector<16x384xf32>
    %321 = vector.extract_strided_slice %318 {offsets = [0, 0], sizes = [16, 128], strides = [1, 1]} : vector<16x384xf32> to vector<16x128xf32>
    %322 = vector.extract_strided_slice %320 {offsets = [0, 0], sizes = [16, 128], strides = [1, 1]} : vector<16x384xf32> to vector<16x128xf32>
    %323 = arith.addf %321, %322 : vector<16x128xf32>
    %324 = arith.negf %323 : vector<16x128xf32>
    %325 = math.exp %324 : vector<16x128xf32>
    %cst_89 = arith.constant 1.000000e+00 : f32
    %326 = vector.broadcast %cst_89 : f32 to vector<16x128xf32>
    %327 = arith.addf %326, %325 : vector<16x128xf32>
    %328 = arith.divf %326, %327 : vector<16x128xf32>
    %329 = vector.extract_strided_slice %318 {offsets = [0, 128], sizes = [16, 128], strides = [1, 1]} : vector<16x384xf32> to vector<16x128xf32>
    %330 = vector.extract_strided_slice %320 {offsets = [0, 128], sizes = [16, 128], strides = [1, 1]} : vector<16x384xf32> to vector<16x128xf32>
    %331 = arith.addf %329, %330 : vector<16x128xf32>
    %332 = arith.negf %331 : vector<16x128xf32>
    %333 = math.exp %332 : vector<16x128xf32>
    %cst_90 = arith.constant 1.000000e+00 : f32
    %334 = vector.broadcast %cst_90 : f32 to vector<16x128xf32>
    %335 = arith.addf %334, %333 : vector<16x128xf32>
    %336 = arith.divf %334, %335 : vector<16x128xf32>
    %337 = vector.extract_strided_slice %318 {offsets = [0, 256], sizes = [16, 128], strides = [1, 1]} : vector<16x384xf32> to vector<16x128xf32>
    %338 = vector.extract_strided_slice %320 {offsets = [0, 256], sizes = [16, 128], strides = [1, 1]} : vector<16x384xf32> to vector<16x128xf32>
    %339 = arith.mulf %328, %338 : vector<16x128xf32>
    %340 = arith.addf %337, %339 : vector<16x128xf32>
    %341 = math.tanh %340 : vector<16x128xf32>
    %cst_91 = arith.constant 1.000000e+00 : f32
    %342 = vector.broadcast %cst_91 : f32 to vector<16x128xf32>
    %343 = arith.subf %342, %336 : vector<16x128xf32>
    %344 = arith.mulf %343, %341 : vector<16x128xf32>
    %345 = arith.mulf %336, %271 : vector<16x128xf32>
    %346 = arith.addf %344, %345 : vector<16x128xf32>
    %cst_92 = arith.constant dense<0.000000e+00> : vector<16xf32>
    %347 = vector.multi_reduction <add>, %346, %cst_92 [1] : vector<16x128xf32> to vector<16xf32>
    %348 = vector.shape_cast %347 : vector<16xf32> to vector<16x1xf32>
    %cst_93 = arith.constant 1.280000e+02 : f32
    %349 = vector.broadcast %cst_93 : f32 to vector<16x1xf32>
    %350 = arith.divf %348, %349 : vector<16x1xf32>
    %351 = vector.broadcast %350 : vector<16x1xf32> to vector<16x128xf32>
    %352 = arith.subf %346, %351 : vector<16x128xf32>
    %353 = arith.mulf %352, %352 : vector<16x128xf32>
    %cst_94 = arith.constant dense<0.000000e+00> : vector<16xf32>
    %354 = vector.multi_reduction <add>, %353, %cst_94 [1] : vector<16x128xf32> to vector<16xf32>
    %355 = vector.shape_cast %354 : vector<16xf32> to vector<16x1xf32>
    %cst_95 = arith.constant 1.280000e+02 : f32
    %356 = vector.broadcast %cst_95 : f32 to vector<16x1xf32>
    %357 = arith.divf %355, %356 : vector<16x1xf32>
    %358 = vector.broadcast %350 : vector<16x1xf32> to vector<16x128xf32>
    %359 = arith.subf %346, %358 : vector<16x128xf32>
    %cst_96 = arith.constant 9.99999974E-6 : f32
    %360 = vector.broadcast %cst_96 : f32 to vector<16x1xf32>
    %361 = arith.addf %357, %360 : vector<16x1xf32>
    %362 = math.rsqrt %361 : vector<16x1xf32>
    %363 = vector.broadcast %362 : vector<16x1xf32> to vector<16x128xf32>
    %364 = arith.mulf %359, %363 : vector<16x128xf32>
    %365 = arith.mulf %364, %10 : vector<16x128xf32>
    %366 = arith.addf %365, %13 : vector<16x128xf32>
    %367 = arith.truncf %366 : vector<16x128xf32> to vector<16x128xbf16>
    %cst_97 = arith.constant dense<0.000000e+00> : vector<16x128xf32>
    %368 = tpu.matmul %367, %27, %cst_97 {dimension_numbers = #tpu.dot_dimension_numbers<[1], [0], [0], [1], [0, 0, 1, 1], [], []>} : vector<16x128xbf16>, vector<128x128xbf16>, vector<16x128xf32> -> vector<16x128xf32>
    %369 = arith.addf %368, %16 : vector<16x128xf32>
    %cst_98 = arith.constant 0.000000e+00 : f32
    %370 = vector.broadcast %cst_98 : f32 to vector<16x128xf32>
    %371 = arith.maximumf %369, %370 : vector<16x128xf32>
    %372 = arith.truncf %371 : vector<16x128xf32> to vector<16x128xbf16>
    %cst_99 = arith.constant dense<0.000000e+00> : vector<16x128xf32>
    %373 = tpu.matmul %372, %29, %cst_99 {dimension_numbers = #tpu.dot_dimension_numbers<[1], [0], [0], [1], [0, 0, 1, 1], [], []>} : vector<16x128xbf16>, vector<128x128xbf16>, vector<16x128xf32> -> vector<16x128xf32>
    %374 = arith.addf %346, %373 : vector<16x128xf32>
    %375 = arith.addf %374, %19 : vector<16x128xf32>
    %376 = vector.shape_cast %375 : vector<16x128xf32> to vector<2x8x128xf32>
    %c0_100 = arith.constant 0 : index
    %c0_101 = arith.constant 0 : index
    %c0_102 = arith.constant 0 : index
    %377 = vector.load %arg7[%c0_100, %c0_101, %c0_102] : memref<2x8x128xf32, #tpu.memory_space<vmem>>, vector<2x8x128xf32>
    tpu.vector_store %arg7[%c0_100, %c0_101, %c0_102], %376 {strides = array<i32>} : memref<2x8x128xf32, #tpu.memory_space<vmem>>, vector<2x8x128xf32>,
    %c0_103 = arith.constant 0 : index
    %c0_104 = arith.constant 0 : index
    %c0_105 = arith.constant 0 : index
    %378 = vector.load %arg8[%c0_103, %c0_104, %c0_105] : memref<2x8x128xf32, #tpu.memory_space<vmem>>, vector<2x8x128xf32>
    tpu.vector_store %arg8[%c0_103, %c0_104, %c0_105], %306 {strides = array<i32>} : memref<2x8x128xf32, #tpu.memory_space<vmem>>, vector<2x8x128xf32>,
    return
  }
  func.func @transform_0(%arg0: i32) -> (i32, i32, i32) {
    %c0_i32 = arith.constant 0 : i32
    %c0_i32_0 = arith.constant 0 : i32
    %c0_i32_1 = arith.constant 0 : i32
    return %arg0, %c0_i32, %c0_i32_0 : i32, i32, i32
  }
  func.func @transform_1(%arg0: i32) -> (i32, i32, i32) {
    %c0_i32 = arith.constant 0 : i32
    %c0_i32_0 = arith.constant 0 : i32
    %c0_i32_1 = arith.constant 0 : i32
    return %arg0, %c0_i32, %c0_i32_0 : i32, i32, i32
  }
  func.func @transform_2(%arg0: i32) -> (i32, i32) {
    %c0_i32 = arith.constant 0 : i32
    %c0_i32_0 = arith.constant 0 : i32
    %c0_i32_1 = arith.constant 0 : i32
    return %c0_i32, %c0_i32_0 : i32, i32
  }
  func.func @transform_3(%arg0: i32) -> (i32, i32) {
    %c0_i32 = arith.constant 0 : i32
    %c0_i32_0 = arith.constant 0 : i32
    %c0_i32_1 = arith.constant 0 : i32
    return %c0_i32, %c0_i32_0 : i32, i32
  }
  func.func @transform_4(%arg0: i32) -> (i32, i32) {
    %c0_i32 = arith.constant 0 : i32
    %c0_i32_0 = arith.constant 0 : i32
    %c0_i32_1 = arith.constant 0 : i32
    return %c0_i32, %c0_i32_0 : i32, i32
  }
  func.func @transform_5(%arg0: i32) -> (i32, i32) {
    %c0_i32 = arith.constant 0 : i32
    %c0_i32_0 = arith.constant 0 : i32
    %c0_i32_1 = arith.constant 0 : i32
    return %c0_i32, %c0_i32_0 : i32, i32
  }
  func.func @transform_6(%arg0: i32) -> (i32, i32, i32) {
    %c0_i32 = arith.constant 0 : i32
    %c0_i32_0 = arith.constant 0 : i32
    %c0_i32_1 = arith.constant 0 : i32
    return %arg0, %c0_i32, %c0_i32_0 : i32, i32, i32
  }
  func.func @transform_7(%arg0: i32) -> (i32, i32, i32) {
    %c0_i32 = arith.constant 0 : i32
    %c0_i32_0 = arith.constant 0 : i32
    %c0_i32_1 = arith.constant 0 : i32
    return %arg0, %c0_i32, %c0_i32_0 : i32, i32, i32
  }
}

</mosaic_0001>

<llo_original>
// kernel: tpu_custom_call.1
$region0: #{tpu_custom_call.1}
  #allocation0 [shape = 'u32[]', space=smem, size = 0x4, offset = 0x4, fixed_abs, tag = 'smem constant byte address 0x4 - core index']
  #allocation1 [shape = 'u32[144,128]{1,0:T(1,128)}', space=vmem, size = 0x12000, scoped, tag = 'internal scratch']
  %s0 = inlined_call_operand.hbm [shape: f32[4,128,128], index: 0, kind: input, shape index: {}]
  %s1 = inlined_call_operand.hbm [shape: f32[4,8,128], index: 1, kind: input, shape index: {}]
  %s2 = inlined_call_operand.hbm [shape: f32[128,256], index: 2, kind: input, shape index: {}]
  %s3 = inlined_call_operand.hbm [shape: f32[128,1024], index: 3, kind: input, shape index: {}]
  %s4 = inlined_call_operand.hbm [shape: f32[128,128], index: 4, kind: input, shape index: {}]
  %s5 = inlined_call_operand.vmem [shape: f32[8,128], index: 5, kind: input, shape index: {}]
  %s6 = inlined_call_operand.hbm [shape: f32[4,8,128], index: 6, kind: output, shape index: {0}]
  %s7 = inlined_call_operand.hbm [shape: f32[4,8,128], index: 7, kind: output, shape index: {1}]
  %8 = xla_tuple %s6, %s7
  %s9 = sld [smem:[#allocation0]]
  $region85: #{tpu_custom_call.1} parent=0
    _
  %s11 = ssub.s32 1, %s9
  %s12 = scalar_select 0, %s11, %s9
  $region1: #{tpu_custom_call.1} parent=0
    #allocation2 [shape = 'u8[262144]{0}', space=vmem, size = 0x40000, scoped, tag = 'input window, operand 0']
    #allocation3 [shape = 's32[2]{0}', space=sflag, size = 0x8, scoped, tag = 'scoped memory for tpu_custom_call.1']
    #allocation4 [shape = 's32[2]{0}', space=sflag, size = 0x8, scoped, tag = 'scoped memory for tpu_custom_call.1']
    #allocation5 [shape = 'u8[16384]{0}', space=vmem, size = 0x4000, scoped, tag = 'input window, operand 1']
    #allocation6 [shape = 's32[2]{0}', space=sflag, size = 0x8, scoped, tag = 'scoped memory for tpu_custom_call.1']
    #allocation7 [shape = 'u8[131072]{0}', space=vmem, size = 0x20000, scoped, tag = 'input window, operand 2, single buffered']
    #allocation8 [shape = 'u8[524288]{0}', space=vmem, size = 0x80000, scoped, tag = 'input window, operand 3, single buffered']
    #allocation9 [shape = 's32[1]{0}', space=sflag, size = 0x4, scoped, tag = 'scoped memory for tpu_custom_call.1']
    #allocation10 [shape = 'u8[65536]{0}', space=vmem, size = 0x10000, scoped, tag = 'input window, operand 4, single buffered']
    #allocation11 [shape = 'u8[16384]{0}', space=vmem, size = 0x4000, scoped, tag = 'output window, operand 0']
    #allocation12 [shape = 'u8[16384]{0}', space=vmem, size = 0x4000, scoped, tag = 'output window, operand 1']
    #allocation13 [shape = 's32[2]{0}', space=sflag, size = 0x8, scoped, tag = 'scoped memory for tpu_custom_call.1']
    %13 = vsyncpa [#allocation3], 0
    %s14 = scalar_lea.sflag [#allocation3], 1
    %15 = vsyncpa %s14, 0
    %16 = vsyncpa [#allocation6], 0
    %s17 = scalar_lea.sflag [#allocation6], 1
    %18 = vsyncpa %s17, 0
    %19 = vsyncpa [#allocation9], 0
    %20 = vsyncpa [#allocation4], 0
    %s21 = scalar_lea.sflag [#allocation4], 1
    %22 = vsyncpa %s21, 0
    %23 = vsyncpa [#allocation13], 0
    %s24 = scalar_lea.sflag [#allocation13], 1
    %25 = vsyncpa %s24, 0
    loop: start=0, step=1, limit=4
    $region2: #{tpu_custom_call.1} parent=1 // loop_pre_header
      _
    $region3: #{tpu_custom_call.1} parent=1 // loop_header
      %s27 = sphi 0, %s31
      %p28 = scmp.ge.s32.totalorder %s27, 4
      %s37 = sphi 0, %s39
      %s40 = sphi 0, %s37
      %s41 = sphi 0, %s40
      %s57 = sphi 0, %s41
      %s63 = sphi 0, %s65
      %s66 = sphi 0, %s63
      %s67 = sphi 0, %s66
      %s83 = sphi 0, %s67
      %s87 = sphi 0, %s87
      %s89 = sphi 0, %s87
      %s90 = sphi 0, %s89
      %s104 = sphi 0, %s90
      %s108 = sphi 0, %s108
      %s110 = sphi 0, %s108
      %s111 = sphi 0, %s110
      %s125 = sphi 0, %s111
      %s129 = sphi 0, %s129
      %s131 = sphi 0, %s129
      %s132 = sphi 0, %s131
      %s146 = sphi 0, %s132
      %s150 = sphi 0, %s150
      %s152 = sphi 0, %s150
      %s153 = sphi 0, %s152
      %s167 = sphi 0, %s153
      %s173 = sphi 0, %s175
      %s176 = sphi 0, %s173
      %s177 = sphi 0, %s176
      %s193 = sphi 0, %s177
      %s199 = sphi 0, %s201
      %s202 = sphi 0, %s199
      %s203 = sphi 0, %s202
      %s219 = sphi 0, %s203
    $region4: #{tpu_custom_call.1} parent=1 // loop_header_branch
      %30 = sbr.rel (%p28) target = $region8
    $region5: #{tpu_custom_call.1} parent=1 // loop_body
      %s32 = ssub.s32 %s27, 1
      %s33 = ssub.s32 %s27, 2
      %s34 = sadd.s32 %s27, 1
      %s35 = ssub.s32 %s27, %s34
      %p36 = scmp.eq.s32.totalorder %s35, 0
      %s38 = sadd.s32 %s37, 1
      %s39 = scalar_select %p36, %s37, %s38
      %p42 = pneg %p36
      %p43 = scmp.eq.s32.totalorder %s27, 1
      %p44 = por %p42, %p43
      %p45 = scmp.ne.s32.totalorder %s37, %s40
      %p46 = scmp.eq.s32.totalorder %s27, 0
      %p47 = por %p45, %p46
      %p48 = scmp.ne.s32.totalorder %s37, %s40
      %p49 = scmp.eq.s32.totalorder %s32, 1
      %p50 = por %p48, %p49
      %p51 = scmp.ne.s32.totalorder %s40, %s41
      %p52 = scmp.eq.s32.totalorder %s32, 0
      %p53 = por %p51, %p52
      %p54 = scmp.ne.s32.totalorder %s40, %s41
      %p55 = scmp.eq.s32.totalorder %s33, 1
      %p56 = por %p54, %p55
      %p58 = scmp.ne.s32.totalorder %s41, %s57
      %p59 = scmp.eq.s32.totalorder %s33, 0
      %p60 = por %p58, %p59
      %s61 = ssub.s32 %s27, %s34
      %p62 = scmp.eq.s32.totalorder %s61, 0
      %s64 = sadd.s32 %s63, 1
      %s65 = scalar_select %p62, %s63, %s64
      %p68 = pneg %p62
      %p69 = scmp.eq.s32.totalorder %s27, 1
      %p70 = por %p68, %p69
      %p71 = scmp.ne.s32.totalorder %s63, %s66
      %p72 = scmp.eq.s32.totalorder %s27, 0
      %p73 = por %p71, %p72
      %p74 = scmp.ne.s32.totalorder %s63, %s66
      %p75 = scmp.eq.s32.totalorder %s32, 1
      %p76 = por %p74, %p75
      %p77 = scmp.ne.s32.totalorder %s66, %s67
      %p78 = scmp.eq.s32.totalorder %s32, 0
      %p79 = por %p77, %p78
      %p80 = scmp.ne.s32.totalorder %s66, %s67
      %p81 = scmp.eq.s32.totalorder %s33, 1
      %p82 = por %p80, %p81
      %p84 = scmp.ne.s32.totalorder %s67, %s83
      %p85 = scmp.eq.s32.totalorder %s33, 0
      %p86 = por %p84, %p85
      %s88 = sadd.s32 %s87, 1
      %p91 = scmp.eq.s32.totalorder %s27, 1
      %p92 = scmp.ne.s32.totalorder %s87, %s89
      %p93 = scmp.eq.s32.totalorder %s27, 0
      %p94 = por %p92, %p93
      %p95 = scmp.ne.s32.totalorder %s87, %s89
      %p96 = scmp.eq.s32.totalorder %s32, 1
      %p97 = por %p95, %p96
      %p98 = scmp.ne.s32.totalorder %s89, %s90
      %p99 = scmp.eq.s32.totalorder %s32, 0
      %p100 = por %p98, %p99
      %p101 = scmp.ne.s32.totalorder %s89, %s90
      %p102 = scmp.eq.s32.totalorder %s33, 1
      %p103 = por %p101, %p102
      %p105 = scmp.ne.s32.totalorder %s90, %s104
      %p106 = scmp.eq.s32.totalorder %s33, 0
      %p107 = por %p105, %p106
      %s109 = sadd.s32 %s108, 1
      %p112 = scmp.eq.s32.totalorder %s27, 1
      %p113 = scmp.ne.s32.totalorder %s108, %s110
      %p114 = scmp.eq.s32.totalorder %s27, 0
      %p115 = por %p113, %p114
      %p116 = scmp.ne.s32.totalorder %s108, %s110
      %p117 = scmp.eq.s32.totalorder %s32, 1
      %p118 = por %p116, %p117
      %p119 = scmp.ne.s32.totalorder %s110, %s111
      %p120 = scmp.eq.s32.totalorder %s32, 0
      %p121 = por %p119, %p120
      %p122 = scmp.ne.s32.totalorder %s110, %s111
      %p123 = scmp.eq.s32.totalorder %s33, 1
      %p124 = por %p122, %p123
      %p126 = scmp.ne.s32.totalorder %s111, %s125
      %p127 = scmp.eq.s32.totalorder %s33, 0
      %p128 = por %p126, %p127
      %s130 = sadd.s32 %s129, 1
      %p133 = scmp.eq.s32.totalorder %s27, 1
      %p134 = scmp.ne.s32.totalorder %s129, %s131
      %p135 = scmp.eq.s32.totalorder %s27, 0
      %p136 = por %p134, %p135
      %p137 = scmp.ne.s32.totalorder %s129, %s131
      %p138 = scmp.eq.s32.totalorder %s32, 1
      %p139 = por %p137, %p138
      %p140 = scmp.ne.s32.totalorder %s131, %s132
      %p141 = scmp.eq.s32.totalorder %s32, 0
      %p142 = por %p140, %p141
      %p143 = scmp.ne.s32.totalorder %s131, %s132
      %p144 = scmp.eq.s32.totalorder %s33, 1
      %p145 = por %p143, %p144
      %p147 = scmp.ne.s32.totalorder %s132, %s146
      %p148 = scmp.eq.s32.totalorder %s33, 0
      %p149 = por %p147, %p148
      %s151 = sadd.s32 %s150, 1
      %p154 = scmp.eq.s32.totalorder %s27, 1
      %p155 = scmp.ne.s32.totalorder %s150, %s152
      %p156 = scmp.eq.s32.totalorder %s27, 0
      %p157 = por %p155, %p156
      %p158 = scmp.ne.s32.totalorder %s150, %s152
      %p159 = scmp.eq.s32.totalorder %s32, 1
      %p160 = por %p158, %p159
      %p161 = scmp.ne.s32.totalorder %s152, %s153
      %p162 = scmp.eq.s32.totalorder %s32, 0
      %p163 = por %p161, %p162
      %p164 = scmp.ne.s32.totalorder %s152, %s153
      %p165 = scmp.eq.s32.totalorder %s33, 1
      %p166 = por %p164, %p165
      %p168 = scmp.ne.s32.totalorder %s153, %s167
      %p169 = scmp.eq.s32.totalorder %s33, 0
      %p170 = por %p168, %p169
      %s171 = ssub.s32 %s27, %s34
      %p172 = scmp.eq.s32.totalorder %s171, 0
      %s174 = sadd.s32 %s173, 1
      %s175 = scalar_select %p172, %s173, %s174
      %p178 = pneg %p172
      %p179 = scmp.eq.s32.totalorder %s27, 1
      %p180 = por %p178, %p179
      %p181 = scmp.ne.s32.totalorder %s173, %s176
      %p182 = scmp.eq.s32.totalorder %s27, 0
      %p183 = por %p181, %p182
      %p184 = scmp.ne.s32.totalorder %s173, %s176
      %p185 = scmp.eq.s32.totalorder %s32, 1
      %p186 = por %p184, %p185
      %p187 = scmp.ne.s32.totalorder %s176, %s177
      %p188 = scmp.eq.s32.totalorder %s32, 0
      %p189 = por %p187, %p188
      %p190 = scmp.ne.s32.totalorder %s176, %s177
      %p191 = scmp.eq.s32.totalorder %s33, 1
      %p192 = por %p190, %p191
      %p194 = scmp.ne.s32.totalorder %s177, %s193
      %p195 = scmp.eq.s32.totalorder %s33, 0
      %p196 = por %p194, %p195
      %s197 = ssub.s32 %s27, %s34
      %p198 = scmp.eq.s32.totalorder %s197, 0
      %s200 = sadd.s32 %s199, 1
      %s201 = scalar_select %p198, %s199, %s200
      %p204 = pneg %p198
      %p205 = scmp.eq.s32.totalorder %s27, 1
      %p206 = por %p204, %p205
      %p207 = scmp.ne.s32.totalorder %s199, %s202
      %p208 = scmp.eq.s32.totalorder %s27, 0
      %p209 = por %p207, %p208
      %p210 = scmp.ne.s32.totalorder %s199, %s202
      %p211 = scmp.eq.s32.totalorder %s32, 1
      %p212 = por %p210, %p211
      %p213 = scmp.ne.s32.totalorder %s202, %s203
      %p214 = scmp.eq.s32.totalorder %s32, 0
      %p215 = por %p213, %p214
      %p216 = scmp.ne.s32.totalorder %s202, %s203
      %p217 = scmp.eq.s32.totalorder %s33, 1
      %p218 = por %p216, %p217
      %p220 = scmp.ne.s32.totalorder %s203, %s219
      %p221 = scmp.eq.s32.totalorder %s33, 0
      %p222 = por %p220, %p221
      %p223 = scmp.le.s32.totalorder 1, %s27
      %p224 = scmp.lt.s32.totalorder %s27, 3
      %p225 = pnand %p223, %p224
      %p226 = pneg %p225
      // Predicated region
      $region9: #{tpu_custom_call.1} parent=5 // pred_check
        _
      $region10: #{tpu_custom_call.1} parent=5 // pred_check_branch
        %228 = sbr.rel (%p225) target = $region12
      $region11: #{tpu_custom_call.1} parent=5 // pred_region
        %s229 = ssub.s32 %s27, 1
        // Predicated region
        $region13: #{tpu_custom_call.1} parent=11 // pred_check
          %p230 = pneg %p100
        $region14: #{tpu_custom_call.1} parent=11 // pred_check_branch
          %232 = sbr.rel (%p230) target = $region16
        $region15: #{tpu_custom_call.1} parent=11 // pred_region
          %s234 = ssub.s32 4096, 4096
          %235 = vsyncadd [#allocation6], %s234
          %s236 = sshll.u32 [#allocation7], 4
          %s237 = int_to_ptr.vmem [resolvable:$true] %s236
          %242 = dma.hbm_to_vmem [thread:$0]  %s2, 4096, %s237, [#allocation6], 256, 256, 16
        $region16: #{tpu_custom_call.1} parent=11 // pred_fallthru
          _
        // Predicated region
        $region17: #{tpu_custom_call.1} parent=11 // pred_check
          %p243 = pneg %p121
        $region18: #{tpu_custom_call.1} parent=11 // pred_check_branch
          %245 = sbr.rel (%p243) target = $region20
        $region19: #{tpu_custom_call.1} parent=11 // pred_region
          %s247 = ssub.s32 16384, 16384
          %248 = vsyncadd [#allocation9], %s247
          %s249 = sshll.u32 [#allocation8], 4
          %s250 = int_to_ptr.vmem [resolvable:$true] %s249
          %255 = dma.hbm_to_vmem [thread:$0]  %s3, 16384, %s250, [#allocation9], 1024, 1024, 64
        $region20: #{tpu_custom_call.1} parent=11 // pred_fallthru
          _
        // Predicated region
        $region21: #{tpu_custom_call.1} parent=11 // pred_check
          %p256 = pneg %p142
        $region22: #{tpu_custom_call.1} parent=11 // pred_check_branch
          %258 = sbr.rel (%p256) target = $region24
        $region23: #{tpu_custom_call.1} parent=11 // pred_region
          %s260 = ssub.s32 2048, 2048
          %261 = vsyncadd [#allocation9], %s260
          %s262 = sshll.u32 [#allocation10], 4
          %s263 = int_to_ptr.vmem [resolvable:$true] %s262
          %268 = dma.hbm_to_vmem [thread:$0]  %s4, 2048, %s263, [#allocation9], 128, 128, 8
        $region24: #{tpu_custom_call.1} parent=11 // pred_fallthru
          _
        // Predicated region
        $region25: #{tpu_custom_call.1} parent=11 // pred_check
          %p269 = pneg %p163
        $region26: #{tpu_custom_call.1} parent=11 // pred_check_branch
          %271 = sbr.rel (%p269) target = $region28
        $region27: #{tpu_custom_call.1} parent=11 // pred_region
          _
        $region28: #{tpu_custom_call.1} parent=11 // pred_fallthru
          _
      $region12: #{tpu_custom_call.1} parent=5 // pred_fallthru
        _
      %p272 = scmp.lt.s32.totalorder %s27, 2
      // Predicated region
      $region29: #{tpu_custom_call.1} parent=5 // pred_check
        %p273 = pneg %p272
      $region30: #{tpu_custom_call.1} parent=5 // pred_check_branch
        %275 = sbr.rel (%p273) target = $region32
      $region31: #{tpu_custom_call.1} parent=5 // pred_region
        // Predicated region
        $region33: #{tpu_custom_call.1} parent=31 // pred_check
          %p276 = pneg %p47
        $region34: #{tpu_custom_call.1} parent=31 // pred_check_branch
          %278 = sbr.rel (%p276) target = $region36
        $region35: #{tpu_custom_call.1} parent=31 // pred_region
          %s279 = sand.u32 %s37, 1
          %s280 = scalar_lea.sflag [#allocation3], %s279
          %s281 = sand.u32 %s37, 1
          %s282 = smul.addr %s281, 256
          %s283 = scalar_lea.vmem [#allocation2], %s282
          %s284 = smul.u32 2, %s27
          %s286 = ssub.s32 4096, 4096
          %287 = vsyncadd %s280, %s286
          %s288 = smul.addr %s284, 16
          %s289 = smul.addr %s288, 128
          %s290 = scalar_lea.hbm %s0, %s289
          %s291 = sshll.u32 %s283, 4
          %s292 = int_to_ptr.vmem [resolvable:$true] %s291
          %297 = dma.hbm_to_vmem [thread:$0]  %s290, 4096, %s292, %s280, 128, 128, 8
        $region36: #{tpu_custom_call.1} parent=31 // pred_fallthru
          _
        // Predicated region
        $region37: #{tpu_custom_call.1} parent=31 // pred_check
          %p298 = pneg %p73
        $region38: #{tpu_custom_call.1} parent=31 // pred_check_branch
          %300 = sbr.rel (%p298) target = $region40
        $region39: #{tpu_custom_call.1} parent=31 // pred_region
          %s301 = sand.u32 %s27, 1
          %s302 = scalar_lea.sflag [#allocation6], %s301
          %s303 = sand.u32 %s63, 1
          %s304 = smul.addr %s303, 16
          %s305 = scalar_lea.vmem [#allocation5], %s304
          %s306 = smul.u32 2, %s27
          %s308 = ssub.s32 256, 256
          %309 = vsyncadd %s302, %s308
          %s310 = smul.addr %s306, 128
          %s311 = scalar_lea.hbm %s1, %s310
          %s312 = sshll.u32 %s305, 4
          %s313 = int_to_ptr.vmem [resolvable:$true] %s312
          %318 = dma.hbm_to_vmem [thread:$0]  %s311, 256, %s313, %s302, 128, 128, 8
        $region40: #{tpu_custom_call.1} parent=31 // pred_fallthru
          _
      $region32: #{tpu_custom_call.1} parent=5 // pred_fallthru
        _
      %p319 = scmp.le.s32.totalorder 1, %s27
      %p320 = scmp.lt.s32.totalorder %s27, 3
      %p321 = pnand %p319, %p320
      %p322 = pneg %p321
      // Predicated region
      $region41: #{tpu_custom_call.1} parent=5 // pred_check
        _
      $region42: #{tpu_custom_call.1} parent=5 // pred_check_branch
        %324 = sbr.rel (%p321) target = $region44
      $region43: #{tpu_custom_call.1} parent=5 // pred_region
        %s325 = ssub.s32 %s27, 1
        %s326 = sand.u32 %s40, 1
        %s327 = scalar_lea.sflag [#allocation3], %s326
        %s328 = sand.u32 %s40, 1
        %s329 = smul.addr %s328, 256
        %s330 = scalar_lea.vmem [#allocation2], %s329
        // Predicated region
        $region45: #{tpu_custom_call.1} parent=43 // pred_check
          %p331 = pneg %p53
        $region46: #{tpu_custom_call.1} parent=43 // pred_check_branch
          %333 = sbr.rel (%p331) target = $region48
        $region47: #{tpu_custom_call.1} parent=43 // pred_region
          %334 = dma.done %s327, 4096
        $region48: #{tpu_custom_call.1} parent=43 // pred_fallthru
          _
        %s335 = sand.u32 %s32, 1
        %s336 = scalar_lea.sflag [#allocation6], %s335
        %s337 = sand.u32 %s66, 1
        %s338 = smul.addr %s337, 16
        %s339 = scalar_lea.vmem [#allocation5], %s338
        // Predicated region
        $region49: #{tpu_custom_call.1} parent=43 // pred_check
          %p340 = pneg %p79
        $region50: #{tpu_custom_call.1} parent=43 // pred_check_branch
          %342 = sbr.rel (%p340) target = $region52
        $region51: #{tpu_custom_call.1} parent=43 // pred_region
          %343 = dma.done %s336, 256
        $region52: #{tpu_custom_call.1} parent=43 // pred_fallthru
          _
        // Predicated region
        $region53: #{tpu_custom_call.1} parent=43 // pred_check
          %p344 = pneg %p100
        $region54: #{tpu_custom_call.1} parent=43 // pred_check_branch
          %346 = sbr.rel (%p344) target = $region56
        $region55: #{tpu_custom_call.1} parent=43 // pred_region
          %347 = dma.done [#allocation6], 4096
        $region56: #{tpu_custom_call.1} parent=43 // pred_fallthru
          _
        // Predicated region
        $region57: #{tpu_custom_call.1} parent=43 // pred_check
          %p348 = pneg %p121
        $region58: #{tpu_custom_call.1} parent=43 // pred_check_branch
          %350 = sbr.rel (%p348) target = $region60
        $region59: #{tpu_custom_call.1} parent=43 // pred_region
          %351 = dma.done [#allocation9], 16384
        $region60: #{tpu_custom_call.1} parent=43 // pred_fallthru
          _
        // Predicated region
        $region61: #{tpu_custom_call.1} parent=43 // pred_check
          %p352 = pneg %p142
        $region62: #{tpu_custom_call.1} parent=43 // pred_check_branch
          %354 = sbr.rel (%p352) target = $region64
        $region63: #{tpu_custom_call.1} parent=43 // pred_region
          %355 = dma.done [#allocation9], 2048
        $region64: #{tpu_custom_call.1} parent=43 // pred_fallthru
          _
        %s356 = sand.u32 %s40, 1
        %s357 = scalar_lea.sflag [#allocation3], %s356
        %s358 = sand.u32 %s40, 1
        %s359 = smul.addr %s358, 256
        %s360 = scalar_lea.vmem [#allocation2], %s359
        %p361 = pneg %p53
        %p362 = pneg %p50
        %s363 = sand.u32 %s32, 1
        %s364 = scalar_lea.sflag [#allocation6], %s363
        %s365 = sand.u32 %s66, 1
        %s366 = smul.addr %s365, 16
        %s367 = scalar_lea.vmem [#allocation5], %s366
        %p368 = pneg %p79
        %p369 = pneg %p76
        %p370 = pneg %p100
        %p371 = pneg %p97
        %p372 = pneg %p121
        %p373 = pneg %p118
        %p374 = pneg %p142
        %p375 = pneg %p139
        %p376 = pneg %p163
        %p377 = pneg %p160
        %p378 = pneg %p189
        %p379 = pneg %p186
        %s380 = sand.u32 %s176, 1
        %s381 = scalar_lea.sflag [#allocation4], %s380
        %s382 = sand.u32 %s176, 1
        %s383 = smul.addr %s382, 16
        %s384 = scalar_lea.vmem [#allocation11], %s383
        %p385 = pneg %p215
        %p386 = pneg %p212
        %s387 = sand.u32 %s202, 1
        %s388 = scalar_lea.sflag [#allocation13], %s387
        %s389 = sand.u32 %s202, 1
        %s390 = smul.addr %s389, 16
        %s391 = scalar_lea.vmem [#allocation12], %s390
        %s392 = smul.u32 2, %s32
        %s393 = smul.u32 2, %s32
        %s394 = smul.u32 2, %s32
        %s395 = smul.u32 2, %s32
        %v397 = vld [vmem:[%s5] sm:$0x1]
        %v398 = vld [vmem:[%s5 + $0x1] sm:$0x1]
        %v399 = vld [vmem:[%s5 + $0x2] sm:$0x1]
        %v400 = vlaneseq
        %v401 = vshrl.u32 %v400, 7
        %v402 = vsub.s32 0, %v401
        %v403 = vrot.slane %v399, %v402
        %v404 = vld [vmem:[%s5 + $0x3] sm:$0x1]
        %v405 = vlaneseq
        %v406 = vshrl.u32 %v405, 7
        %v407 = vsub.s32 0, %v406
        %v408 = vrot.slane %v404, %v407
        %v409 = vld [vmem:[%s5 + $0x4] sm:$0x1]
        %v410 = vlaneseq
        %v411 = vshrl.u32 %v410, 7
        %v412 = vsub.s32 0, %v411
        %v413 = vrot.slane %v409, %v412
        %v414 = vld [vmem:[%s5 + $0x5] sm:$0x1]
        %v415 = vlaneseq
        %v416 = vshrl.u32 %v415, 7
        %v417 = vsub.s32 0, %v416
        %v418 = vrot.slane %v414, %v417
        %v419 = vld [vmem:[%s5 + $0x6] sm:$0x1]
        %v420 = vlaneseq
        %v421 = vshrl.u32 %v420, 7
        %v422 = vsub.s32 0, %v421
        %v423 = vrot.slane %v419, %v422
        %v424 = vld [vmem:[%s5 + $0x7] sm:$0x1]
        %v425 = vlaneseq
        %v426 = vshrl.u32 %v425, 7
        %v427 = vsub.s32 0, %v426
        %v428 = vrot.slane %v424, %v427
        %v429 = vld [vmem:[#allocation7] sm:$0xff]
        %v430 = vld [vmem:[#allocation7 + $0x8] sm:$0xff]
        %v431 = vld [vmem:[#allocation7 + $0x10] sm:$0xff]
        %v432 = vld [vmem:[#allocation7 + $0x18] sm:$0xff]
        %v433 = vld [vmem:[#allocation7 + $0x20] sm:$0xff]
        %v434 = vld [vmem:[#allocation7 + $0x28] sm:$0xff]
        %v435 = vld [vmem:[#allocation7 + $0x30] sm:$0xff]
        %v436 = vld [vmem:[#allocation7 + $0x38] sm:$0xff]
        %v437 = vld [vmem:[#allocation7 + $0x40] sm:$0xff]
        %v438 = vld [vmem:[#allocation7 + $0x48] sm:$0xff]
        %v439 = vld [vmem:[#allocation7 + $0x50] sm:$0xff]
        %v440 = vld [vmem:[#allocation7 + $0x58] sm:$0xff]
        %v441 = vld [vmem:[#allocation7 + $0x60] sm:$0xff]
        %v442 = vld [vmem:[#allocation7 + $0x68] sm:$0xff]
        %v443 = vld [vmem:[#allocation7 + $0x70] sm:$0xff]
        %v444 = vld [vmem:[#allocation7 + $0x78] sm:$0xff]
        %v445 = vld [vmem:[#allocation7 + $0x80] sm:$0xff]
        %v446 = vld [vmem:[#allocation7 + $0x88] sm:$0xff]
        %v447 = vld [vmem:[#allocation7 + $0x90] sm:$0xff]
        %v448 = vld [vmem:[#allocation7 + $0x98] sm:$0xff]
        %v449 = vld [vmem:[#allocation7 + $0xa0] sm:$0xff]
        %v450 = vld [vmem:[#allocation7 + $0xa8] sm:$0xff]
        %v451 = vld [vmem:[#allocation7 + $0xb0] sm:$0xff]
        %v452 = vld [vmem:[#allocation7 + $0xb8] sm:$0xff]
        %v453 = vld [vmem:[#allocation7 + $0xc0] sm:$0xff]
        %v454 = vld [vmem:[#allocation7 + $0xc8] sm:$0xff]
        %v455 = vld [vmem:[#allocation7 + $0xd0] sm:$0xff]
        %v456 = vld [vmem:[#allocation7 + $0xd8] sm:$0xff]
        %v457 = vld [vmem:[#allocation7 + $0xe0] sm:$0xff]
        %v458 = vld [vmem:[#allocation7 + $0xe8] sm:$0xff]
        %v459 = vld [vmem:[#allocation7 + $0xf0] sm:$0xff]
        %v460 = vld [vmem:[#allocation7 + $0xf8] sm:$0xff]
        %v461 = vpack.c.bf16 %v431, %v429
        %v462 = vpack.c.bf16 %v432, %v430
        %v463 = vpack.c.bf16 %v435, %v433
        %v464 = vpack.c.bf16 %v436, %v434
        %v465 = vpack.c.bf16 %v439, %v437
        %v466 = vpack.c.bf16 %v440, %v438
        %v467 = vpack.c.bf16 %v443, %v441
        %v468 = vpack.c.bf16 %v444, %v442
        %v469 = vpack.c.bf16 %v447, %v445
        %v470 = vpack.c.bf16 %v448, %v446
        %v471 = vpack.c.bf16 %v451, %v449
        %v472 = vpack.c.bf16 %v452, %v450
        %v473 = vpack.c.bf16 %v455, %v453
        %v474 = vpack.c.bf16 %v456, %v454
        %v475 = vpack.c.bf16 %v459, %v457
        %v476 = vpack.c.bf16 %v460, %v458
        %v477 = vld [vmem:[#allocation8] sm:$0xff]
        %v478 = vld [vmem:[#allocation8 + $0x8] sm:$0xff]
        %v479 = vld [vmem:[#allocation8 + $0x10] sm:$0xff]
        %v480 = vld [vmem:[#allocation8 + $0x18] sm:$0xff]
        %v481 = vld [vmem:[#allocation8 + $0x20] sm:$0xff]
        %v482 = vld [vmem:[#allocation8 + $0x28] sm:$0xff]
        %v483 = vld [vmem:[#allocation8 + $0x30] sm:$0xff]
        %v484 = vld [vmem:[#allocation8 + $0x38] sm:$0xff]
        %v485 = vld [vmem:[#allocation8 + $0x40] sm:$0xff]
        %v486 = vld [vmem:[#allocation8 + $0x48] sm:$0xff]
        %v487 = vld [vmem:[#allocation8 + $0x50] sm:$0xff]
        %v488 = vld [vmem:[#allocation8 + $0x58] sm:$0xff]
        %v489 = vld [vmem:[#allocation8 + $0x60] sm:$0xff]
        %v490 = vld [vmem:[#allocation8 + $0x68] sm:$0xff]
        %v491 = vld [vmem:[#allocation8 + $0x70] sm:$0xff]
        %v492 = vld [vmem:[#allocation8 + $0x78] sm:$0xff]
        %v493 = vld [vmem:[#allocation8 + $0x80] sm:$0xff]
        %v494 = vld [vmem:[#allocation8 + $0x88] sm:$0xff]
        %v495 = vld [vmem:[#allocation8 + $0x90] sm:$0xff]
        %v496 = vld [vmem:[#allocation8 + $0x98] sm:$0xff]
        %v497 = vld [vmem:[#allocation8 + $0xa0] sm:$0xff]
        %v498 = vld [vmem:[#allocation8 + $0xa8] sm:$0xff]
        %v499 = vld [vmem:[#allocation8 + $0xb0] sm:$0xff]
        %v500 = vld [vmem:[#allocation8 + $0xb8] sm:$0xff]
        %v501 = vld [vmem:[#allocation8 + $0xc0] sm:$0xff]
        %v502 = vld [vmem:[#allocation8 + $0xc8] sm:$0xff]
        %v503 = vld [vmem:[#allocation8 + $0xd0] sm:$0xff]
        %v504 = vld [vmem:[#allocation8 + $0xd8] sm:$0xff]
        %v505 = vld [vmem:[#allocation8 + $0xe0] sm:$0xff]
        %v506 = vld [vmem:[#allocation8 + $0xe8] sm:$0xff]
        %v507 = vld [vmem:[#allocation8 + $0xf0] sm:$0xff]
        %v508 = vld [vmem:[#allocation8 + $0xf8] sm:$0xff]
        %v509 = vld [vmem:[#allocation8 + $0x100] sm:$0xff]
        %v510 = vld [vmem:[#allocation8 + $0x108] sm:$0xff]
        %v511 = vld [vmem:[#allocation8 + $0x110] sm:$0xff]
        %v512 = vld [vmem:[#allocation8 + $0x118] sm:$0xff]
        %v513 = vld [vmem:[#allocation8 + $0x120] sm:$0xff]
        %v514 = vld [vmem:[#allocation8 + $0x128] sm:$0xff]
        %v515 = vld [vmem:[#allocation8 + $0x130] sm:$0xff]
        %v516 = vld [vmem:[#allocation8 + $0x138] sm:$0xff]
        %v517 = vld [vmem:[#allocation8 + $0x140] sm:$0xff]
        %v518 = vld [vmem:[#allocation8 + $0x148] sm:$0xff]
        %v519 = vld [vmem:[#allocation8 + $0x150] sm:$0xff]
        %v520 = vld [vmem:[#allocation8 + $0x158] sm:$0xff]
        %v521 = vld [vmem:[#allocation8 + $0x160] sm:$0xff]
        %v522 = vld [vmem:[#allocation8 + $0x168] sm:$0xff]
        %v523 = vld [vmem:[#allocation8 + $0x170] sm:$0xff]
        %v524 = vld [vmem:[#allocation8 + $0x178] sm:$0xff]
        %v525 = vld [vmem:[#allocation8 + $0x180] sm:$0xff]
        %v526 = vld [vmem:[#allocation8 + $0x188] sm:$0xff]
        %v527 = vld [vmem:[#allocation8 + $0x190] sm:$0xff]
        %v528 = vld [vmem:[#allocation8 + $0x198] sm:$0xff]
        %v529 = vld [vmem:[#allocation8 + $0x1a0] sm:$0xff]
        %v530 = vld [vmem:[#allocation8 + $0x1a8] sm:$0xff]
        %v531 = vld [vmem:[#allocation8 + $0x1b0] sm:$0xff]
        %v532 = vld [vmem:[#allocation8 + $0x1b8] sm:$0xff]
        %v533 = vld [vmem:[#allocation8 + $0x1c0] sm:$0xff]
        %v534 = vld [vmem:[#allocation8 + $0x1c8] sm:$0xff]
        %v535 = vld [vmem:[#allocation8 + $0x1d0] sm:$0xff]
        %v536 = vld [vmem:[#allocation8 + $0x1d8] sm:$0xff]
        %v537 = vld [vmem:[#allocation8 + $0x1e0] sm:$0xff]
        %v538 = vld [vmem:[#allocation8 + $0x1e8] sm:$0xff]
        %v539 = vld [vmem:[#allocation8 + $0x1f0] sm:$0xff]
        %v540 = vld [vmem:[#allocation8 + $0x1f8] sm:$0xff]
        %v541 = vld [vmem:[#allocation8 + $0x200] sm:$0xff]
        %v542 = vld [vmem:[#allocation8 + $0x208] sm:$0xff]
        %v543 = vld [vmem:[#allocation8 + $0x210] sm:$0xff]
        %v544 = vld [vmem:[#allocation8 + $0x218] sm:$0xff]
        %v545 = vld [vmem:[#allocation8 + $0x220] sm:$0xff]
        %v546 = vld [vmem:[#allocation8 + $0x228] sm:$0xff]
        %v547 = vld [vmem:[#allocation8 + $0x230] sm:$0xff]
        %v548 = vld [vmem:[#allocation8 + $0x238] sm:$0xff]
        %v549 = vld [vmem:[#allocation8 + $0x240] sm:$0xff]
        %v550 = vld [vmem:[#allocation8 + $0x248] sm:$0xff]
        %v551 = vld [vmem:[#allocation8 + $0x250] sm:$0xff]
        %v552 = vld [vmem:[#allocation8 + $0x258] sm:$0xff]
        %v553 = vld [vmem:[#allocation8 + $0x260] sm:$0xff]
        %v554 = vld [vmem:[#allocation8 + $0x268] sm:$0xff]
        %v555 = vld [vmem:[#allocation8 + $0x270] sm:$0xff]
        %v556 = vld [vmem:[#allocation8 + $0x278] sm:$0xff]
        %v557 = vld [vmem:[#allocation8 + $0x280] sm:$0xff]
        %v558 = vld [vmem:[#allocation8 + $0x288] sm:$0xff]
        %v559 = vld [vmem:[#allocation8 + $0x290] sm:$0xff]
        %v560 = vld [vmem:[#allocation8 + $0x298] sm:$0xff]
        %v561 = vld [vmem:[#allocation8 + $0x2a0] sm:$0xff]
        %v562 = vld [vmem:[#allocation8 + $0x2a8] sm:$0xff]
        %v563 = vld [vmem:[#allocation8 + $0x2b0] sm:$0xff]
        %v564 = vld [vmem:[#allocation8 + $0x2b8] sm:$0xff]
        %v565 = vld [vmem:[#allocation8 + $0x2c0] sm:$0xff]
        %v566 = vld [vmem:[#allocation8 + $0x2c8] sm:$0xff]
        %v567 = vld [vmem:[#allocation8 + $0x2d0] sm:$0xff]
        %v568 = vld [vmem:[#allocation8 + $0x2d8] sm:$0xff]
        %v569 = vld [vmem:[#allocation8 + $0x2e0] sm:$0xff]
        %v570 = vld [vmem:[#allocation8 + $0x2e8] sm:$0xff]
        %v571 = vld [vmem:[#allocation8 + $0x2f0] sm:$0xff]
        %v572 = vld [vmem:[#allocation8 + $0x2f8] sm:$0xff]
        %v573 = vld [vmem:[#allocation8 + $0x300] sm:$0xff]
        %v574 = vld [vmem:[#allocation8 + $0x308] sm:$0xff]
        %v575 = vld [vmem:[#allocation8 + $0x310] sm:$0xff]
        %v576 = vld [vmem:[#allocation8 + $0x318] sm:$0xff]
        %v577 = vld [vmem:[#allocation8 + $0x320] sm:$0xff]
        %v578 = vld [vmem:[#allocation8 + $0x328] sm:$0xff]
        %v579 = vld [vmem:[#allocation8 + $0x330] sm:$0xff]
        %v580 = vld [vmem:[#allocation8 + $0x338] sm:$0xff]
        %v581 = vld [vmem:[#allocation8 + $0x340] sm:$0xff]
        %v582 = vld [vmem:[#allocation8 + $0x348] sm:$0xff]
        %v583 = vld [vmem:[#allocation8 + $0x350] sm:$0xff]
        %v584 = vld [vmem:[#allocation8 + $0x358] sm:$0xff]
        %v585 = vld [vmem:[#allocation8 + $0x360] sm:$0xff]
        %v586 = vld [vmem:[#allocation8 + $0x368] sm:$0xff]
        %v587 = vld [vmem:[#allocation8 + $0x370] sm:$0xff]
        %v588 = vld [vmem:[#allocation8 + $0x378] sm:$0xff]
        %v589 = vld [vmem:[#allocation8 + $0x380] sm:$0xff]
        %v590 = vld [vmem:[#allocation8 + $0x388] sm:$0xff]
        %v591 = vld [vmem:[#allocation8 + $0x390] sm:$0xff]
        %v592 = vld [vmem:[#allocation8 + $0x398] sm:$0xff]
        %v593 = vld [vmem:[#allocation8 + $0x3a0] sm:$0xff]
        %v594 = vld [vmem:[#allocation8 + $0x3a8] sm:$0xff]
        %v595 = vld [vmem:[#allocation8 + $0x3b0] sm:$0xff]
        %v596 = vld [vmem:[#allocation8 + $0x3b8] sm:$0xff]
        %v597 = vld [vmem:[#allocation8 + $0x3c0] sm:$0xff]
        %v598 = vld [vmem:[#allocation8 + $0x3c8] sm:$0xff]
        %v599 = vld [vmem:[#allocation8 + $0x3d0] sm:$0xff]
        %v600 = vld [vmem:[#allocation8 + $0x3d8] sm:$0xff]
        %v601 = vld [vmem:[#allocation8 + $0x3e0] sm:$0xff]
        %v602 = vld [vmem:[#allocation8 + $0x3e8] sm:$0xff]
        %v603 = vld [vmem:[#allocation8 + $0x3f0] sm:$0xff]
        %v604 = vld [vmem:[#allocation8 + $0x3f8] sm:$0xff]
        %v605 = vpack.c.bf16 %v485, %v477
        %v606 = vpack.c.bf16 %v486, %v478
        %v607 = vpack.c.bf16 %v487, %v479
        %v608 = vpack.c.bf16 %v488, %v480
        %v609 = vpack.c.bf16 %v489, %v481
        %v610 = vpack.c.bf16 %v490, %v482
        %v611 = vpack.c.bf16 %v491, %v483
        %v612 = vpack.c.bf16 %v492, %v484
        %v613 = vpack.c.bf16 %v501, %v493
        %v614 = vpack.c.bf16 %v502, %v494
        %v615 = vpack.c.bf16 %v503, %v495
        %v616 = vpack.c.bf16 %v504, %v496
        %v617 = vpack.c.bf16 %v505, %v497
        %v618 = vpack.c.bf16 %v506, %v498
        %v619 = vpack.c.bf16 %v507, %v499
        %v620 = vpack.c.bf16 %v508, %v500
        %v621 = vpack.c.bf16 %v517, %v509
        %v622 = vpack.c.bf16 %v518, %v510
        %v623 = vpack.c.bf16 %v519, %v511
        %v624 = vpack.c.bf16 %v520, %v512
        %v625 = vpack.c.bf16 %v521, %v513
        %v626 = vpack.c.bf16 %v522, %v514
        %v627 = vpack.c.bf16 %v523, %v515
        %v628 = vpack.c.bf16 %v524, %v516
        %v629 = vpack.c.bf16 %v533, %v525
        %v630 = vpack.c.bf16 %v534, %v526
        %v631 = vpack.c.bf16 %v535, %v527
        %v632 = vpack.c.bf16 %v536, %v528
        %v633 = vpack.c.bf16 %v537, %v529
        %v634 = vpack.c.bf16 %v538, %v530
        %v635 = vpack.c.bf16 %v539, %v531
        %v636 = vpack.c.bf16 %v540, %v532
        %v637 = vpack.c.bf16 %v549, %v541
        %v638 = vpack.c.bf16 %v550, %v542
        %v639 = vpack.c.bf16 %v551, %v543
        %v640 = vpack.c.bf16 %v552, %v544
        %v641 = vpack.c.bf16 %v553, %v545
        %v642 = vpack.c.bf16 %v554, %v546
        %v643 = vpack.c.bf16 %v555, %v547
        %v644 = vpack.c.bf16 %v556, %v548
        %v645 = vpack.c.bf16 %v565, %v557
        %v646 = vpack.c.bf16 %v566, %v558
        %v647 = vpack.c.bf16 %v567, %v559
        %v648 = vpack.c.bf16 %v568, %v560
        %v649 = vpack.c.bf16 %v569, %v561
        %v650 = vpack.c.bf16 %v570, %v562
        %v651 = vpack.c.bf16 %v571, %v563
        %v652 = vpack.c.bf16 %v572, %v564
        %v653 = vpack.c.bf16 %v581, %v573
        %v654 = vpack.c.bf16 %v582, %v574
        %v655 = vpack.c.bf16 %v583, %v575
        %v656 = vpack.c.bf16 %v584, %v576
        %v657 = vpack.c.bf16 %v585, %v577
        %v658 = vpack.c.bf16 %v586, %v578
        %v659 = vpack.c.bf16 %v587, %v579
        %v660 = vpack.c.bf16 %v588, %v580
        %v661 = vpack.c.bf16 %v597, %v589
        %v662 = vpack.c.bf16 %v598, %v590
        %v663 = vpack.c.bf16 %v599, %v591
        %v664 = vpack.c.bf16 %v600, %v592
        %v665 = vpack.c.bf16 %v601, %v593
        %v666 = vpack.c.bf16 %v602, %v594
        %v667 = vpack.c.bf16 %v603, %v595
        %v668 = vpack.c.bf16 %v604, %v596
        %v669 = vld [vmem:[#allocation10] sm:$0xff]
        %v670 = vld [vmem:[#allocation10 + $0x8] sm:$0xff]
        %v671 = vld [vmem:[#allocation10 + $0x10] sm:$0xff]
        %v672 = vld [vmem:[#allocation10 + $0x18] sm:$0xff]
        %v673 = vld [vmem:[#allocation10 + $0x20] sm:$0xff]
        %v674 = vld [vmem:[#allocation10 + $0x28] sm:$0xff]
        %v675 = vld [vmem:[#allocation10 + $0x30] sm:$0xff]
        %v676 = vld [vmem:[#allocation10 + $0x38] sm:$0xff]
        %v677 = vld [vmem:[#allocation10 + $0x40] sm:$0xff]
        %v678 = vld [vmem:[#allocation10 + $0x48] sm:$0xff]
        %v679 = vld [vmem:[#allocation10 + $0x50] sm:$0xff]
        %v680 = vld [vmem:[#allocation10 + $0x58] sm:$0xff]
        %v681 = vld [vmem:[#allocation10 + $0x60] sm:$0xff]
        %v682 = vld [vmem:[#allocation10 + $0x68] sm:$0xff]
        %v683 = vld [vmem:[#allocation10 + $0x70] sm:$0xff]
        %v684 = vld [vmem:[#allocation10 + $0x78] sm:$0xff]
        %v685 = vpack.c.bf16 %v670, %v669
        %v686 = vpack.c.bf16 %v672, %v671
        %v687 = vpack.c.bf16 %v674, %v673
        %v688 = vpack.c.bf16 %v676, %v675
        %v689 = vpack.c.bf16 %v678, %v677
        %v690 = vpack.c.bf16 %v680, %v679
        %v691 = vpack.c.bf16 %v682, %v681
        %v692 = vpack.c.bf16 %v684, %v683
        %v693 = vld [vmem:[%s330] sm:$0xff]
        %v694 = vld [vmem:[%s330 + $0x8] sm:$0xff]
        %v695 = vld [vmem:[%s330 + $0x10] sm:$0xff]
        %v696 = vld [vmem:[%s330 + $0x18] sm:$0xff]
        %v697 = vld [vmem:[%s330 + $0x20] sm:$0xff]
        %v698 = vld [vmem:[%s330 + $0x28] sm:$0xff]
        %v699 = vld [vmem:[%s330 + $0x30] sm:$0xff]
        %v700 = vld [vmem:[%s330 + $0x38] sm:$0xff]
        %v701 = vld [vmem:[%s330 + $0x40] sm:$0xff]
        %v702 = vld [vmem:[%s330 + $0x48] sm:$0xff]
        %v703 = vld [vmem:[%s330 + $0x50] sm:$0xff]
        %v704 = vld [vmem:[%s330 + $0x58] sm:$0xff]
        %v705 = vld [vmem:[%s330 + $0x60] sm:$0xff]
        %v706 = vld [vmem:[%s330 + $0x68] sm:$0xff]
        %v707 = vld [vmem:[%s330 + $0x70] sm:$0xff]
        %v708 = vld [vmem:[%s330 + $0x78] sm:$0xff]
        %v709 = vld [vmem:[%s330 + $0x80] sm:$0xff]
        %v710 = vld [vmem:[%s330 + $0x88] sm:$0xff]
        %v711 = vld [vmem:[%s330 + $0x90] sm:$0xff]
        %v712 = vld [vmem:[%s330 + $0x98] sm:$0xff]
        %v713 = vld [vmem:[%s330 + $0xa0] sm:$0xff]
        %v714 = vld [vmem:[%s330 + $0xa8] sm:$0xff]
        %v715 = vld [vmem:[%s330 + $0xb0] sm:$0xff]
        %v716 = vld [vmem:[%s330 + $0xb8] sm:$0xff]
        %v717 = vld [vmem:[%s330 + $0xc0] sm:$0xff]
        %v718 = vld [vmem:[%s330 + $0xc8] sm:$0xff]
        %v719 = vld [vmem:[%s330 + $0xd0] sm:$0xff]
        %v720 = vld [vmem:[%s330 + $0xd8] sm:$0xff]
        %v721 = vld [vmem:[%s330 + $0xe0] sm:$0xff]
        %v722 = vld [vmem:[%s330 + $0xe8] sm:$0xff]
        %v723 = vld [vmem:[%s330 + $0xf0] sm:$0xff]
        %v724 = vld [vmem:[%s330 + $0xf8] sm:$0xff]
        %725 = vadd.xlane.f32.xlu0 %v693
        %v726 = vpop.xlane.xlu0 %725
        %727 = vadd.xlane.f32.xlu0 %v694
        %v728 = vpop.xlane.xlu0 %727
        %729 = vadd.xlane.f32.xlu0 %v695
        %v730 = vpop.xlane.xlu0 %729
        %731 = vadd.xlane.f32.xlu0 %v696
        %v732 = vpop.xlane.xlu0 %731
        %733 = vadd.xlane.f32.xlu0 %v697
        %v734 = vpop.xlane.xlu0 %733
        %735 = vadd.xlane.f32.xlu0 %v698
        %v736 = vpop.xlane.xlu0 %735
        %737 = vadd.xlane.f32.xlu0 %v699
        %v738 = vpop.xlane.xlu0 %737
        %739 = vadd.xlane.f32.xlu0 %v700
        %v740 = vpop.xlane.xlu0 %739
        %741 = vadd.xlane.f32.xlu0 %v701
        %v742 = vpop.xlane.xlu0 %741
        %743 = vadd.xlane.f32.xlu0 %v702
        %v744 = vpop.xlane.xlu0 %743
        %745 = vadd.xlane.f32.xlu0 %v703
        %v746 = vpop.xlane.xlu0 %745
        %747 = vadd.xlane.f32.xlu0 %v704
        %v748 = vpop.xlane.xlu0 %747
        %749 = vadd.xlane.f32.xlu0 %v705
        %v750 = vpop.xlane.xlu0 %749
        %751 = vadd.xlane.f32.xlu0 %v706
        %v752 = vpop.xlane.xlu0 %751
        %753 = vadd.xlane.f32.xlu0 %v707
        %v754 = vpop.xlane.xlu0 %753
        %755 = vadd.xlane.f32.xlu0 %v708
        %v756 = vpop.xlane.xlu0 %755
        %757 = vadd.xlane.f32.xlu0 %v709
        %v758 = vpop.xlane.xlu0 %757
        %759 = vadd.xlane.f32.xlu0 %v710
        %v760 = vpop.xlane.xlu0 %759
        %761 = vadd.xlane.f32.xlu0 %v711
        %v762 = vpop.xlane.xlu0 %761
        %763 = vadd.xlane.f32.xlu0 %v712
        %v764 = vpop.xlane.xlu0 %763
        %765 = vadd.xlane.f32.xlu0 %v713
        %v766 = vpop.xlane.xlu0 %765
        %767 = vadd.xlane.f32.xlu0 %v714
        %v768 = vpop.xlane.xlu0 %767
        %769 = vadd.xlane.f32.xlu0 %v715
        %v770 = vpop.xlane.xlu0 %769
        %771 = vadd.xlane.f32.xlu0 %v716
        %v772 = vpop.xlane.xlu0 %771
        %773 = vadd.xlane.f32.xlu0 %v717
        %v774 = vpop.xlane.xlu0 %773
        %775 = vadd.xlane.f32.xlu0 %v718
        %v776 = vpop.xlane.xlu0 %775
        %777 = vadd.xlane.f32.xlu0 %v719
        %v778 = vpop.xlane.xlu0 %777
        %779 = vadd.xlane.f32.xlu0 %v720
        %v780 = vpop.xlane.xlu0 %779
        %781 = vadd.xlane.f32.xlu0 %v721
        %v782 = vpop.xlane.xlu0 %781
        %783 = vadd.xlane.f32.xlu0 %v722
        %v784 = vpop.xlane.xlu0 %783
        %785 = vadd.xlane.f32.xlu0 %v723
        %v786 = vpop.xlane.xlu0 %785
        %787 = vadd.xlane.f32.xlu0 %v724
        %v788 = vpop.xlane.xlu0 %787
        %v789 = vrcp.pop 128.0
        %v790 = vmul.f32 %v726, %v789
        %v791 = vmul.f32 %v728, %v789
        %v792 = vmul.f32 %v730, %v789
        %v793 = vmul.f32 %v732, %v789
        %v794 = vmul.f32 %v734, %v789
        %v795 = vmul.f32 %v736, %v789
        %v796 = vmul.f32 %v738, %v789
        %v797 = vmul.f32 %v740, %v789
        %v798 = vmul.f32 %v742, %v789
        %v799 = vmul.f32 %v744, %v789
        %v800 = vmul.f32 %v746, %v789
        %v801 = vmul.f32 %v748, %v789
        %v802 = vmul.f32 %v750, %v789
        %v803 = vmul.f32 %v752, %v789
        %v804 = vmul.f32 %v754, %v789
        %v805 = vmul.f32 %v756, %v789
        %v806 = vmul.f32 %v758, %v789
        %v807 = vmul.f32 %v760, %v789
        %v808 = vmul.f32 %v762, %v789
        %v809 = vmul.f32 %v764, %v789
        %v810 = vmul.f32 %v766, %v789
        %v811 = vmul.f32 %v768, %v789
        %v812 = vmul.f32 %v770, %v789
        %v813 = vmul.f32 %v772, %v789
        %v814 = vmul.f32 %v774, %v789
        %v815 = vmul.f32 %v776, %v789
        %v816 = vmul.f32 %v778, %v789
        %v817 = vmul.f32 %v780, %v789
        %v818 = vmul.f32 %v782, %v789
        %v819 = vmul.f32 %v784, %v789
        %v820 = vmul.f32 %v786, %v789
        %v821 = vmul.f32 %v788, %v789
        %v822 = vsub.f32 %v693, %v790
        %v823 = vsub.f32 %v694, %v791
        %v824 = vsub.f32 %v695, %v792
        %v825 = vsub.f32 %v696, %v793
        %v826 = vsub.f32 %v697, %v794
        %v827 = vsub.f32 %v698, %v795
        %v828 = vsub.f32 %v699, %v796
        %v829 = vsub.f32 %v700, %v797
        %v830 = vsub.f32 %v701, %v798
        %v831 = vsub.f32 %v702, %v799
        %v832 = vsub.f32 %v703, %v800
        %v833 = vsub.f32 %v704, %v801
        %v834 = vsub.f32 %v705, %v802
        %v835 = vsub.f32 %v706, %v803
        %v836 = vsub.f32 %v707, %v804
        %v837 = vsub.f32 %v708, %v805
        %v838 = vsub.f32 %v709, %v806
        %v839 = vsub.f32 %v710, %v807
        %v840 = vsub.f32 %v711, %v808
        %v841 = vsub.f32 %v712, %v809
        %v842 = vsub.f32 %v713, %v810
        %v843 = vsub.f32 %v714, %v811
        %v844 = vsub.f32 %v715, %v812
        %v845 = vsub.f32 %v716, %v813
        %v846 = vsub.f32 %v717, %v814
        %v847 = vsub.f32 %v718, %v815
        %v848 = vsub.f32 %v719, %v816
        %v849 = vsub.f32 %v720, %v817
        %v850 = vsub.f32 %v721, %v818
        %v851 = vsub.f32 %v722, %v819
        %v852 = vsub.f32 %v723, %v820
        %v853 = vsub.f32 %v724, %v821
        %v854 = vmul.f32 %v822, %v822
        %v855 = vmul.f32 %v823, %v823
        %v856 = vmul.f32 %v824, %v824
        %v857 = vmul.f32 %v825, %v825
        %v858 = vmul.f32 %v826, %v826
        %v859 = vmul.f32 %v827, %v827
        %v860 = vmul.f32 %v828, %v828
        %v861 = vmul.f32 %v829, %v829
        %v862 = vmul.f32 %v830, %v830
        %v863 = vmul.f32 %v831, %v831
        %v864 = vmul.f32 %v832, %v832
        %v865 = vmul.f32 %v833, %v833
        %v866 = vmul.f32 %v834, %v834
        %v867 = vmul.f32 %v835, %v835
        %v868 = vmul.f32 %v836, %v836
        %v869 = vmul.f32 %v837, %v837
        %v870 = vmul.f32 %v838, %v838
        %v871 = vmul.f32 %v839, %v839
        %v872 = vmul.f32 %v840, %v840
        %v873 = vmul.f32 %v841, %v841
        %v874 = vmul.f32 %v842, %v842
        %v875 = vmul.f32 %v843, %v843
        %v876 = vmul.f32 %v844, %v844
        %v877 = vmul.f32 %v845, %v845
        %v878 = vmul.f32 %v846, %v846
        %v879 = vmul.f32 %v847, %v847
        %v880 = vmul.f32 %v848, %v848
        %v881 = vmul.f32 %v849, %v849
        %v882 = vmul.f32 %v850, %v850
        %v883 = vmul.f32 %v851, %v851
        %v884 = vmul.f32 %v852, %v852
        %v885 = vmul.f32 %v853, %v853
        %886 = vadd.xlane.f32.xlu0 %v854
        %v887 = vpop.xlane.xlu0 %886
        %888 = vadd.xlane.f32.xlu0 %v855
        %v889 = vpop.xlane.xlu0 %888
        %890 = vadd.xlane.f32.xlu0 %v856
        %v891 = vpop.xlane.xlu0 %890
        %892 = vadd.xlane.f32.xlu0 %v857
        %v893 = vpop.xlane.xlu0 %892
        %894 = vadd.xlane.f32.xlu0 %v858
        %v895 = vpop.xlane.xlu0 %894
        %896 = vadd.xlane.f32.xlu0 %v859
        %v897 = vpop.xlane.xlu0 %896
        %898 = vadd.xlane.f32.xlu0 %v860
        %v899 = vpop.xlane.xlu0 %898
        %900 = vadd.xlane.f32.xlu0 %v861
        %v901 = vpop.xlane.xlu0 %900
        %902 = vadd.xlane.f32.xlu0 %v862
        %v903 = vpop.xlane.xlu0 %902
        %904 = vadd.xlane.f32.xlu0 %v863
        %v905 = vpop.xlane.xlu0 %904
        %906 = vadd.xlane.f32.xlu0 %v864
        %v907 = vpop.xlane.xlu0 %906
        %908 = vadd.xlane.f32.xlu0 %v865
        %v909 = vpop.xlane.xlu0 %908
        %910 = vadd.xlane.f32.xlu0 %v866
        %v911 = vpop.xlane.xlu0 %910
        %912 = vadd.xlane.f32.xlu0 %v867
        %v913 = vpop.xlane.xlu0 %912
        %914 = vadd.xlane.f32.xlu0 %v868
        %v915 = vpop.xlane.xlu0 %914
        %916 = vadd.xlane.f32.xlu0 %v869
        %v917 = vpop.xlane.xlu0 %916
        %918 = vadd.xlane.f32.xlu0 %v870
        %v919 = vpop.xlane.xlu0 %918
        %920 = vadd.xlane.f32.xlu0 %v871
        %v921 = vpop.xlane.xlu0 %920
        %922 = vadd.xlane.f32.xlu0 %v872
        %v923 = vpop.xlane.xlu0 %922
        %924 = vadd.xlane.f32.xlu0 %v873
        %v925 = vpop.xlane.xlu0 %924
        %926 = vadd.xlane.f32.xlu0 %v874
        %v927 = vpop.xlane.xlu0 %926
        %928 = vadd.xlane.f32.xlu0 %v875
        %v929 = vpop.xlane.xlu0 %928
        %930 = vadd.xlane.f32.xlu0 %v876
        %v931 = vpop.xlane.xlu0 %930
        %932 = vadd.xlane.f32.xlu0 %v877
        %v933 = vpop.xlane.xlu0 %932
        %934 = vadd.xlane.f32.xlu0 %v878
        %v935 = vpop.xlane.xlu0 %934
        %936 = vadd.xlane.f32.xlu0 %v879
        %v937 = vpop.xlane.xlu0 %936
        %938 = vadd.xlane.f32.xlu0 %v880
        %v939 = vpop.xlane.xlu0 %938
        %940 = vadd.xlane.f32.xlu0 %v881
        %v941 = vpop.xlane.xlu0 %940
        %942 = vadd.xlane.f32.xlu0 %v882
        %v943 = vpop.xlane.xlu0 %942
        %944 = vadd.xlane.f32.xlu0 %v883
        %v945 = vpop.xlane.xlu0 %944
        %946 = vadd.xlane.f32.xlu0 %v884
        %v947 = vpop.xlane.xlu0 %946
        %948 = vadd.xlane.f32.xlu0 %v885
        %v949 = vpop.xlane.xlu0 %948
        %v950 = vmul.f32 %v887, %v789
        %v951 = vmul.f32 %v889, %v789
        %v952 = vmul.f32 %v891, %v789
        %v953 = vmul.f32 %v893, %v789
        %v954 = vmul.f32 %v895, %v789
        %v955 = vmul.f32 %v897, %v789
        %v956 = vmul.f32 %v899, %v789
        %v957 = vmul.f32 %v901, %v789
        %v958 = vmul.f32 %v903, %v789
        %v959 = vmul.f32 %v905, %v789
        %v960 = vmul.f32 %v907, %v789
        %v961 = vmul.f32 %v909, %v789
        %v962 = vmul.f32 %v911, %v789
        %v963 = vmul.f32 %v913, %v789
        %v964 = vmul.f32 %v915, %v789
        %v965 = vmul.f32 %v917, %v789
        %v966 = vmul.f32 %v919, %v789
        %v967 = vmul.f32 %v921, %v789
        %v968 = vmul.f32 %v923, %v789
        %v969 = vmul.f32 %v925, %v789
        %v970 = vmul.f32 %v927, %v789
        %v971 = vmul.f32 %v929, %v789
        %v972 = vmul.f32 %v931, %v789
        %v973 = vmul.f32 %v933, %v789
        %v974 = vmul.f32 %v935, %v789
        %v975 = vmul.f32 %v937, %v789
        %v976 = vmul.f32 %v939, %v789
        %v977 = vmul.f32 %v941, %v789
        %v978 = vmul.f32 %v943, %v789
        %v979 = vmul.f32 %v945, %v789
        %v980 = vmul.f32 %v947, %v789
        %v981 = vmul.f32 %v949, %v789
        %v982 = vadd.f32 %v950, 1e-05
        %v983 = vadd.f32 %v951, 1e-05
        %v984 = vadd.f32 %v952, 1e-05
        %v985 = vadd.f32 %v953, 1e-05
        %v986 = vadd.f32 %v954, 1e-05
        %v987 = vadd.f32 %v955, 1e-05
        %v988 = vadd.f32 %v956, 1e-05
        %v989 = vadd.f32 %v957, 1e-05
        %v990 = vadd.f32 %v958, 1e-05
        %v991 = vadd.f32 %v959, 1e-05
        %v992 = vadd.f32 %v960, 1e-05
        %v993 = vadd.f32 %v961, 1e-05
        %v994 = vadd.f32 %v962, 1e-05
        %v995 = vadd.f32 %v963, 1e-05
        %v996 = vadd.f32 %v964, 1e-05
        %v997 = vadd.f32 %v965, 1e-05
        %v998 = vadd.f32 %v966, 1e-05
        %v999 = vadd.f32 %v967, 1e-05
        %v1000 = vadd.f32 %v968, 1e-05
        %v1001 = vadd.f32 %v969, 1e-05
        %v1002 = vadd.f32 %v970, 1e-05
        %v1003 = vadd.f32 %v971, 1e-05
        %v1004 = vadd.f32 %v972, 1e-05
        %v1005 = vadd.f32 %v973, 1e-05
        %v1006 = vadd.f32 %v974, 1e-05
        %v1007 = vadd.f32 %v975, 1e-05
        %v1008 = vadd.f32 %v976, 1e-05
        %v1009 = vadd.f32 %v977, 1e-05
        %v1010 = vadd.f32 %v978, 1e-05
        %v1011 = vadd.f32 %v979, 1e-05
        %v1012 = vadd.f32 %v980, 1e-05
        %v1013 = vadd.f32 %v981, 1e-05
        %v1014 = vrsqrt.pop %v982
        %v1015 = vrsqrt.pop %v983
        %v1016 = vrsqrt.pop %v984
        %v1017 = vrsqrt.pop %v985
        %v1018 = vrsqrt.pop %v986
        %v1019 = vrsqrt.pop %v987
        %v1020 = vrsqrt.pop %v988
        %v1021 = vrsqrt.pop %v989
        %v1022 = vrsqrt.pop %v990
        %v1023 = vrsqrt.pop %v991
        %v1024 = vrsqrt.pop %v992
        %v1025 = vrsqrt.pop %v993
        %v1026 = vrsqrt.pop %v994
        %v1027 = vrsqrt.pop %v995
        %v1028 = vrsqrt.pop %v996
        %v1029 = vrsqrt.pop %v997
        %v1030 = vrsqrt.pop %v998
        %v1031 = vrsqrt.pop %v999
        %v1032 = vrsqrt.pop %v1000
        %v1033 = vrsqrt.pop %v1001
        %v1034 = vrsqrt.pop %v1002
        %v1035 = vrsqrt.pop %v1003
        %v1036 = vrsqrt.pop %v1004
        %v1037 = vrsqrt.pop %v1005
        %v1038 = vrsqrt.pop %v1006
        %v1039 = vrsqrt.pop %v1007
        %v1040 = vrsqrt.pop %v1008
        %v1041 = vrsqrt.pop %v1009
        %v1042 = vrsqrt.pop %v1010
        %v1043 = vrsqrt.pop %v1011
        %v1044 = vrsqrt.pop %v1012
        %v1045 = vrsqrt.pop %v1013
        %v1046 = vmul.f32 %v822, %v1014
        %v1047 = vmul.f32 %v823, %v1015
        %v1048 = vmul.f32 %v824, %v1016
        %v1049 = vmul.f32 %v825, %v1017
        %v1050 = vmul.f32 %v826, %v1018
        %v1051 = vmul.f32 %v827, %v1019
        %v1052 = vmul.f32 %v828, %v1020
        %v1053 = vmul.f32 %v829, %v1021
        %v1054 = vmul.f32 %v830, %v1022
        %v1055 = vmul.f32 %v831, %v1023
        %v1056 = vmul.f32 %v832, %v1024
        %v1057 = vmul.f32 %v833, %v1025
        %v1058 = vmul.f32 %v834, %v1026
        %v1059 = vmul.f32 %v835, %v1027
        %v1060 = vmul.f32 %v836, %v1028
        %v1061 = vmul.f32 %v837, %v1029
        %v1062 = vmul.f32 %v838, %v1030
        %v1063 = vmul.f32 %v839, %v1031
        %v1064 = vmul.f32 %v840, %v1032
        %v1065 = vmul.f32 %v841, %v1033
        %v1066 = vmul.f32 %v842, %v1034
        %v1067 = vmul.f32 %v843, %v1035
        %v1068 = vmul.f32 %v844, %v1036
        %v1069 = vmul.f32 %v845, %v1037
        %v1070 = vmul.f32 %v846, %v1038
        %v1071 = vmul.f32 %v847, %v1039
        %v1072 = vmul.f32 %v848, %v1040
        %v1073 = vmul.f32 %v849, %v1041
        %v1074 = vmul.f32 %v850, %v1042
        %v1075 = vmul.f32 %v851, %v1043
        %v1076 = vmul.f32 %v852, %v1044
        %v1077 = vmul.f32 %v853, %v1045
        %v1078 = vlaneseq
        %v1079 = vshrl.u32 %v1078, 7
        %v1080 = vsub.s32 0, %v1079
        %v1081 = vrot.slane %v397, %v1080
        %v1082 = vmul.f32 %v1046, %v1081
        %v1083 = vmul.f32 %v1047, %v1081
        %v1084 = vmul.f32 %v1048, %v1081
        %v1085 = vmul.f32 %v1049, %v1081
        %v1086 = vmul.f32 %v1050, %v1081
        %v1087 = vmul.f32 %v1051, %v1081
        %v1088 = vmul.f32 %v1052, %v1081
        %v1089 = vmul.f32 %v1053, %v1081
        %v1090 = vmul.f32 %v1054, %v1081
        %v1091 = vmul.f32 %v1055, %v1081
        %v1092 = vmul.f32 %v1056, %v1081
        %v1093 = vmul.f32 %v1057, %v1081
        %v1094 = vmul.f32 %v1058, %v1081
        %v1095 = vmul.f32 %v1059, %v1081
        %v1096 = vmul.f32 %v1060, %v1081
        %v1097 = vmul.f32 %v1061, %v1081
        %v1098 = vmul.f32 %v1062, %v1081
        %v1099 = vmul.f32 %v1063, %v1081
        %v1100 = vmul.f32 %v1064, %v1081
        %v1101 = vmul.f32 %v1065, %v1081
        %v1102 = vmul.f32 %v1066, %v1081
        %v1103 = vmul.f32 %v1067, %v1081
        %v1104 = vmul.f32 %v1068, %v1081
        %v1105 = vmul.f32 %v1069, %v1081
        %v1106 = vmul.f32 %v1070, %v1081
        %v1107 = vmul.f32 %v1071, %v1081
        %v1108 = vmul.f32 %v1072, %v1081
        %v1109 = vmul.f32 %v1073, %v1081
        %v1110 = vmul.f32 %v1074, %v1081
        %v1111 = vmul.f32 %v1075, %v1081
        %v1112 = vmul.f32 %v1076, %v1081
        %v1113 = vmul.f32 %v1077, %v1081
        %v1114 = vlaneseq
        %v1115 = vshrl.u32 %v1114, 7
        %v1116 = vsub.s32 0, %v1115
        %v1117 = vrot.slane %v398, %v1116
        %v1118 = vadd.f32 %v1082, %v1117
        %v1119 = vadd.f32 %v1083, %v1117
        %v1120 = vadd.f32 %v1084, %v1117
        %v1121 = vadd.f32 %v1085, %v1117
        %v1122 = vadd.f32 %v1086, %v1117
        %v1123 = vadd.f32 %v1087, %v1117
        %v1124 = vadd.f32 %v1088, %v1117
        %v1125 = vadd.f32 %v1089, %v1117
        %v1126 = vadd.f32 %v1090, %v1117
        %v1127 = vadd.f32 %v1091, %v1117
        %v1128 = vadd.f32 %v1092, %v1117
        %v1129 = vadd.f32 %v1093, %v1117
        %v1130 = vadd.f32 %v1094, %v1117
        %v1131 = vadd.f32 %v1095, %v1117
        %v1132 = vadd.f32 %v1096, %v1117
        %v1133 = vadd.f32 %v1097, %v1117
        %v1134 = vadd.f32 %v1098, %v1117
        %v1135 = vadd.f32 %v1099, %v1117
        %v1136 = vadd.f32 %v1100, %v1117
        %v1137 = vadd.f32 %v1101, %v1117
        %v1138 = vadd.f32 %v1102, %v1117
        %v1139 = vadd.f32 %v1103, %v1117
        %v1140 = vadd.f32 %v1104, %v1117
        %v1141 = vadd.f32 %v1105, %v1117
        %v1142 = vadd.f32 %v1106, %v1117
        %v1143 = vadd.f32 %v1107, %v1117
        %v1144 = vadd.f32 %v1108, %v1117
        %v1145 = vadd.f32 %v1109, %v1117
        %v1146 = vadd.f32 %v1110, %v1117
        %v1147 = vadd.f32 %v1111, %v1117
        %v1148 = vadd.f32 %v1112, %v1117
        %v1149 = vadd.f32 %v1113, %v1117
        %v1150 = vpack.c.bf16 %v1119, %v1118
        %v1151 = vpack.c.bf16 %v1121, %v1120
        %v1152 = vpack.c.bf16 %v1123, %v1122
        %v1153 = vpack.c.bf16 %v1125, %v1124
        %v1154 = vpack.c.bf16 %v1127, %v1126
        %v1155 = vpack.c.bf16 %v1129, %v1128
        %v1156 = vpack.c.bf16 %v1131, %v1130
        %v1157 = vpack.c.bf16 %v1133, %v1132
        %v1158 = vpack.c.bf16 %v1135, %v1134
        %v1159 = vpack.c.bf16 %v1137, %v1136
        %v1160 = vpack.c.bf16 %v1139, %v1138
        %v1161 = vpack.c.bf16 %v1141, %v1140
        %v1162 = vpack.c.bf16 %v1143, %v1142
        %v1163 = vpack.c.bf16 %v1145, %v1144
        %v1164 = vpack.c.bf16 %v1147, %v1146
        %v1165 = vpack.c.bf16 %v1149, %v1148
        %1166 = vmatprep.subr.bf16.mxu0 %v462
        %1167 = vmatpush1.bf16.msra.mxu0 %v461
        %1168 = vmatprep.subr.bf16.mxu0 %v464
        %1169 = vmatpush1.bf16.msra.mxu0 %v463
        %1170 = vmatprep.subr.bf16.mxu0 %v466
        %1171 = vmatpush1.bf16.msra.mxu0 %v465
        %1172 = vmatprep.subr.bf16.mxu0 %v468
        %1173 = vmatpush1.bf16.msra.mxu0 %v467
        %1174 = vmatprep.subr.bf16.mxu0 %v470
        %1175 = vmatpush1.bf16.msra.mxu0 %v469
        %1176 = vmatprep.subr.bf16.mxu0 %v472
        %1177 = vmatpush1.bf16.msra.mxu0 %v471
        %1178 = vmatprep.subr.bf16.mxu0 %v474
        %1179 = vmatpush1.bf16.msra.mxu0 %v473
        %1180 = vmatprep.subr.bf16.mxu0 %v476
        %1181 = vmatpush1.bf16.msra.mxu0 %v475
        %1182 = vmatprep.subr.bf16.mxu0 0
        %1183 = vmatpush1.bf16.msra.mxu0 0
        %1184 = vmatprep.subr.bf16.mxu0 0
        %1185 = vmatpush1.bf16.msra.mxu0 0
        %1186 = vmatprep.subr.bf16.mxu0 0
        %1187 = vmatpush1.bf16.msra.mxu0 0
        %1188 = vmatprep.subr.bf16.mxu0 0
        %1189 = vmatpush1.bf16.msra.mxu0 0
        %1190 = vmatprep.subr.bf16.mxu0 0
        %1191 = vmatpush1.bf16.msra.mxu0 0
        %1192 = vmatprep.subr.bf16.mxu0 0
        %1193 = vmatpush1.bf16.msra.mxu0 0
        %1194 = vmatprep.subr.bf16.mxu0 0
        %1195 = vmatpush1.bf16.msra.mxu0 0
        %1196 = vmatprep.subr.bf16.mxu0 0
        %1197 = vmatpush1.bf16.msra.mxu0 0
        %1198 = vmatprep.mubr.bf16.mxu0 0
        %1199 = vmatmul.mubr.bf16.gmra.mrb[0].mxu0 %v1150
        %v1200 = vpop.f32.mrb[0].mxu0
        %v1201 = vadd.f32 0.0, %v1200
        %v1202 = vpop.f32.mrb[0].mxu0
        %v1203 = vadd.f32 0.0, %v1202
        %v1204 = vpop.f32.mrb[0].mxu0
        %v1205 = vadd.f32 0.0, %v1204
        %v1206 = vpop.f32.mrb[0].mxu0
        %v1207 = vadd.f32 0.0, %v1206
        %1208 = vmatprep.mubr.bf16.mxu0 0
        %1209 = vmatmul.mubr.bf16.gmra.mrb[0].mxu0 %v1151
        %v1210 = vpop.f32.mrb[0].mxu0
        %v1211 = vadd.f32 0.0, %v1210
        %v1212 = vpop.f32.mrb[0].mxu0
        %v1213 = vadd.f32 0.0, %v1212
        %v1214 = vpop.f32.mrb[0].mxu0
        %v1215 = vadd.f32 0.0, %v1214
        %v1216 = vpop.f32.mrb[0].mxu0
        %v1217 = vadd.f32 0.0, %v1216
        %1218 = vmatprep.mubr.bf16.mxu0 0
        %1219 = vmatmul.mubr.bf16.gmra.mrb[0].mxu0 %v1152
        %v1220 = vpop.f32.mrb[0].mxu0
        %v1221 = vadd.f32 0.0, %v1220
        %v1222 = vpop.f32.mrb[0].mxu0
        %v1223 = vadd.f32 0.0, %v1222
        %v1224 = vpop.f32.mrb[0].mxu0
        %v1225 = vadd.f32 0.0, %v1224
        %v1226 = vpop.f32.mrb[0].mxu0
        %v1227 = vadd.f32 0.0, %v1226
        %1228 = vmatprep.mubr.bf16.mxu0 0
        %1229 = vmatmul.mubr.bf16.gmra.mrb[0].mxu0 %v1153
        %v1230 = vpop.f32.mrb[0].mxu0
        %v1231 = vadd.f32 0.0, %v1230
        %v1232 = vpop.f32.mrb[0].mxu0
        %v1233 = vadd.f32 0.0, %v1232
        %v1234 = vpop.f32.mrb[0].mxu0
        %v1235 = vadd.f32 0.0, %v1234
        %v1236 = vpop.f32.mrb[0].mxu0
        %v1237 = vadd.f32 0.0, %v1236
        %1238 = vmatprep.mubr.bf16.mxu0 0
        %1239 = vmatmul.mubr.bf16.gmra.mrb[0].mxu0 %v1154
        %v1240 = vpop.f32.mrb[0].mxu0
        %v1241 = vadd.f32 0.0, %v1240
        %v1242 = vpop.f32.mrb[0].mxu0
        %v1243 = vadd.f32 0.0, %v1242
        %v1244 = vpop.f32.mrb[0].mxu0
        %v1245 = vadd.f32 0.0, %v1244
        %v1246 = vpop.f32.mrb[0].mxu0
        %v1247 = vadd.f32 0.0, %v1246
        %1248 = vmatprep.mubr.bf16.mxu0 0
        %1249 = vmatmul.mubr.bf16.gmra.mrb[0].mxu0 %v1155
        %v1250 = vpop.f32.mrb[0].mxu0
        %v1251 = vadd.f32 0.0, %v1250
        %v1252 = vpop.f32.mrb[0].mxu0
        %v1253 = vadd.f32 0.0, %v1252
        %v1254 = vpop.f32.mrb[0].mxu0
        %v1255 = vadd.f32 0.0, %v1254
        %v1256 = vpop.f32.mrb[0].mxu0
        %v1257 = vadd.f32 0.0, %v1256
        %1258 = vmatprep.mubr.bf16.mxu0 0
        %1259 = vmatmul.mubr.bf16.gmra.mrb[0].mxu0 %v1156
        %v1260 = vpop.f32.mrb[0].mxu0
        %v1261 = vadd.f32 0.0, %v1260
        %v1262 = vpop.f32.mrb[0].mxu0
        %v1263 = vadd.f32 0.0, %v1262
        %v1264 = vpop.f32.mrb[0].mxu0
        %v1265 = vadd.f32 0.0, %v1264
        %v1266 = vpop.f32.mrb[0].mxu0
        %v1267 = vadd.f32 0.0, %v1266
        %1268 = vmatprep.mubr.bf16.mxu0 0
        %1269 = vmatmul.mubr.bf16.gmra.mrb[0].mxu0 %v1157
        %v1270 = vpop.f32.mrb[0].mxu0
        %v1271 = vadd.f32 0.0, %v1270
        %v1272 = vpop.f32.mrb[0].mxu0
        %v1273 = vadd.f32 0.0, %v1272
        %v1274 = vpop.f32.mrb[0].mxu0
        %v1275 = vadd.f32 0.0, %v1274
        %v1276 = vpop.f32.mrb[0].mxu0
        %v1277 = vadd.f32 0.0, %v1276
        %1278 = vmatprep.mubr.bf16.mxu0 0
        %1279 = vmatmul.mubr.bf16.gmra.mrb[0].mxu0 %v1158
        %v1280 = vpop.f32.mrb[0].mxu0
        %v1281 = vadd.f32 0.0, %v1280
        %v1282 = vpop.f32.mrb[0].mxu0
        %v1283 = vadd.f32 0.0, %v1282
        %v1284 = vpop.f32.mrb[0].mxu0
        %v1285 = vadd.f32 0.0, %v1284
        %v1286 = vpop.f32.mrb[0].mxu0
        %v1287 = vadd.f32 0.0, %v1286
        %1288 = vmatprep.mubr.bf16.mxu0 0
        %1289 = vmatmul.mubr.bf16.gmra.mrb[0].mxu0 %v1159
        %v1290 = vpop.f32.mrb[0].mxu0
        %v1291 = vadd.f32 0.0, %v1290
        %v1292 = vpop.f32.mrb[0].mxu0
        %v1293 = vadd.f32 0.0, %v1292
        %v1294 = vpop.f32.mrb[0].mxu0
        %v1295 = vadd.f32 0.0, %v1294
        %v1296 = vpop.f32.mrb[0].mxu0
        %v1297 = vadd.f32 0.0, %v1296
        %1298 = vmatprep.mubr.bf16.mxu0 0
        %1299 = vmatmul.mubr.bf16.gmra.mrb[0].mxu0 %v1160
        %v1300 = vpop.f32.mrb[0].mxu0
        %v1301 = vadd.f32 0.0, %v1300
        %v1302 = vpop.f32.mrb[0].mxu0
        %v1303 = vadd.f32 0.0, %v1302
        %v1304 = vpop.f32.mrb[0].mxu0
        %v1305 = vadd.f32 0.0, %v1304
        %v1306 = vpop.f32.mrb[0].mxu0
        %v1307 = vadd.f32 0.0, %v1306
        %1308 = vmatprep.mubr.bf16.mxu0 0
        %1309 = vmatmul.mubr.bf16.gmra.mrb[0].mxu0 %v1161
        %v1310 = vpop.f32.mrb[0].mxu0
        %v1311 = vadd.f32 0.0, %v1310
        %v1312 = vpop.f32.mrb[0].mxu0
        %v1313 = vadd.f32 0.0, %v1312
        %v1314 = vpop.f32.mrb[0].mxu0
        %v1315 = vadd.f32 0.0, %v1314
        %v1316 = vpop.f32.mrb[0].mxu0
        %v1317 = vadd.f32 0.0, %v1316
        %1318 = vmatprep.mubr.bf16.mxu0 0
        %1319 = vmatmul.mubr.bf16.gmra.mrb[0].mxu0 %v1162
        %v1320 = vpop.f32.mrb[0].mxu0
        %v1321 = vadd.f32 0.0, %v1320
        %v1322 = vpop.f32.mrb[0].mxu0
        %v1323 = vadd.f32 0.0, %v1322
        %v1324 = vpop.f32.mrb[0].mxu0
        %v1325 = vadd.f32 0.0, %v1324
        %v1326 = vpop.f32.mrb[0].mxu0
        %v1327 = vadd.f32 0.0, %v1326
        %1328 = vmatprep.mubr.bf16.mxu0 0
        %1329 = vmatmul.mubr.bf16.gmra.mrb[0].mxu0 %v1163
        %v1330 = vpop.f32.mrb[0].mxu0
        %v1331 = vadd.f32 0.0, %v1330
        %v1332 = vpop.f32.mrb[0].mxu0
        %v1333 = vadd.f32 0.0, %v1332
        %v1334 = vpop.f32.mrb[0].mxu0
        %v1335 = vadd.f32 0.0, %v1334
        %v1336 = vpop.f32.mrb[0].mxu0
        %v1337 = vadd.f32 0.0, %v1336
        %1338 = vmatprep.mubr.bf16.mxu0 0
        %1339 = vmatmul.mubr.bf16.gmra.mrb[0].mxu0 %v1164
        %v1340 = vpop.f32.mrb[0].mxu0
        %v1341 = vadd.f32 0.0, %v1340
        %v1342 = vpop.f32.mrb[0].mxu0
        %v1343 = vadd.f32 0.0, %v1342
        %v1344 = vpop.f32.mrb[0].mxu0
        %v1345 = vadd.f32 0.0, %v1344
        %v1346 = vpop.f32.mrb[0].mxu0
        %v1347 = vadd.f32 0.0, %v1346
        %1348 = vmatprep.mubr.bf16.mxu0 0
        %1349 = vmatmul.mubr.bf16.gmra.mrb[0].mxu0 %v1165
        %v1350 = vpop.f32.mrb[0].mxu0
        %v1351 = vadd.f32 0.0, %v1350
        %v1352 = vpop.f32.mrb[0].mxu0
        %v1353 = vadd.f32 0.0, %v1352
        %v1354 = vpop.f32.mrb[0].mxu0
        %v1355 = vadd.f32 0.0, %v1354
        %v1356 = vpop.f32.mrb[0].mxu0
        %v1357 = vadd.f32 0.0, %v1356
        %1358 = vdwg.mxu0
        %v1359 = vpack.c.bf16 %v1205, %v1201
        %v1360 = vpack.c.bf16 %v1215, %v1211
        %v1361 = vpack.c.bf16 %v1225, %v1221
        %v1362 = vpack.c.bf16 %v1235, %v1231
        %v1363 = vpack.c.bf16 %v1245, %v1241
        %v1364 = vpack.c.bf16 %v1255, %v1251
        %v1365 = vpack.c.bf16 %v1265, %v1261
        %v1366 = vpack.c.bf16 %v1275, %v1271
        %v1367 = vpack.c.bf16 %v1285, %v1281
        %v1368 = vpack.c.bf16 %v1295, %v1291
        %v1369 = vpack.c.bf16 %v1305, %v1301
        %v1370 = vpack.c.bf16 %v1315, %v1311
        %v1371 = vpack.c.bf16 %v1325, %v1321
        %v1372 = vpack.c.bf16 %v1335, %v1331
        %v1373 = vpack.c.bf16 %v1345, %v1341
        %v1374 = vpack.c.bf16 %v1355, %v1351
        %v1375 = vpack.c.bf16 %v1207, %v1203
        %v1376 = vpack.c.bf16 %v1217, %v1213
        %v1377 = vpack.c.bf16 %v1227, %v1223
        %v1378 = vpack.c.bf16 %v1237, %v1233
        %v1379 = vpack.c.bf16 %v1247, %v1243
        %v1380 = vpack.c.bf16 %v1257, %v1253
        %v1381 = vpack.c.bf16 %v1267, %v1263
        %v1382 = vpack.c.bf16 %v1277, %v1273
        %v1383 = vpack.c.bf16 %v1287, %v1283
        %v1384 = vpack.c.bf16 %v1297, %v1293
        %v1385 = vpack.c.bf16 %v1307, %v1303
        %v1386 = vpack.c.bf16 %v1317, %v1313
        %v1387 = vpack.c.bf16 %v1327, %v1323
        %v1388 = vpack.c.bf16 %v1337, %v1333
        %v1389 = vpack.c.bf16 %v1347, %v1343
        %v1390 = vpack.c.bf16 %v1357, %v1353
        %v1391 = vld [vmem:[%s339] sm:$0xff]
        %v1392 = vld [vmem:[%s339 + $0x8] sm:$0xff]
        %1393 = vadd.xlane.f32.xlu0 %v1391
        %v1394 = vpop.xlane.xlu0 %1393
        %1395 = vadd.xlane.f32.xlu0 %v1392
        %v1396 = vpop.xlane.xlu0 %1395
        %v1397 = vmul.f32 %v1394, %v789
        %v1398 = vmul.f32 %v1396, %v789
        %v1399 = vsub.f32 %v1391, %v1397
        %v1400 = vsub.f32 %v1392, %v1398
        %v1401 = vmul.f32 %v1399, %v1399
        %v1402 = vmul.f32 %v1400, %v1400
        %1403 = vadd.xlane.f32.xlu0 %v1401
        %v1404 = vpop.xlane.xlu0 %1403
        %1405 = vadd.xlane.f32.xlu0 %v1402
        %v1406 = vpop.xlane.xlu0 %1405
        %v1407 = vmul.f32 %v1404, %v789
        %v1408 = vmul.f32 %v1406, %v789
        %v1409 = vadd.f32 %v1407, 1e-05
        %v1410 = vadd.f32 %v1408, 1e-05
        %v1411 = vrsqrt.pop %v1409
        %v1412 = vrsqrt.pop %v1410
        %v1413 = vmul.f32 %v1399, %v1411
        %v1414 = vmul.f32 %v1400, %v1412
        %v1415 = vmul.f32 %v1413, %v403
        %v1416 = vmul.f32 %v1414, %v403
        %v1417 = vadd.f32 %v1415, %v408
        %v1418 = vadd.f32 %v1416, %v408
        %v1419 = vpack.c.bf16 %v1418, %v1417
        %1420 = vmatprep.subr.bf16.mxu0 0
        %1421 = vmatpush1.bf16.msra.mxu0 %v605
        %1422 = vmatprep.subr.bf16.mxu0 0
        %1423 = vmatpush1.bf16.msra.mxu0 %v613
        %1424 = vmatprep.subr.bf16.mxu0 0
        %1425 = vmatpush1.bf16.msra.mxu0 %v621
        %1426 = vmatprep.subr.bf16.mxu0 0
        %1427 = vmatpush1.bf16.msra.mxu0 %v629
        %1428 = vmatprep.subr.bf16.mxu0 0
        %1429 = vmatpush1.bf16.msra.mxu0 %v637
        %1430 = vmatprep.subr.bf16.mxu0 0
        %1431 = vmatpush1.bf16.msra.mxu0 %v645
        %1432 = vmatprep.subr.bf16.mxu0 0
        %1433 = vmatpush1.bf16.msra.mxu0 %v653
        %1434 = vmatprep.subr.bf16.mxu0 0
        %1435 = vmatpush1.bf16.msra.mxu0 %v661
        %1436 = vmatprep.subr.bf16.mxu0 0
        %1437 = vmatpush1.bf16.msra.mxu0 0
        %1438 = vmatprep.subr.bf16.mxu0 0
        %1439 = vmatpush1.bf16.msra.mxu0 0
        %1440 = vmatprep.subr.bf16.mxu0 0
        %1441 = vmatpush1.bf16.msra.mxu0 0
        %1442 = vmatprep.subr.bf16.mxu0 0
        %1443 = vmatpush1.bf16.msra.mxu0 0
        %1444 = vmatprep.subr.bf16.mxu0 0
        %1445 = vmatpush1.bf16.msra.mxu0 0
        %1446 = vmatprep.subr.bf16.mxu0 0
        %1447 = vmatpush1.bf16.msra.mxu0 0
        %1448 = vmatprep.subr.bf16.mxu0 0
        %1449 = vmatpush1.bf16.msra.mxu0 0
        %1450 = vmatprep.subr.bf16.mxu0 0
        %1451 = vmatpush1.bf16.msra.mxu0 0
        %1452 = vmatprep.mubr.bf16.mxu0 0
        %1453 = vmatmul.mubr.bf16.gmra.mrb[0].mxu0 %v1419
        %v1454 = vpop.f32.mrb[0].mxu0
        %v1455 = vadd.f32 0.0, %v1454
        %v1456 = vpop.f32.mrb[0].mxu0
        %v1457 = vpop.f32.mrb[0].mxu0
        %v1458 = vadd.f32 0.0, %v1457
        %v1459 = vpop.f32.mrb[0].mxu0
        %1460 = vdwg.mxu0
        %v1461 = vpack.c.bf16 %v1455, %v1455
        %v1462 = vpack.c.bf16 %v1458, %v1458
        %1463 = vmatprep.subr.bf16.mxu0 0
        %1464 = vmatpush1.bf16.xpose.msra.mxu0 %v1359
        %1465 = vmatprep.subr.bf16.mxu0 0
        %1466 = vmatpush1.bf16.xpose.msra.mxu0 %v1360
        %1467 = vmatprep.subr.bf16.mxu0 0
        %1468 = vmatpush1.bf16.xpose.msra.mxu0 %v1361
        %1469 = vmatprep.subr.bf16.mxu0 0
        %1470 = vmatpush1.bf16.xpose.msra.mxu0 %v1362
        %1471 = vmatprep.subr.bf16.mxu0 0
        %1472 = vmatpush1.bf16.xpose.msra.mxu0 %v1363
        %1473 = vmatprep.subr.bf16.mxu0 0
        %1474 = vmatpush1.bf16.xpose.msra.mxu0 %v1364
        %1475 = vmatprep.subr.bf16.mxu0 0
        %1476 = vmatpush1.bf16.xpose.msra.mxu0 %v1365
        %1477 = vmatprep.subr.bf16.mxu0 0
        %1478 = vmatpush1.bf16.xpose.msra.mxu0 %v1366
        %1479 = vmatprep.subr.bf16.mxu0 0
        %1480 = vmatpush1.bf16.xpose.msra.mxu0 0
        %1481 = vmatprep.subr.bf16.mxu0 0
        %1482 = vmatpush1.bf16.xpose.msra.mxu0 0
        %1483 = vmatprep.subr.bf16.mxu0 0
        %1484 = vmatpush1.bf16.xpose.msra.mxu0 0
        %1485 = vmatprep.subr.bf16.mxu0 0
        %1486 = vmatpush1.bf16.xpose.msra.mxu0 0
        %1487 = vmatprep.subr.bf16.mxu0 0
        %1488 = vmatpush1.bf16.xpose.msra.mxu0 0
        %1489 = vmatprep.subr.bf16.mxu0 0
        %1490 = vmatpush1.bf16.xpose.msra.mxu0 0
        %1491 = vmatprep.subr.bf16.mxu0 0
        %1492 = vmatpush1.bf16.xpose.msra.mxu0 0
        %1493 = vmatprep.subr.bf16.mxu0 0
        %1494 = vmatpush1.bf16.xpose.msra.mxu0 0
        %1495 = vmatprep.mubr.bf16.mxu0 0
        %1496 = vmatmul.mubr.bf16.gmra.mrb[0].mxu0 %v1461
        %v1497 = vpop.f32.mrb[0].mxu0
        %v1498 = vadd.f32 0.0, %v1497
        %v1499 = vpop.f32.mrb[0].mxu0
        %v1500 = vpop.f32.mrb[0].mxu0
        %v1501 = vpop.f32.mrb[0].mxu0
        %1502 = vdwg.mxu0
        %1503 = vmatprep.subr.bf16.mxu0 0
        %1504 = vmatpush1.bf16.xpose.msra.mxu0 %v1367
        %1505 = vmatprep.subr.bf16.mxu0 0
        %1506 = vmatpush1.bf16.xpose.msra.mxu0 %v1368
        %1507 = vmatprep.subr.bf16.mxu0 0
        %1508 = vmatpush1.bf16.xpose.msra.mxu0 %v1369
        %1509 = vmatprep.subr.bf16.mxu0 0
        %1510 = vmatpush1.bf16.xpose.msra.mxu0 %v1370
        %1511 = vmatprep.subr.bf16.mxu0 0
        %1512 = vmatpush1.bf16.xpose.msra.mxu0 %v1371
        %1513 = vmatprep.subr.bf16.mxu0 0
        %1514 = vmatpush1.bf16.xpose.msra.mxu0 %v1372
        %1515 = vmatprep.subr.bf16.mxu0 0
        %1516 = vmatpush1.bf16.xpose.msra.mxu0 %v1373
        %1517 = vmatprep.subr.bf16.mxu0 0
        %1518 = vmatpush1.bf16.xpose.msra.mxu0 %v1374
        %1519 = vmatprep.subr.bf16.mxu0 0
        %1520 = vmatpush1.bf16.xpose.msra.mxu0 0
        %1521 = vmatprep.subr.bf16.mxu0 0
        %1522 = vmatpush1.bf16.xpose.msra.mxu0 0
        %1523 = vmatprep.subr.bf16.mxu0 0
        %1524 = vmatpush1.bf16.xpose.msra.mxu0 0
        %1525 = vmatprep.subr.bf16.mxu0 0
        %1526 = vmatpush1.bf16.xpose.msra.mxu0 0
        %1527 = vmatprep.subr.bf16.mxu0 0
        %1528 = vmatpush1.bf16.xpose.msra.mxu0 0
        %1529 = vmatprep.subr.bf16.mxu0 0
        %1530 = vmatpush1.bf16.xpose.msra.mxu0 0
        %1531 = vmatprep.subr.bf16.mxu0 0
        %1532 = vmatpush1.bf16.xpose.msra.mxu0 0
        %1533 = vmatprep.subr.bf16.mxu0 0
        %1534 = vmatpush1.bf16.xpose.msra.mxu0 0
        %1535 = vmatprep.mubr.bf16.mxu0 0
        %1536 = vmatmul.mubr.bf16.gmra.mrb[0].mxu0 %v1462
        %v1537 = vpop.f32.mrb[0].mxu0
        %v1538 = vadd.f32 0.0, %v1537
        %v1539 = vpop.f32.mrb[0].mxu0
        %v1540 = vpop.f32.mrb[0].mxu0
        %v1541 = vpop.f32.mrb[0].mxu0
        %1542 = vdwg.mxu0
        %v1543 = vrot.slane %v1498, 4
        %v1544 = vmax.f32 %v1498, %v1543
        %v1545 = vrot.slane %v1544, 2
        %v1546 = vmax.f32 %v1544, %v1545
        %v1547 = vrot.slane %v1546, 1
        %v1548 = vmax.f32 %v1546, %v1547
        %v1549 = vrot.slane %v1538, 4
        %v1550 = vmax.f32 %v1538, %v1549
        %v1551 = vrot.slane %v1550, 2
        %v1552 = vmax.f32 %v1550, %v1551
        %v1553 = vrot.slane %v1552, 1
        %v1554 = vmax.f32 %v1552, %v1553
        %v1555 = vsub.f32 %v1498, %v1548
        %v1556 = vsub.f32 %v1538, %v1554
        %v1557 = vmul.f32 %v1555, 1.442695
        %v1558 = vpow.pop %v1557
        %v1559 = vmul.f32 %v1556, 1.442695
        %v1560 = vpow.pop %v1559
        %v1561 = vrot.slane %v1558, 4
        %v1562 = vadd.f32 %v1558, %v1561
        %v1563 = vrot.slane %v1562, 2
        %v1564 = vadd.f32 %v1562, %v1563
        %v1565 = vrot.slane %v1564, 1
        %v1566 = vadd.f32 %v1564, %v1565
        %v1567 = vrot.slane %v1560, 4
        %v1568 = vadd.f32 %v1560, %v1567
        %v1569 = vrot.slane %v1568, 2
        %v1570 = vadd.f32 %v1568, %v1569
        %v1571 = vrot.slane %v1570, 1
        %v1572 = vadd.f32 %v1570, %v1571
        %v1573 = vrcp.pop %v1566
        %v1574 = vrcp.pop %v1572
        %v1575 = vmul.f32 %v1558, %v1573
        %v1576 = vmul.f32 %v1560, %v1574
        %1577 = vadd.xlane.f32.xlu0 %v1575
        %v1578 = vpop.xlane.xlu0 %1577
        %1579 = vadd.xlane.f32.xlu0 %v1576
        %v1580 = vpop.xlane.xlu0 %1579
        %v1581 = vadd.f32 %v1578, 1e-06
        %v1582 = vadd.f32 %v1580, 1e-06
        %v1583 = vrcp.pop %v1581
        %v1584 = vrcp.pop %v1582
        %v1585 = vmul.f32 %v1575, %v1583
        %v1586 = vmul.f32 %v1576, %v1584
        %v1587 = vpack.c.bf16 %v1585, %v1585
        %v1588 = vpack.c.bf16 %v1586, %v1586
        %1589 = vmatprep.subr.bf16.mxu0 0
        %1590 = vmatpush1.bf16.msra.mxu0 %v1375
        %1591 = vmatprep.subr.bf16.mxu0 0
        %1592 = vmatpush1.bf16.msra.mxu0 %v1376
        %1593 = vmatprep.subr.bf16.mxu0 0
        %1594 = vmatpush1.bf16.msra.mxu0 %v1377
        %1595 = vmatprep.subr.bf16.mxu0 0
        %1596 = vmatpush1.bf16.msra.mxu0 %v1378
        %1597 = vmatprep.subr.bf16.mxu0 0
        %1598 = vmatpush1.bf16.msra.mxu0 %v1379
        %1599 = vmatprep.subr.bf16.mxu0 0
        %1600 = vmatpush1.bf16.msra.mxu0 %v1380
        %1601 = vmatprep.subr.bf16.mxu0 0
        %1602 = vmatpush1.bf16.msra.mxu0 %v1381
        %1603 = vmatprep.subr.bf16.mxu0 0
        %1604 = vmatpush1.bf16.msra.mxu0 %v1382
        %1605 = vmatprep.subr.bf16.mxu0 0
        %1606 = vmatpush1.bf16.msra.mxu0 0
        %1607 = vmatprep.subr.bf16.mxu0 0
        %1608 = vmatpush1.bf16.msra.mxu0 0
        %1609 = vmatprep.subr.bf16.mxu0 0
        %1610 = vmatpush1.bf16.msra.mxu0 0
        %1611 = vmatprep.subr.bf16.mxu0 0
        %1612 = vmatpush1.bf16.msra.mxu0 0
        %1613 = vmatprep.subr.bf16.mxu0 0
        %1614 = vmatpush1.bf16.msra.mxu0 0
        %1615 = vmatprep.subr.bf16.mxu0 0
        %1616 = vmatpush1.bf16.msra.mxu0 0
        %1617 = vmatprep.subr.bf16.mxu0 0
        %1618 = vmatpush1.bf16.msra.mxu0 0
        %1619 = vmatprep.subr.bf16.mxu0 0
        %1620 = vmatpush1.bf16.msra.mxu0 0
        %1621 = vmatprep.mubr.bf16.mxu0 0
        %1622 = vmatmul.mubr.bf16.gmra.mrb[0].mxu0 %v1587
        %v1623 = vpop.f32.mrb[0].mxu0
        %v1624 = vadd.f32 0.0, %v1623
        %v1625 = vpop.f32.mrb[0].mxu0
        %v1626 = vpop.f32.mrb[0].mxu0
        %v1627 = vpop.f32.mrb[0].mxu0
        %1628 = vdwg.mxu0
        %1629 = vmatprep.subr.bf16.mxu0 0
        %1630 = vmatpush1.bf16.msra.mxu0 %v1383
        %1631 = vmatprep.subr.bf16.mxu0 0
        %1632 = vmatpush1.bf16.msra.mxu0 %v1384
        %1633 = vmatprep.subr.bf16.mxu0 0
        %1634 = vmatpush1.bf16.msra.mxu0 %v1385
        %1635 = vmatprep.subr.bf16.mxu0 0
        %1636 = vmatpush1.bf16.msra.mxu0 %v1386
        %1637 = vmatprep.subr.bf16.mxu0 0
        %1638 = vmatpush1.bf16.msra.mxu0 %v1387
        %1639 = vmatprep.subr.bf16.mxu0 0
        %1640 = vmatpush1.bf16.msra.mxu0 %v1388
        %1641 = vmatprep.subr.bf16.mxu0 0
        %1642 = vmatpush1.bf16.msra.mxu0 %v1389
        %1643 = vmatprep.subr.bf16.mxu0 0
        %1644 = vmatpush1.bf16.msra.mxu0 %v1390
        %1645 = vmatprep.subr.bf16.mxu0 0
        %1646 = vmatpush1.bf16.msra.mxu0 0
        %1647 = vmatprep.subr.bf16.mxu0 0
        %1648 = vmatpush1.bf16.msra.mxu0 0
        %1649 = vmatprep.subr.bf16.mxu0 0
        %1650 = vmatpush1.bf16.msra.mxu0 0
        %1651 = vmatprep.subr.bf16.mxu0 0
        %1652 = vmatpush1.bf16.msra.mxu0 0
        %1653 = vmatprep.subr.bf16.mxu0 0
        %1654 = vmatpush1.bf16.msra.mxu0 0
        %1655 = vmatprep.subr.bf16.mxu0 0
        %1656 = vmatpush1.bf16.msra.mxu0 0
        %1657 = vmatprep.subr.bf16.mxu0 0
        %1658 = vmatpush1.bf16.msra.mxu0 0
        %1659 = vmatprep.subr.bf16.mxu0 0
        %1660 = vmatpush1.bf16.msra.mxu0 0
        %1661 = vmatprep.mubr.bf16.mxu0 0
        %1662 = vmatmul.mubr.bf16.gmra.mrb[0].mxu0 %v1588
        %v1663 = vpop.f32.mrb[0].mxu0
        %v1664 = vadd.f32 0.0, %v1663
        %v1665 = vpop.f32.mrb[0].mxu0
        %v1666 = vpop.f32.mrb[0].mxu0
        %v1667 = vpop.f32.mrb[0].mxu0
        %1668 = vdwg.mxu0
        %v1669 = vpack.c.bf16 %v1664, %v1624
        %1670 = vmatprep.subr.bf16.mxu0 %v607
        %1671 = vmatpush1.bf16.msra.mxu0 %v606
        %1672 = vmatprep.subr.bf16.mxu0 %v615
        %1673 = vmatpush1.bf16.msra.mxu0 %v614
        %1674 = vmatprep.subr.bf16.mxu0 %v623
        %1675 = vmatpush1.bf16.msra.mxu0 %v622
        %1676 = vmatprep.subr.bf16.mxu0 %v631
        %1677 = vmatpush1.bf16.msra.mxu0 %v630
        %1678 = vmatprep.subr.bf16.mxu0 %v639
        %1679 = vmatpush1.bf16.msra.mxu0 %v638
        %1680 = vmatprep.subr.bf16.mxu0 %v647
        %1681 = vmatpush1.bf16.msra.mxu0 %v646
        %1682 = vmatprep.subr.bf16.mxu0 %v655
        %1683 = vmatpush1.bf16.msra.mxu0 %v654
        %1684 = vmatprep.subr.bf16.mxu0 %v663
        %1685 = vmatpush1.bf16.msra.mxu0 %v662
        %1686 = vmatprep.subr.bf16.mxu0 0
        %1687 = vmatpush1.bf16.msra.mxu0 0
        %1688 = vmatprep.subr.bf16.mxu0 0
        %1689 = vmatpush1.bf16.msra.mxu0 0
        %1690 = vmatprep.subr.bf16.mxu0 0
        %1691 = vmatpush1.bf16.msra.mxu0 0
        %1692 = vmatprep.subr.bf16.mxu0 0
        %1693 = vmatpush1.bf16.msra.mxu0 0
        %1694 = vmatprep.subr.bf16.mxu0 0
        %1695 = vmatpush1.bf16.msra.mxu0 0
        %1696 = vmatprep.subr.bf16.mxu0 0
        %1697 = vmatpush1.bf16.msra.mxu0 0
        %1698 = vmatprep.subr.bf16.mxu0 0
        %1699 = vmatpush1.bf16.msra.mxu0 0
        %1700 = vmatprep.subr.bf16.mxu0 0
        %1701 = vmatpush1.bf16.msra.mxu0 0
        %1702 = vmatprep.mubr.bf16.mxu0 0
        %1703 = vmatmul.mubr.bf16.gmra.mrb[0].mxu0 %v1669
        %v1704 = vpop.f32.mrb[0].mxu0
        %v1705 = vadd.f32 0.0, %v1704
        %v1706 = vpop.f32.mrb[0].mxu0
        %v1707 = vadd.f32 0.0, %v1706
        %v1708 = vpop.f32.mrb[0].mxu0
        %v1709 = vadd.f32 0.0, %v1708
        %v1710 = vpop.f32.mrb[0].mxu0
        %v1711 = vadd.f32 0.0, %v1710
        %1712 = vdwg.mxu0
        %1713 = vmatprep.subr.bf16.mxu0 0
        %1714 = vmatpush1.bf16.msra.mxu0 %v608
        %1715 = vmatprep.subr.bf16.mxu0 0
        %1716 = vmatpush1.bf16.msra.mxu0 %v616
        %1717 = vmatprep.subr.bf16.mxu0 0
        %1718 = vmatpush1.bf16.msra.mxu0 %v624
        %1719 = vmatprep.subr.bf16.mxu0 0
        %1720 = vmatpush1.bf16.msra.mxu0 %v632
        %1721 = vmatprep.subr.bf16.mxu0 0
        %1722 = vmatpush1.bf16.msra.mxu0 %v640
        %1723 = vmatprep.subr.bf16.mxu0 0
        %1724 = vmatpush1.bf16.msra.mxu0 %v648
        %1725 = vmatprep.subr.bf16.mxu0 0
        %1726 = vmatpush1.bf16.msra.mxu0 %v656
        %1727 = vmatprep.subr.bf16.mxu0 0
        %1728 = vmatpush1.bf16.msra.mxu0 %v664
        %1729 = vmatprep.subr.bf16.mxu0 0
        %1730 = vmatpush1.bf16.msra.mxu0 0
        %1731 = vmatprep.subr.bf16.mxu0 0
        %1732 = vmatpush1.bf16.msra.mxu0 0
        %1733 = vmatprep.subr.bf16.mxu0 0
        %1734 = vmatpush1.bf16.msra.mxu0 0
        %1735 = vmatprep.subr.bf16.mxu0 0
        %1736 = vmatpush1.bf16.msra.mxu0 0
        %1737 = vmatprep.subr.bf16.mxu0 0
        %1738 = vmatpush1.bf16.msra.mxu0 0
        %1739 = vmatprep.subr.bf16.mxu0 0
        %1740 = vmatpush1.bf16.msra.mxu0 0
        %1741 = vmatprep.subr.bf16.mxu0 0
        %1742 = vmatpush1.bf16.msra.mxu0 0
        %1743 = vmatprep.subr.bf16.mxu0 0
        %1744 = vmatpush1.bf16.msra.mxu0 0
        %1745 = vmatprep.mubr.bf16.mxu0 0
        %1746 = vmatmul.mubr.bf16.gmra.mrb[0].mxu0 %v1669
        %v1747 = vpop.f32.mrb[0].mxu0
        %v1748 = vadd.f32 0.0, %v1747
        %v1749 = vpop.f32.mrb[0].mxu0
        %v1750 = vpop.f32.mrb[0].mxu0
        %v1751 = vadd.f32 0.0, %v1750
        %v1752 = vpop.f32.mrb[0].mxu0
        %1753 = vdwg.mxu0
        %v1754 = vpack.c.bf16 %v1392, %v1391
        %1755 = vmatprep.subr.bf16.mxu0 %v610
        %1756 = vmatpush1.bf16.msra.mxu0 %v609
        %1757 = vmatprep.subr.bf16.mxu0 %v618
        %1758 = vmatpush1.bf16.msra.mxu0 %v617
        %1759 = vmatprep.subr.bf16.mxu0 %v626
        %1760 = vmatpush1.bf16.msra.mxu0 %v625
        %1761 = vmatprep.subr.bf16.mxu0 %v634
        %1762 = vmatpush1.bf16.msra.mxu0 %v633
        %1763 = vmatprep.subr.bf16.mxu0 %v642
        %1764 = vmatpush1.bf16.msra.mxu0 %v641
        %1765 = vmatprep.subr.bf16.mxu0 %v650
        %1766 = vmatpush1.bf16.msra.mxu0 %v649
        %1767 = vmatprep.subr.bf16.mxu0 %v658
        %1768 = vmatpush1.bf16.msra.mxu0 %v657
        %1769 = vmatprep.subr.bf16.mxu0 %v666
        %1770 = vmatpush1.bf16.msra.mxu0 %v665
        %1771 = vmatprep.subr.bf16.mxu0 0
        %1772 = vmatpush1.bf16.msra.mxu0 0
        %1773 = vmatprep.subr.bf16.mxu0 0
        %1774 = vmatpush1.bf16.msra.mxu0 0
        %1775 = vmatprep.subr.bf16.mxu0 0
        %1776 = vmatpush1.bf16.msra.mxu0 0
        %1777 = vmatprep.subr.bf16.mxu0 0
        %1778 = vmatpush1.bf16.msra.mxu0 0
        %1779 = vmatprep.subr.bf16.mxu0 0
        %1780 = vmatpush1.bf16.msra.mxu0 0
        %1781 = vmatprep.subr.bf16.mxu0 0
        %1782 = vmatpush1.bf16.msra.mxu0 0
        %1783 = vmatprep.subr.bf16.mxu0 0
        %1784 = vmatpush1.bf16.msra.mxu0 0
        %1785 = vmatprep.subr.bf16.mxu0 0
        %1786 = vmatpush1.bf16.msra.mxu0 0
        %1787 = vmatprep.mubr.bf16.mxu0 0
        %1788 = vmatmul.mubr.bf16.gmra.mrb[0].mxu0 %v1754
        %v1789 = vpop.f32.mrb[0].mxu0
        %v1790 = vadd.f32 0.0, %v1789
        %v1791 = vpop.f32.mrb[0].mxu0
        %v1792 = vadd.f32 0.0, %v1791
        %v1793 = vpop.f32.mrb[0].mxu0
        %v1794 = vadd.f32 0.0, %v1793
        %v1795 = vpop.f32.mrb[0].mxu0
        %v1796 = vadd.f32 0.0, %v1795
        %1797 = vdwg.mxu0
        %1798 = vmatprep.subr.bf16.mxu0 0
        %1799 = vmatpush1.bf16.msra.mxu0 %v611
        %1800 = vmatprep.subr.bf16.mxu0 0
        %1801 = vmatpush1.bf16.msra.mxu0 %v619
        %1802 = vmatprep.subr.bf16.mxu0 0
        %1803 = vmatpush1.bf16.msra.mxu0 %v627
        %1804 = vmatprep.subr.bf16.mxu0 0
        %1805 = vmatpush1.bf16.msra.mxu0 %v635
        %1806 = vmatprep.subr.bf16.mxu0 0
        %1807 = vmatpush1.bf16.msra.mxu0 %v643
        %1808 = vmatprep.subr.bf16.mxu0 0
        %1809 = vmatpush1.bf16.msra.mxu0 %v651
        %1810 = vmatprep.subr.bf16.mxu0 0
        %1811 = vmatpush1.bf16.msra.mxu0 %v659
        %1812 = vmatprep.subr.bf16.mxu0 0
        %1813 = vmatpush1.bf16.msra.mxu0 %v667
        %1814 = vmatprep.subr.bf16.mxu0 0
        %1815 = vmatpush1.bf16.msra.mxu0 0
        %1816 = vmatprep.subr.bf16.mxu0 0
        %1817 = vmatpush1.bf16.msra.mxu0 0
        %1818 = vmatprep.subr.bf16.mxu0 0
        %1819 = vmatpush1.bf16.msra.mxu0 0
        %1820 = vmatprep.subr.bf16.mxu0 0
        %1821 = vmatpush1.bf16.msra.mxu0 0
        %1822 = vmatprep.subr.bf16.mxu0 0
        %1823 = vmatpush1.bf16.msra.mxu0 0
        %1824 = vmatprep.subr.bf16.mxu0 0
        %1825 = vmatpush1.bf16.msra.mxu0 0
        %1826 = vmatprep.subr.bf16.mxu0 0
        %1827 = vmatpush1.bf16.msra.mxu0 0
        %1828 = vmatprep.subr.bf16.mxu0 0
        %1829 = vmatpush1.bf16.msra.mxu0 0
        %1830 = vmatprep.mubr.bf16.mxu0 0
        %1831 = vmatmul.mubr.bf16.gmra.mrb[0].mxu0 %v1754
        %v1832 = vpop.f32.mrb[0].mxu0
        %v1833 = vadd.f32 0.0, %v1832
        %v1834 = vpop.f32.mrb[0].mxu0
        %v1835 = vpop.f32.mrb[0].mxu0
        %v1836 = vadd.f32 0.0, %v1835
        %v1837 = vpop.f32.mrb[0].mxu0
        %1838 = vdwg.mxu0
        %v1839 = vadd.f32 %v1705, %v1790
        %v1840 = vadd.f32 %v1709, %v1794
        %v1841 = vxor.u32 %v1839, 2147483648
        %v1842 = vxor.u32 %v1840, 2147483648
        %v1843 = vmul.f32 %v1841, 1.442695
        %v1844 = vpow.pop %v1843
        %v1845 = vmul.f32 %v1842, 1.442695
        %v1846 = vpow.pop %v1845
        %v1847 = vadd.f32 %v1844, 1.0
        %v1848 = vadd.f32 %v1846, 1.0
        %v1849 = vrcp.pop %v1847
        %v1850 = vmul.f32 1.0, %v1849
        %v1851 = vrcp.pop %v1848
        %v1852 = vmul.f32 1.0, %v1851
        %v1853 = vadd.f32 %v1707, %v1792
        %v1854 = vadd.f32 %v1711, %v1796
        %v1855 = vxor.u32 %v1853, 2147483648
        %v1856 = vxor.u32 %v1854, 2147483648
        %v1857 = vmul.f32 %v1855, 1.442695
        %v1858 = vpow.pop %v1857
        %v1859 = vmul.f32 %v1856, 1.442695
        %v1860 = vpow.pop %v1859
        %v1861 = vadd.f32 %v1858, 1.0
        %v1862 = vadd.f32 %v1860, 1.0
        %v1863 = vrcp.pop %v1861
        %v1864 = vmul.f32 1.0, %v1863
        %v1865 = vrcp.pop %v1862
        %v1866 = vmul.f32 1.0, %v1865
        %v1867 = vmul.f32 %v1850, %v1833
        %v1868 = vmul.f32 %v1852, %v1836
        %v1869 = vadd.f32 %v1748, %v1867
        %v1870 = vadd.f32 %v1751, %v1868
        %v1871 = vtanh.pop %v1869
        %v1872 = vtanh.pop %v1870
        %v1873 = vsub.f32 1.0, %v1864
        %v1874 = vsub.f32 1.0, %v1866
        %v1875 = vmul.f32 %v1873, %v1871
        %v1876 = vmul.f32 %v1874, %v1872
        %v1877 = vmul.f32 %v1864, %v1391
        %v1878 = vmul.f32 %v1866, %v1392
        %v1879 = vadd.f32 %v1875, %v1877
        %v1880 = vadd.f32 %v1876, %v1878
        %1881 = vadd.xlane.f32.xlu0 %v1879
        %v1882 = vpop.xlane.xlu0 %1881
        %1883 = vadd.xlane.f32.xlu0 %v1880
        %v1884 = vpop.xlane.xlu0 %1883
        %v1885 = vmul.f32 %v1882, %v789
        %v1886 = vmul.f32 %v1884, %v789
        %v1887 = vsub.f32 %v1879, %v1885
        %v1888 = vsub.f32 %v1880, %v1886
        %v1889 = vmul.f32 %v1887, %v1887
        %v1890 = vmul.f32 %v1888, %v1888
        %1891 = vadd.xlane.f32.xlu0 %v1889
        %v1892 = vpop.xlane.xlu0 %1891
        %1893 = vadd.xlane.f32.xlu0 %v1890
        %v1894 = vpop.xlane.xlu0 %1893
        %v1895 = vmul.f32 %v1892, %v789
        %v1896 = vmul.f32 %v1894, %v789
        %v1897 = vadd.f32 %v1895, 1e-05
        %v1898 = vadd.f32 %v1896, 1e-05
        %v1899 = vrsqrt.pop %v1897
        %v1900 = vrsqrt.pop %v1898
        %v1901 = vmul.f32 %v1887, %v1899
        %v1902 = vmul.f32 %v1888, %v1900
        %v1903 = vmul.f32 %v1901, %v413
        %v1904 = vmul.f32 %v1902, %v413
        %v1905 = vadd.f32 %v1903, %v418
        %v1906 = vadd.f32 %v1904, %v418
        %v1907 = vpack.c.bf16 %v1906, %v1905
        %1908 = vmatprep.subr.bf16.mxu0 0
        %1909 = vmatpush1.bf16.msra.mxu0 %v612
        %1910 = vmatprep.subr.bf16.mxu0 0
        %1911 = vmatpush1.bf16.msra.mxu0 %v620
        %1912 = vmatprep.subr.bf16.mxu0 0
        %1913 = vmatpush1.bf16.msra.mxu0 %v628
        %1914 = vmatprep.subr.bf16.mxu0 0
        %1915 = vmatpush1.bf16.msra.mxu0 %v636
        %1916 = vmatprep.subr.bf16.mxu0 0
        %1917 = vmatpush1.bf16.msra.mxu0 %v644
        %1918 = vmatprep.subr.bf16.mxu0 0
        %1919 = vmatpush1.bf16.msra.mxu0 %v652
        %1920 = vmatprep.subr.bf16.mxu0 0
        %1921 = vmatpush1.bf16.msra.mxu0 %v660
        %1922 = vmatprep.subr.bf16.mxu0 0
        %1923 = vmatpush1.bf16.msra.mxu0 %v668
        %1924 = vmatprep.subr.bf16.mxu0 0
        %1925 = vmatpush1.bf16.msra.mxu0 0
        %1926 = vmatprep.subr.bf16.mxu0 0
        %1927 = vmatpush1.bf16.msra.mxu0 0
        %1928 = vmatprep.subr.bf16.mxu0 0
        %1929 = vmatpush1.bf16.msra.mxu0 0
        %1930 = vmatprep.subr.bf16.mxu0 0
        %1931 = vmatpush1.bf16.msra.mxu0 0
        %1932 = vmatprep.subr.bf16.mxu0 0
        %1933 = vmatpush1.bf16.msra.mxu0 0
        %1934 = vmatprep.subr.bf16.mxu0 0
        %1935 = vmatpush1.bf16.msra.mxu0 0
        %1936 = vmatprep.subr.bf16.mxu0 0
        %1937 = vmatpush1.bf16.msra.mxu0 0
        %1938 = vmatprep.subr.bf16.mxu0 0
        %1939 = vmatpush1.bf16.msra.mxu0 0
        %1940 = vmatprep.mubr.bf16.mxu0 0
        %1941 = vmatmul.mubr.bf16.gmra.mrb[0].mxu0 %v1907
        %v1942 = vpop.f32.mrb[0].mxu0
        %v1943 = vadd.f32 %v423, %v1942
        %v1944 = vpop.f32.mrb[0].mxu0
        %v1945 = vpop.f32.mrb[0].mxu0
        %v1946 = vadd.f32 %v423, %v1945
        %v1947 = vpop.f32.mrb[0].mxu0
        %1948 = vdwg.mxu0
        %v1949 = vmax.f32 %v1943, 0.0
        %v1950 = vmax.f32 %v1946, 0.0
        %v1951 = vpack.c.bf16 %v1950, %v1949
        %1952 = vmatprep.subr.bf16.mxu0 0
        %1953 = vmatpush1.bf16.msra.mxu0 %v685
        %1954 = vmatprep.subr.bf16.mxu0 0
        %1955 = vmatpush1.bf16.msra.mxu0 %v686
        %1956 = vmatprep.subr.bf16.mxu0 0
        %1957 = vmatpush1.bf16.msra.mxu0 %v687
        %1958 = vmatprep.subr.bf16.mxu0 0
        %1959 = vmatpush1.bf16.msra.mxu0 %v688
        %1960 = vmatprep.subr.bf16.mxu0 0
        %1961 = vmatpush1.bf16.msra.mxu0 %v689
        %1962 = vmatprep.subr.bf16.mxu0 0
        %1963 = vmatpush1.bf16.msra.mxu0 %v690
        %1964 = vmatprep.subr.bf16.mxu0 0
        %1965 = vmatpush1.bf16.msra.mxu0 %v691
        %1966 = vmatprep.subr.bf16.mxu0 0
        %1967 = vmatpush1.bf16.msra.mxu0 %v692
        %1968 = vmatprep.subr.bf16.mxu0 0
        %1969 = vmatpush1.bf16.msra.mxu0 0
        %1970 = vmatprep.subr.bf16.mxu0 0
        %1971 = vmatpush1.bf16.msra.mxu0 0
        %1972 = vmatprep.subr.bf16.mxu0 0
        %1973 = vmatpush1.bf16.msra.mxu0 0
        %1974 = vmatprep.subr.bf16.mxu0 0
        %1975 = vmatpush1.bf16.msra.mxu0 0
        %1976 = vmatprep.subr.bf16.mxu0 0
        %1977 = vmatpush1.bf16.msra.mxu0 0
        %1978 = vmatprep.subr.bf16.mxu0 0
        %1979 = vmatpush1.bf16.msra.mxu0 0
        %1980 = vmatprep.subr.bf16.mxu0 0
        %1981 = vmatpush1.bf16.msra.mxu0 0
        %1982 = vmatprep.subr.bf16.mxu0 0
        %1983 = vmatpush1.bf16.msra.mxu0 0
        %1984 = vmatprep.mubr.bf16.mxu0 0
        %1985 = vmatmul.mubr.bf16.gmra.mrb[0].mxu0 %v1951
        %v1986 = vpop.f32.mrb[0].mxu0
        %v1987 = vadd.f32 0.0, %v1986
        %v1988 = vpop.f32.mrb[0].mxu0
        %v1989 = vpop.f32.mrb[0].mxu0
        %v1990 = vadd.f32 0.0, %v1989
        %v1991 = vpop.f32.mrb[0].mxu0
        %1992 = vdwg.mxu0
        %v1993 = vadd.f32 %v1879, %v1987
        %v1994 = vadd.f32 %v1880, %v1990
        %v1995 = vadd.f32 %v1993, %v428
        %v1996 = vadd.f32 %v1994, %v428
        %1997 = vadd.xlane.f32.xlu0 %v1995
        %v1998 = vpop.xlane.xlu0 %1997
        %1999 = vadd.xlane.f32.xlu0 %v1996
        %v2000 = vpop.xlane.xlu0 %1999
        %v2001 = vmul.f32 %v1998, %v789
        %v2002 = vmul.f32 %v2000, %v789
        %v2003 = vsub.f32 %v1995, %v2001
        %v2004 = vsub.f32 %v1996, %v2002
        %v2005 = vmul.f32 %v2003, %v2003
        %v2006 = vmul.f32 %v2004, %v2004
        %2007 = vadd.xlane.f32.xlu0 %v2005
        %v2008 = vpop.xlane.xlu0 %2007
        %2009 = vadd.xlane.f32.xlu0 %v2006
        %v2010 = vpop.xlane.xlu0 %2009
        %v2011 = vmul.f32 %v2008, %v789
        %v2012 = vmul.f32 %v2010, %v789
        %v2013 = vadd.f32 %v2011, 1e-05
        %v2014 = vadd.f32 %v2012, 1e-05
        %v2015 = vrsqrt.pop %v2013
        %v2016 = vrsqrt.pop %v2014
        %v2017 = vmul.f32 %v2003, %v2015
        %v2018 = vmul.f32 %v2004, %v2016
        %v2019 = vmul.f32 %v2017, %v403
        %v2020 = vmul.f32 %v2018, %v403
        %v2021 = vadd.f32 %v2019, %v408
        %v2022 = vadd.f32 %v2020, %v408
        %v2023 = vpack.c.bf16 %v2022, %v2021
        %2024 = vmatprep.subr.bf16.mxu0 0
        %2025 = vmatpush1.bf16.msra.mxu0 %v605
        %2026 = vmatprep.subr.bf16.mxu0 0
        %2027 = vmatpush1.bf16.msra.mxu0 %v613
        %2028 = vmatprep.subr.bf16.mxu0 0
        %2029 = vmatpush1.bf16.msra.mxu0 %v621
        %2030 = vmatprep.subr.bf16.mxu0 0
        %2031 = vmatpush1.bf16.msra.mxu0 %v629
        %2032 = vmatprep.subr.bf16.mxu0 0
        %2033 = vmatpush1.bf16.msra.mxu0 %v637
        %2034 = vmatprep.subr.bf16.mxu0 0
        %2035 = vmatpush1.bf16.msra.mxu0 %v645
        %2036 = vmatprep.subr.bf16.mxu0 0
        %2037 = vmatpush1.bf16.msra.mxu0 %v653
        %2038 = vmatprep.subr.bf16.mxu0 0
        %2039 = vmatpush1.bf16.msra.mxu0 %v661
        %2040 = vmatprep.subr.bf16.mxu0 0
        %2041 = vmatpush1.bf16.msra.mxu0 0
        %2042 = vmatprep.subr.bf16.mxu0 0
        %2043 = vmatpush1.bf16.msra.mxu0 0
        %2044 = vmatprep.subr.bf16.mxu0 0
        %2045 = vmatpush1.bf16.msra.mxu0 0
        %2046 = vmatprep.subr.bf16.mxu0 0
        %2047 = vmatpush1.bf16.msra.mxu0 0
        %2048 = vmatprep.subr.bf16.mxu0 0
        %2049 = vmatpush1.bf16.msra.mxu0 0
        %2050 = vmatprep.subr.bf16.mxu0 0
        %2051 = vmatpush1.bf16.msra.mxu0 0
        %2052 = vmatprep.subr.bf16.mxu0 0
        %2053 = vmatpush1.bf16.msra.mxu0 0
        %2054 = vmatprep.subr.bf16.mxu0 0
        %2055 = vmatpush1.bf16.msra.mxu0 0
        %2056 = vmatprep.mubr.bf16.mxu0 0
        %2057 = vmatmul.mubr.bf16.gmra.mrb[0].mxu0 %v2023
        %v2058 = vpop.f32.mrb[0].mxu0
        %v2059 = vadd.f32 0.0, %v2058
        %v2060 = vpop.f32.mrb[0].mxu0
        %v2061 = vpop.f32.mrb[0].mxu0
        %v2062 = vadd.f32 0.0, %v2061
        %v2063 = vpop.f32.mrb[0].mxu0
        %2064 = vdwg.mxu0
        %v2065 = vpack.c.bf16 %v2059, %v2059
        %v2066 = vpack.c.bf16 %v2062, %v2062
        %2067 = vmatprep.subr.bf16.mxu0 0
        %2068 = vmatpush1.bf16.xpose.msra.mxu0 %v1359
        %2069 = vmatprep.subr.bf16.mxu0 0
        %2070 = vmatpush1.bf16.xpose.msra.mxu0 %v1360
        %2071 = vmatprep.subr.bf16.mxu0 0
        %2072 = vmatpush1.bf16.xpose.msra.mxu0 %v1361
        %2073 = vmatprep.subr.bf16.mxu0 0
        %2074 = vmatpush1.bf16.xpose.msra.mxu0 %v1362
        %2075 = vmatprep.subr.bf16.mxu0 0
        %2076 = vmatpush1.bf16.xpose.msra.mxu0 %v1363
        %2077 = vmatprep.subr.bf16.mxu0 0
        %2078 = vmatpush1.bf16.xpose.msra.mxu0 %v1364
        %2079 = vmatprep.subr.bf16.mxu0 0
        %2080 = vmatpush1.bf16.xpose.msra.mxu0 %v1365
        %2081 = vmatprep.subr.bf16.mxu0 0
        %2082 = vmatpush1.bf16.xpose.msra.mxu0 %v1366
        %2083 = vmatprep.subr.bf16.mxu0 0
        %2084 = vmatpush1.bf16.xpose.msra.mxu0 0
        %2085 = vmatprep.subr.bf16.mxu0 0
        %2086 = vmatpush1.bf16.xpose.msra.mxu0 0
        %2087 = vmatprep.subr.bf16.mxu0 0
        %2088 = vmatpush1.bf16.xpose.msra.mxu0 0
        %2089 = vmatprep.subr.bf16.mxu0 0
        %2090 = vmatpush1.bf16.xpose.msra.mxu0 0
        %2091 = vmatprep.subr.bf16.mxu0 0
        %2092 = vmatpush1.bf16.xpose.msra.mxu0 0
        %2093 = vmatprep.subr.bf16.mxu0 0
        %2094 = vmatpush1.bf16.xpose.msra.mxu0 0
        %2095 = vmatprep.subr.bf16.mxu0 0
        %2096 = vmatpush1.bf16.xpose.msra.mxu0 0
        %2097 = vmatprep.subr.bf16.mxu0 0
        %2098 = vmatpush1.bf16.xpose.msra.mxu0 0
        %2099 = vmatprep.mubr.bf16.mxu0 0
        %2100 = vmatmul.mubr.bf16.gmra.mrb[0].mxu0 %v2065
        %v2101 = vpop.f32.mrb[0].mxu0
        %v2102 = vadd.f32 0.0, %v2101
        %v2103 = vpop.f32.mrb[0].mxu0
        %v2104 = vpop.f32.mrb[0].mxu0
        %v2105 = vpop.f32.mrb[0].mxu0
        %2106 = vdwg.mxu0
        %2107 = vmatprep.subr.bf16.mxu0 0
        %2108 = vmatpush1.bf16.xpose.msra.mxu0 %v1367
        %2109 = vmatprep.subr.bf16.mxu0 0
        %2110 = vmatpush1.bf16.xpose.msra.mxu0 %v1368
        %2111 = vmatprep.subr.bf16.mxu0 0
        %2112 = vmatpush1.bf16.xpose.msra.mxu0 %v1369
        %2113 = vmatprep.subr.bf16.mxu0 0
        %2114 = vmatpush1.bf16.xpose.msra.mxu0 %v1370
        %2115 = vmatprep.subr.bf16.mxu0 0
        %2116 = vmatpush1.bf16.xpose.msra.mxu0 %v1371
        %2117 = vmatprep.subr.bf16.mxu0 0
        %2118 = vmatpush1.bf16.xpose.msra.mxu0 %v1372
        %2119 = vmatprep.subr.bf16.mxu0 0
        %2120 = vmatpush1.bf16.xpose.msra.mxu0 %v1373
        %2121 = vmatprep.subr.bf16.mxu0 0
        %2122 = vmatpush1.bf16.xpose.msra.mxu0 %v1374
        %2123 = vmatprep.subr.bf16.mxu0 0
        %2124 = vmatpush1.bf16.xpose.msra.mxu0 0
        %2125 = vmatprep.subr.bf16.mxu0 0
        %2126 = vmatpush1.bf16.xpose.msra.mxu0 0
        %2127 = vmatprep.subr.bf16.mxu0 0
        %2128 = vmatpush1.bf16.xpose.msra.mxu0 0
        %2129 = vmatprep.subr.bf16.mxu0 0
        %2130 = vmatpush1.bf16.xpose.msra.mxu0 0
        %2131 = vmatprep.subr.bf16.mxu0 0
        %2132 = vmatpush1.bf16.xpose.msra.mxu0 0
        %2133 = vmatprep.subr.bf16.mxu0 0
        %2134 = vmatpush1.bf16.xpose.msra.mxu0 0
        %2135 = vmatprep.subr.bf16.mxu0 0
        %2136 = vmatpush1.bf16.xpose.msra.mxu0 0
        %2137 = vmatprep.subr.bf16.mxu0 0
        %2138 = vmatpush1.bf16.xpose.msra.mxu0 0
        %2139 = vmatprep.mubr.bf16.mxu0 0
        %2140 = vmatmul.mubr.bf16.gmra.mrb[0].mxu0 %v2066
        %v2141 = vpop.f32.mrb[0].mxu0
        %v2142 = vadd.f32 0.0, %v2141
        %v2143 = vpop.f32.mrb[0].mxu0
        %v2144 = vpop.f32.mrb[0].mxu0
        %v2145 = vpop.f32.mrb[0].mxu0
        %2146 = vdwg.mxu0
        %v2147 = vrot.slane %v2102, 4
        %v2148 = vmax.f32 %v2102, %v2147
        %v2149 = vrot.slane %v2148, 2
        %v2150 = vmax.f32 %v2148, %v2149
        %v2151 = vrot.slane %v2150, 1
        %v2152 = vmax.f32 %v2150, %v2151
        %v2153 = vrot.slane %v2142, 4
        %v2154 = vmax.f32 %v2142, %v2153
        %v2155 = vrot.slane %v2154, 2
        %v2156 = vmax.f32 %v2154, %v2155
        %v2157 = vrot.slane %v2156, 1
        %v2158 = vmax.f32 %v2156, %v2157
        %v2159 = vsub.f32 %v2102, %v2152
        %v2160 = vsub.f32 %v2142, %v2158
        %v2161 = vmul.f32 %v2159, 1.442695
        %v2162 = vpow.pop %v2161
        %v2163 = vmul.f32 %v2160, 1.442695
        %v2164 = vpow.pop %v2163
        %v2165 = vrot.slane %v2162, 4
        %v2166 = vadd.f32 %v2162, %v2165
        %v2167 = vrot.slane %v2166, 2
        %v2168 = vadd.f32 %v2166, %v2167
        %v2169 = vrot.slane %v2168, 1
        %v2170 = vadd.f32 %v2168, %v2169
        %v2171 = vrot.slane %v2164, 4
        %v2172 = vadd.f32 %v2164, %v2171
        %v2173 = vrot.slane %v2172, 2
        %v2174 = vadd.f32 %v2172, %v2173
        %v2175 = vrot.slane %v2174, 1
        %v2176 = vadd.f32 %v2174, %v2175
        %v2177 = vrcp.pop %v2170
        %v2178 = vrcp.pop %v2176
        %v2179 = vmul.f32 %v2162, %v2177
        %v2180 = vmul.f32 %v2164, %v2178
        %2181 = vadd.xlane.f32.xlu0 %v2179
        %v2182 = vpop.xlane.xlu0 %2181
        %2183 = vadd.xlane.f32.xlu0 %v2180
        %v2184 = vpop.xlane.xlu0 %2183
        %v2185 = vadd.f32 %v2182, 1e-06
        %v2186 = vadd.f32 %v2184, 1e-06
        %v2187 = vrcp.pop %v2185
        %v2188 = vrcp.pop %v2186
        %v2189 = vmul.f32 %v2179, %v2187
        %v2190 = vmul.f32 %v2180, %v2188
        %v2191 = vpack.c.bf16 %v2189, %v2189
        %v2192 = vpack.c.bf16 %v2190, %v2190
        %2193 = vmatprep.subr.bf16.mxu0 0
        %2194 = vmatpush1.bf16.msra.mxu0 %v1375
        %2195 = vmatprep.subr.bf16.mxu0 0
        %2196 = vmatpush1.bf16.msra.mxu0 %v1376
        %2197 = vmatprep.subr.bf16.mxu0 0
        %2198 = vmatpush1.bf16.msra.mxu0 %v1377
        %2199 = vmatprep.subr.bf16.mxu0 0
        %2200 = vmatpush1.bf16.msra.mxu0 %v1378
        %2201 = vmatprep.subr.bf16.mxu0 0
        %2202 = vmatpush1.bf16.msra.mxu0 %v1379
        %2203 = vmatprep.subr.bf16.mxu0 0
        %2204 = vmatpush1.bf16.msra.mxu0 %v1380
        %2205 = vmatprep.subr.bf16.mxu0 0
        %2206 = vmatpush1.bf16.msra.mxu0 %v1381
        %2207 = vmatprep.subr.bf16.mxu0 0
        %2208 = vmatpush1.bf16.msra.mxu0 %v1382
        %2209 = vmatprep.subr.bf16.mxu0 0
        %2210 = vmatpush1.bf16.msra.mxu0 0
        %2211 = vmatprep.subr.bf16.mxu0 0
        %2212 = vmatpush1.bf16.msra.mxu0 0
        %2213 = vmatprep.subr.bf16.mxu0 0
        %2214 = vmatpush1.bf16.msra.mxu0 0
        %2215 = vmatprep.subr.bf16.mxu0 0
        %2216 = vmatpush1.bf16.msra.mxu0 0
        %2217 = vmatprep.subr.bf16.mxu0 0
        %2218 = vmatpush1.bf16.msra.mxu0 0
        %2219 = vmatprep.subr.bf16.mxu0 0
        %2220 = vmatpush1.bf16.msra.mxu0 0
        %2221 = vmatprep.subr.bf16.mxu0 0
        %2222 = vmatpush1.bf16.msra.mxu0 0
        %2223 = vmatprep.subr.bf16.mxu0 0
        %2224 = vmatpush1.bf16.msra.mxu0 0
        %2225 = vmatprep.mubr.bf16.mxu0 0
        %2226 = vmatmul.mubr.bf16.gmra.mrb[0].mxu0 %v2191
        %v2227 = vpop.f32.mrb[0].mxu0
        %v2228 = vadd.f32 0.0, %v2227
        %v2229 = vpop.f32.mrb[0].mxu0
        %v2230 = vpop.f32.mrb[0].mxu0
        %v2231 = vpop.f32.mrb[0].mxu0
        %2232 = vdwg.mxu0
        %2233 = vmatprep.subr.bf16.mxu0 0
        %2234 = vmatpush1.bf16.msra.mxu0 %v1383
        %2235 = vmatprep.subr.bf16.mxu0 0
        %2236 = vmatpush1.bf16.msra.mxu0 %v1384
        %2237 = vmatprep.subr.bf16.mxu0 0
        %2238 = vmatpush1.bf16.msra.mxu0 %v1385
        %2239 = vmatprep.subr.bf16.mxu0 0
        %2240 = vmatpush1.bf16.msra.mxu0 %v1386
        %2241 = vmatprep.subr.bf16.mxu0 0
        %2242 = vmatpush1.bf16.msra.mxu0 %v1387
        %2243 = vmatprep.subr.bf16.mxu0 0
        %2244 = vmatpush1.bf16.msra.mxu0 %v1388
        %2245 = vmatprep.subr.bf16.mxu0 0
        %2246 = vmatpush1.bf16.msra.mxu0 %v1389
        %2247 = vmatprep.subr.bf16.mxu0 0
        %2248 = vmatpush1.bf16.msra.mxu0 %v1390
        %2249 = vmatprep.subr.bf16.mxu0 0
        %2250 = vmatpush1.bf16.msra.mxu0 0
        %2251 = vmatprep.subr.bf16.mxu0 0
        %2252 = vmatpush1.bf16.msra.mxu0 0
        %2253 = vmatprep.subr.bf16.mxu0 0
        %2254 = vmatpush1.bf16.msra.mxu0 0
        %2255 = vmatprep.subr.bf16.mxu0 0
        %2256 = vmatpush1.bf16.msra.mxu0 0
        %2257 = vmatprep.subr.bf16.mxu0 0
        %2258 = vmatpush1.bf16.msra.mxu0 0
        %2259 = vmatprep.subr.bf16.mxu0 0
        %2260 = vmatpush1.bf16.msra.mxu0 0
        %2261 = vmatprep.subr.bf16.mxu0 0
        %2262 = vmatpush1.bf16.msra.mxu0 0
        %2263 = vmatprep.subr.bf16.mxu0 0
        %2264 = vmatpush1.bf16.msra.mxu0 0
        %2265 = vmatprep.mubr.bf16.mxu0 0
        %2266 = vmatmul.mubr.bf16.gmra.mrb[0].mxu0 %v2192
        %v2267 = vpop.f32.mrb[0].mxu0
        %v2268 = vadd.f32 0.0, %v2267
        %v2269 = vpop.f32.mrb[0].mxu0
        %v2270 = vpop.f32.mrb[0].mxu0
        %v2271 = vpop.f32.mrb[0].mxu0
        %2272 = vdwg.mxu0
        %v2273 = vpack.c.bf16 %v2268, %v2228
        %2274 = vmatprep.subr.bf16.mxu0 %v607
        %2275 = vmatpush1.bf16.msra.mxu0 %v606
        %2276 = vmatprep.subr.bf16.mxu0 %v615
        %2277 = vmatpush1.bf16.msra.mxu0 %v614
        %2278 = vmatprep.subr.bf16.mxu0 %v623
        %2279 = vmatpush1.bf16.msra.mxu0 %v622
        %2280 = vmatprep.subr.bf16.mxu0 %v631
        %2281 = vmatpush1.bf16.msra.mxu0 %v630
        %2282 = vmatprep.subr.bf16.mxu0 %v639
        %2283 = vmatpush1.bf16.msra.mxu0 %v638
        %2284 = vmatprep.subr.bf16.mxu0 %v647
        %2285 = vmatpush1.bf16.msra.mxu0 %v646
        %2286 = vmatprep.subr.bf16.mxu0 %v655
        %2287 = vmatpush1.bf16.msra.mxu0 %v654
        %2288 = vmatprep.subr.bf16.mxu0 %v663
        %2289 = vmatpush1.bf16.msra.mxu0 %v662
        %2290 = vmatprep.subr.bf16.mxu0 0
        %2291 = vmatpush1.bf16.msra.mxu0 0
        %2292 = vmatprep.subr.bf16.mxu0 0
        %2293 = vmatpush1.bf16.msra.mxu0 0
        %2294 = vmatprep.subr.bf16.mxu0 0
        %2295 = vmatpush1.bf16.msra.mxu0 0
        %2296 = vmatprep.subr.bf16.mxu0 0
        %2297 = vmatpush1.bf16.msra.mxu0 0
        %2298 = vmatprep.subr.bf16.mxu0 0
        %2299 = vmatpush1.bf16.msra.mxu0 0
        %2300 = vmatprep.subr.bf16.mxu0 0
        %2301 = vmatpush1.bf16.msra.mxu0 0
        %2302 = vmatprep.subr.bf16.mxu0 0
        %2303 = vmatpush1.bf16.msra.mxu0 0
        %2304 = vmatprep.subr.bf16.mxu0 0
        %2305 = vmatpush1.bf16.msra.mxu0 0
        %2306 = vmatprep.mubr.bf16.mxu0 0
        %2307 = vmatmul.mubr.bf16.gmra.mrb[0].mxu0 %v2273
        %v2308 = vpop.f32.mrb[0].mxu0
        %v2309 = vadd.f32 0.0, %v2308
        %v2310 = vpop.f32.mrb[0].mxu0
        %v2311 = vadd.f32 0.0, %v2310
        %v2312 = vpop.f32.mrb[0].mxu0
        %v2313 = vadd.f32 0.0, %v2312
        %v2314 = vpop.f32.mrb[0].mxu0
        %v2315 = vadd.f32 0.0, %v2314
        %2316 = vdwg.mxu0
        %2317 = vmatprep.subr.bf16.mxu0 0
        %2318 = vmatpush1.bf16.msra.mxu0 %v608
        %2319 = vmatprep.subr.bf16.mxu0 0
        %2320 = vmatpush1.bf16.msra.mxu0 %v616
        %2321 = vmatprep.subr.bf16.mxu0 0
        %2322 = vmatpush1.bf16.msra.mxu0 %v624
        %2323 = vmatprep.subr.bf16.mxu0 0
        %2324 = vmatpush1.bf16.msra.mxu0 %v632
        %2325 = vmatprep.subr.bf16.mxu0 0
        %2326 = vmatpush1.bf16.msra.mxu0 %v640
        %2327 = vmatprep.subr.bf16.mxu0 0
        %2328 = vmatpush1.bf16.msra.mxu0 %v648
        %2329 = vmatprep.subr.bf16.mxu0 0
        %2330 = vmatpush1.bf16.msra.mxu0 %v656
        %2331 = vmatprep.subr.bf16.mxu0 0
        %2332 = vmatpush1.bf16.msra.mxu0 %v664
        %2333 = vmatprep.subr.bf16.mxu0 0
        %2334 = vmatpush1.bf16.msra.mxu0 0
        %2335 = vmatprep.subr.bf16.mxu0 0
        %2336 = vmatpush1.bf16.msra.mxu0 0
        %2337 = vmatprep.subr.bf16.mxu0 0
        %2338 = vmatpush1.bf16.msra.mxu0 0
        %2339 = vmatprep.subr.bf16.mxu0 0
        %2340 = vmatpush1.bf16.msra.mxu0 0
        %2341 = vmatprep.subr.bf16.mxu0 0
        %2342 = vmatpush1.bf16.msra.mxu0 0
        %2343 = vmatprep.subr.bf16.mxu0 0
        %2344 = vmatpush1.bf16.msra.mxu0 0
        %2345 = vmatprep.subr.bf16.mxu0 0
        %2346 = vmatpush1.bf16.msra.mxu0 0
        %2347 = vmatprep.subr.bf16.mxu0 0
        %2348 = vmatpush1.bf16.msra.mxu0 0
        %2349 = vmatprep.mubr.bf16.mxu0 0
        %2350 = vmatmul.mubr.bf16.gmra.mrb[0].mxu0 %v2273
        %v2351 = vpop.f32.mrb[0].mxu0
        %v2352 = vadd.f32 0.0, %v2351
        %v2353 = vpop.f32.mrb[0].mxu0
        %v2354 = vpop.f32.mrb[0].mxu0
        %v2355 = vadd.f32 0.0, %v2354
        %v2356 = vpop.f32.mrb[0].mxu0
        %2357 = vdwg.mxu0
        %v2358 = vpack.c.bf16 %v1996, %v1995
        %2359 = vmatprep.subr.bf16.mxu0 %v610
        %2360 = vmatpush1.bf16.msra.mxu0 %v609
        %2361 = vmatprep.subr.bf16.mxu0 %v618
        %2362 = vmatpush1.bf16.msra.mxu0 %v617
        %2363 = vmatprep.subr.bf16.mxu0 %v626
        %2364 = vmatpush1.bf16.msra.mxu0 %v625
        %2365 = vmatprep.subr.bf16.mxu0 %v634
        %2366 = vmatpush1.bf16.msra.mxu0 %v633
        %2367 = vmatprep.subr.bf16.mxu0 %v642
        %2368 = vmatpush1.bf16.msra.mxu0 %v641
        %2369 = vmatprep.subr.bf16.mxu0 %v650
        %2370 = vmatpush1.bf16.msra.mxu0 %v649
        %2371 = vmatprep.subr.bf16.mxu0 %v658
        %2372 = vmatpush1.bf16.msra.mxu0 %v657
        %2373 = vmatprep.subr.bf16.mxu0 %v666
        %2374 = vmatpush1.bf16.msra.mxu0 %v665
        %2375 = vmatprep.subr.bf16.mxu0 0
        %2376 = vmatpush1.bf16.msra.mxu0 0
        %2377 = vmatprep.subr.bf16.mxu0 0
        %2378 = vmatpush1.bf16.msra.mxu0 0
        %2379 = vmatprep.subr.bf16.mxu0 0
        %2380 = vmatpush1.bf16.msra.mxu0 0
        %2381 = vmatprep.subr.bf16.mxu0 0
        %2382 = vmatpush1.bf16.msra.mxu0 0
        %2383 = vmatprep.subr.bf16.mxu0 0
        %2384 = vmatpush1.bf16.msra.mxu0 0
        %2385 = vmatprep.subr.bf16.mxu0 0
        %2386 = vmatpush1.bf16.msra.mxu0 0
        %2387 = vmatprep.subr.bf16.mxu0 0
        %2388 = vmatpush1.bf16.msra.mxu0 0
        %2389 = vmatprep.subr.bf16.mxu0 0
        %2390 = vmatpush1.bf16.msra.mxu0 0
        %2391 = vmatprep.mubr.bf16.mxu0 0
        %2392 = vmatmul.mubr.bf16.gmra.mrb[0].mxu0 %v2358
        %v2393 = vpop.f32.mrb[0].mxu0
        %v2394 = vadd.f32 0.0, %v2393
        %v2395 = vpop.f32.mrb[0].mxu0
        %v2396 = vadd.f32 0.0, %v2395
        %v2397 = vpop.f32.mrb[0].mxu0
        %v2398 = vadd.f32 0.0, %v2397
        %v2399 = vpop.f32.mrb[0].mxu0
        %v2400 = vadd.f32 0.0, %v2399
        %2401 = vdwg.mxu0
        %2402 = vmatprep.subr.bf16.mxu0 0
        %2403 = vmatpush1.bf16.msra.mxu0 %v611
        %2404 = vmatprep.subr.bf16.mxu0 0
        %2405 = vmatpush1.bf16.msra.mxu0 %v619
        %2406 = vmatprep.subr.bf16.mxu0 0
        %2407 = vmatpush1.bf16.msra.mxu0 %v627
        %2408 = vmatprep.subr.bf16.mxu0 0
        %2409 = vmatpush1.bf16.msra.mxu0 %v635
        %2410 = vmatprep.subr.bf16.mxu0 0
        %2411 = vmatpush1.bf16.msra.mxu0 %v643
        %2412 = vmatprep.subr.bf16.mxu0 0
        %2413 = vmatpush1.bf16.msra.mxu0 %v651
        %2414 = vmatprep.subr.bf16.mxu0 0
        %2415 = vmatpush1.bf16.msra.mxu0 %v659
        %2416 = vmatprep.subr.bf16.mxu0 0
        %2417 = vmatpush1.bf16.msra.mxu0 %v667
        %2418 = vmatprep.subr.bf16.mxu0 0
        %2419 = vmatpush1.bf16.msra.mxu0 0
        %2420 = vmatprep.subr.bf16.mxu0 0
        %2421 = vmatpush1.bf16.msra.mxu0 0
        %2422 = vmatprep.subr.bf16.mxu0 0
        %2423 = vmatpush1.bf16.msra.mxu0 0
        %2424 = vmatprep.subr.bf16.mxu0 0
        %2425 = vmatpush1.bf16.msra.mxu0 0
        %2426 = vmatprep.subr.bf16.mxu0 0
        %2427 = vmatpush1.bf16.msra.mxu0 0
        %2428 = vmatprep.subr.bf16.mxu0 0
        %2429 = vmatpush1.bf16.msra.mxu0 0
        %2430 = vmatprep.subr.bf16.mxu0 0
        %2431 = vmatpush1.bf16.msra.mxu0 0
        %2432 = vmatprep.subr.bf16.mxu0 0
        %2433 = vmatpush1.bf16.msra.mxu0 0
        %2434 = vmatprep.mubr.bf16.mxu0 0
        %2435 = vmatmul.mubr.bf16.gmra.mrb[0].mxu0 %v2358
        %v2436 = vpop.f32.mrb[0].mxu0
        %v2437 = vadd.f32 0.0, %v2436
        %v2438 = vpop.f32.mrb[0].mxu0
        %v2439 = vpop.f32.mrb[0].mxu0
        %v2440 = vadd.f32 0.0, %v2439
        %v2441 = vpop.f32.mrb[0].mxu0
        %2442 = vdwg.mxu0
        %v2443 = vadd.f32 %v2309, %v2394
        %v2444 = vadd.f32 %v2313, %v2398
        %v2445 = vxor.u32 %v2443, 2147483648
        %v2446 = vxor.u32 %v2444, 2147483648
        %v2447 = vmul.f32 %v2445, 1.442695
        %v2448 = vpow.pop %v2447
        %v2449 = vmul.f32 %v2446, 1.442695
        %v2450 = vpow.pop %v2449
        %v2451 = vadd.f32 %v2448, 1.0
        %v2452 = vadd.f32 %v2450, 1.0
        %v2453 = vrcp.pop %v2451
        %v2454 = vmul.f32 1.0, %v2453
        %v2455 = vrcp.pop %v2452
        %v2456 = vmul.f32 1.0, %v2455
        %v2457 = vadd.f32 %v2311, %v2396
        %v2458 = vadd.f32 %v2315, %v2400
        %v2459 = vxor.u32 %v2457, 2147483648
        %v2460 = vxor.u32 %v2458, 2147483648
        %v2461 = vmul.f32 %v2459, 1.442695
        %v2462 = vpow.pop %v2461
        %v2463 = vmul.f32 %v2460, 1.442695
        %v2464 = vpow.pop %v2463
        %v2465 = vadd.f32 %v2462, 1.0
        %v2466 = vadd.f32 %v2464, 1.0
        %v2467 = vrcp.pop %v2465
        %v2468 = vmul.f32 1.0, %v2467
        %v2469 = vrcp.pop %v2466
        %v2470 = vmul.f32 1.0, %v2469
        %v2471 = vmul.f32 %v2454, %v2437
        %v2472 = vmul.f32 %v2456, %v2440
        %v2473 = vadd.f32 %v2352, %v2471
        %v2474 = vadd.f32 %v2355, %v2472
        %v2475 = vtanh.pop %v2473
        %v2476 = vtanh.pop %v2474
        %v2477 = vsub.f32 1.0, %v2468
        %v2478 = vsub.f32 1.0, %v2470
        %v2479 = vmul.f32 %v2477, %v2475
        %v2480 = vmul.f32 %v2478, %v2476
        %v2481 = vmul.f32 %v2468, %v1995
        %v2482 = vmul.f32 %v2470, %v1996
        %v2483 = vadd.f32 %v2479, %v2481
        %v2484 = vadd.f32 %v2480, %v2482
        %2485 = vadd.xlane.f32.xlu0 %v2483
        %v2486 = vpop.xlane.xlu0 %2485
        %2487 = vadd.xlane.f32.xlu0 %v2484
        %v2488 = vpop.xlane.xlu0 %2487
        %v2489 = vmul.f32 %v2486, %v789
        %v2490 = vmul.f32 %v2488, %v789
        %v2491 = vsub.f32 %v2483, %v2489
        %v2492 = vsub.f32 %v2484, %v2490
        %v2493 = vmul.f32 %v2491, %v2491
        %v2494 = vmul.f32 %v2492, %v2492
        %2495 = vadd.xlane.f32.xlu0 %v2493
        %v2496 = vpop.xlane.xlu0 %2495
        %2497 = vadd.xlane.f32.xlu0 %v2494
        %v2498 = vpop.xlane.xlu0 %2497
        %v2499 = vmul.f32 %v2496, %v789
        %v2500 = vmul.f32 %v2498, %v789
        %v2501 = vadd.f32 %v2499, 1e-05
        %v2502 = vadd.f32 %v2500, 1e-05
        %v2503 = vrsqrt.pop %v2501
        %v2504 = vrsqrt.pop %v2502
        %v2505 = vmul.f32 %v2491, %v2503
        %v2506 = vmul.f32 %v2492, %v2504
        %v2507 = vmul.f32 %v2505, %v413
        %v2508 = vmul.f32 %v2506, %v413
        %v2509 = vadd.f32 %v2507, %v418
        %v2510 = vadd.f32 %v2508, %v418
        %v2511 = vpack.c.bf16 %v2510, %v2509
        %2512 = vmatprep.subr.bf16.mxu0 0
        %2513 = vmatpush1.bf16.msra.mxu0 %v612
        %2514 = vmatprep.subr.bf16.mxu0 0
        %2515 = vmatpush1.bf16.msra.mxu0 %v620
        %2516 = vmatprep.subr.bf16.mxu0 0
        %2517 = vmatpush1.bf16.msra.mxu0 %v628
        %2518 = vmatprep.subr.bf16.mxu0 0
        %2519 = vmatpush1.bf16.msra.mxu0 %v636
        %2520 = vmatprep.subr.bf16.mxu0 0
        %2521 = vmatpush1.bf16.msra.mxu0 %v644
        %2522 = vmatprep.subr.bf16.mxu0 0
        %2523 = vmatpush1.bf16.msra.mxu0 %v652
        %2524 = vmatprep.subr.bf16.mxu0 0
        %2525 = vmatpush1.bf16.msra.mxu0 %v660
        %2526 = vmatprep.subr.bf16.mxu0 0
        %2527 = vmatpush1.bf16.msra.mxu0 %v668
        %2528 = vmatprep.subr.bf16.mxu0 0
        %2529 = vmatpush1.bf16.msra.mxu0 0
        %2530 = vmatprep.subr.bf16.mxu0 0
        %2531 = vmatpush1.bf16.msra.mxu0 0
        %2532 = vmatprep.subr.bf16.mxu0 0
        %2533 = vmatpush1.bf16.msra.mxu0 0
        %2534 = vmatprep.subr.bf16.mxu0 0
        %2535 = vmatpush1.bf16.msra.mxu0 0
        %2536 = vmatprep.subr.bf16.mxu0 0
        %2537 = vmatpush1.bf16.msra.mxu0 0
        %2538 = vmatprep.subr.bf16.mxu0 0
        %2539 = vmatpush1.bf16.msra.mxu0 0
        %2540 = vmatprep.subr.bf16.mxu0 0
        %2541 = vmatpush1.bf16.msra.mxu0 0
        %2542 = vmatprep.subr.bf16.mxu0 0
        %2543 = vmatpush1.bf16.msra.mxu0 0
        %2544 = vmatprep.mubr.bf16.mxu0 0
        %2545 = vmatmul.mubr.bf16.gmra.mrb[0].mxu0 %v2511
        %v2546 = vpop.f32.mrb[0].mxu0
        %v2547 = vadd.f32 %v423, %v2546
        %v2548 = vpop.f32.mrb[0].mxu0
        %v2549 = vpop.f32.mrb[0].mxu0
        %v2550 = vadd.f32 %v423, %v2549
        %v2551 = vpop.f32.mrb[0].mxu0
        %2552 = vdwg.mxu0
        %v2553 = vmax.f32 %v2547, 0.0
        %v2554 = vmax.f32 %v2550, 0.0
        %v2555 = vpack.c.bf16 %v2554, %v2553
        %2556 = vmatprep.subr.bf16.mxu0 0
        %2557 = vmatpush1.bf16.msra.mxu0 %v685
        %2558 = vmatprep.subr.bf16.mxu0 0
        %2559 = vmatpush1.bf16.msra.mxu0 %v686
        %2560 = vmatprep.subr.bf16.mxu0 0
        %2561 = vmatpush1.bf16.msra.mxu0 %v687
        %2562 = vmatprep.subr.bf16.mxu0 0
        %2563 = vmatpush1.bf16.msra.mxu0 %v688
        %2564 = vmatprep.subr.bf16.mxu0 0
        %2565 = vmatpush1.bf16.msra.mxu0 %v689
        %2566 = vmatprep.subr.bf16.mxu0 0
        %2567 = vmatpush1.bf16.msra.mxu0 %v690
        %2568 = vmatprep.subr.bf16.mxu0 0
        %2569 = vmatpush1.bf16.msra.mxu0 %v691
        %2570 = vmatprep.subr.bf16.mxu0 0
        %2571 = vmatpush1.bf16.msra.mxu0 %v692
        %2572 = vmatprep.subr.bf16.mxu0 0
        %2573 = vmatpush1.bf16.msra.mxu0 0
        %2574 = vmatprep.subr.bf16.mxu0 0
        %2575 = vmatpush1.bf16.msra.mxu0 0
        %2576 = vmatprep.subr.bf16.mxu0 0
        %2577 = vmatpush1.bf16.msra.mxu0 0
        %2578 = vmatprep.subr.bf16.mxu0 0
        %2579 = vmatpush1.bf16.msra.mxu0 0
        %2580 = vmatprep.subr.bf16.mxu0 0
        %2581 = vmatpush1.bf16.msra.mxu0 0
        %2582 = vmatprep.subr.bf16.mxu0 0
        %2583 = vmatpush1.bf16.msra.mxu0 0
        %2584 = vmatprep.subr.bf16.mxu0 0
        %2585 = vmatpush1.bf16.msra.mxu0 0
        %2586 = vmatprep.subr.bf16.mxu0 0
        %2587 = vmatpush1.bf16.msra.mxu0 0
        %2588 = vmatprep.mubr.bf16.mxu0 0
        %2589 = vmatmul.mubr.bf16.gmra.mrb[0].mxu0 %v2555
        %v2590 = vpop.f32.mrb[0].mxu0
        %v2591 = vadd.f32 0.0, %v2590
        %v2592 = vpop.f32.mrb[0].mxu0
        %v2593 = vpop.f32.mrb[0].mxu0
        %v2594 = vadd.f32 0.0, %v2593
        %v2595 = vpop.f32.mrb[0].mxu0
        %2596 = vdwg.mxu0
        %v2597 = vadd.f32 %v2483, %v2591
        %v2598 = vadd.f32 %v2484, %v2594
        %v2599 = vadd.f32 %v2597, %v428
        %v2600 = vadd.f32 %v2598, %v428
        %2601 = vadd.xlane.f32.xlu0 %v2599
        %v2602 = vpop.xlane.xlu0 %2601
        %2603 = vadd.xlane.f32.xlu0 %v2600
        %v2604 = vpop.xlane.xlu0 %2603
        %v2605 = vmul.f32 %v2602, %v789
        %v2606 = vmul.f32 %v2604, %v789
        %v2607 = vsub.f32 %v2599, %v2605
        %v2608 = vsub.f32 %v2600, %v2606
        %v2609 = vmul.f32 %v2607, %v2607
        %v2610 = vmul.f32 %v2608, %v2608
        %2611 = vadd.xlane.f32.xlu0 %v2609
        %v2612 = vpop.xlane.xlu0 %2611
        %2613 = vadd.xlane.f32.xlu0 %v2610
        %v2614 = vpop.xlane.xlu0 %2613
        %v2615 = vmul.f32 %v2612, %v789
        %v2616 = vmul.f32 %v2614, %v789
        %v2617 = vadd.f32 %v2615, 1e-05
        %v2618 = vadd.f32 %v2616, 1e-05
        %v2619 = vrsqrt.pop %v2617
        %v2620 = vrsqrt.pop %v2618
        %v2621 = vmul.f32 %v2607, %v2619
        %v2622 = vmul.f32 %v2608, %v2620
        %v2623 = vmul.f32 %v2621, %v403
        %v2624 = vmul.f32 %v2622, %v403
        %v2625 = vadd.f32 %v2623, %v408
        %v2626 = vadd.f32 %v2624, %v408
        %v2627 = vpack.c.bf16 %v2626, %v2625
        %2628 = vmatprep.subr.bf16.mxu0 0
        %2629 = vmatpush1.bf16.msra.mxu0 %v605
        %2630 = vmatprep.subr.bf16.mxu0 0
        %2631 = vmatpush1.bf16.msra.mxu0 %v613
        %2632 = vmatprep.subr.bf16.mxu0 0
        %2633 = vmatpush1.bf16.msra.mxu0 %v621
        %2634 = vmatprep.subr.bf16.mxu0 0
        %2635 = vmatpush1.bf16.msra.mxu0 %v629
        %2636 = vmatprep.subr.bf16.mxu0 0
        %2637 = vmatpush1.bf16.msra.mxu0 %v637
        %2638 = vmatprep.subr.bf16.mxu0 0
        %2639 = vmatpush1.bf16.msra.mxu0 %v645
        %2640 = vmatprep.subr.bf16.mxu0 0
        %2641 = vmatpush1.bf16.msra.mxu0 %v653
        %2642 = vmatprep.subr.bf16.mxu0 0
        %2643 = vmatpush1.bf16.msra.mxu0 %v661
        %2644 = vmatprep.subr.bf16.mxu0 0
        %2645 = vmatpush1.bf16.msra.mxu0 0
        %2646 = vmatprep.subr.bf16.mxu0 0
        %2647 = vmatpush1.bf16.msra.mxu0 0
        %2648 = vmatprep.subr.bf16.mxu0 0
        %2649 = vmatpush1.bf16.msra.mxu0 0
        %2650 = vmatprep.subr.bf16.mxu0 0
        %2651 = vmatpush1.bf16.msra.mxu0 0
        %2652 = vmatprep.subr.bf16.mxu0 0
        %2653 = vmatpush1.bf16.msra.mxu0 0
        %2654 = vmatprep.subr.bf16.mxu0 0
        %2655 = vmatpush1.bf16.msra.mxu0 0
        %2656 = vmatprep.subr.bf16.mxu0 0
        %2657 = vmatpush1.bf16.msra.mxu0 0
        %2658 = vmatprep.subr.bf16.mxu0 0
        %2659 = vmatpush1.bf16.msra.mxu0 0
        %2660 = vmatprep.mubr.bf16.mxu0 0
        %2661 = vmatmul.mubr.bf16.gmra.mrb[0].mxu0 %v2627
        %v2662 = vpop.f32.mrb[0].mxu0
        %v2663 = vadd.f32 0.0, %v2662
        %v2664 = vpop.f32.mrb[0].mxu0
        %v2665 = vpop.f32.mrb[0].mxu0
        %v2666 = vadd.f32 0.0, %v2665
        %v2667 = vpop.f32.mrb[0].mxu0
        %2668 = vdwg.mxu0
        %v2669 = vpack.c.bf16 %v2663, %v2663
        %v2670 = vpack.c.bf16 %v2666, %v2666
        %2671 = vmatprep.subr.bf16.mxu0 0
        %2672 = vmatpush1.bf16.xpose.msra.mxu0 %v1359
        %2673 = vmatprep.subr.bf16.mxu0 0
        %2674 = vmatpush1.bf16.xpose.msra.mxu0 %v1360
        %2675 = vmatprep.subr.bf16.mxu0 0
        %2676 = vmatpush1.bf16.xpose.msra.mxu0 %v1361
        %2677 = vmatprep.subr.bf16.mxu0 0
        %2678 = vmatpush1.bf16.xpose.msra.mxu0 %v1362
        %2679 = vmatprep.subr.bf16.mxu0 0
        %2680 = vmatpush1.bf16.xpose.msra.mxu0 %v1363
        %2681 = vmatprep.subr.bf16.mxu0 0
        %2682 = vmatpush1.bf16.xpose.msra.mxu0 %v1364
        %2683 = vmatprep.subr.bf16.mxu0 0
        %2684 = vmatpush1.bf16.xpose.msra.mxu0 %v1365
        %2685 = vmatprep.subr.bf16.mxu0 0
        %2686 = vmatpush1.bf16.xpose.msra.mxu0 %v1366
        %2687 = vmatprep.subr.bf16.mxu0 0
        %2688 = vmatpush1.bf16.xpose.msra.mxu0 0
        %2689 = vmatprep.subr.bf16.mxu0 0
        %2690 = vmatpush1.bf16.xpose.msra.mxu0 0
        %2691 = vmatprep.subr.bf16.mxu0 0
        %2692 = vmatpush1.bf16.xpose.msra.mxu0 0
        %2693 = vmatprep.subr.bf16.mxu0 0
        %2694 = vmatpush1.bf16.xpose.msra.mxu0 0
        %2695 = vmatprep.subr.bf16.mxu0 0
        %2696 = vmatpush1.bf16.xpose.msra.mxu0 0
        %2697 = vmatprep.subr.bf16.mxu0 0
        %2698 = vmatpush1.bf16.xpose.msra.mxu0 0
        %2699 = vmatprep.subr.bf16.mxu0 0
        %2700 = vmatpush1.bf16.xpose.msra.mxu0 0
        %2701 = vmatprep.subr.bf16.mxu0 0
        %2702 = vmatpush1.bf16.xpose.msra.mxu0 0
        %2703 = vmatprep.mubr.bf16.mxu0 0
        %2704 = vmatmul.mubr.bf16.gmra.mrb[0].mxu0 %v2669
        %v2705 = vpop.f32.mrb[0].mxu0
        %v2706 = vadd.f32 0.0, %v2705
        %v2707 = vpop.f32.mrb[0].mxu0
        %v2708 = vpop.f32.mrb[0].mxu0
        %v2709 = vpop.f32.mrb[0].mxu0
        %2710 = vdwg.mxu0
        %2711 = vmatprep.subr.bf16.mxu0 0
        %2712 = vmatpush1.bf16.xpose.msra.mxu0 %v1367
        %2713 = vmatprep.subr.bf16.mxu0 0
        %2714 = vmatpush1.bf16.xpose.msra.mxu0 %v1368
        %2715 = vmatprep.subr.bf16.mxu0 0
        %2716 = vmatpush1.bf16.xpose.msra.mxu0 %v1369
        %2717 = vmatprep.subr.bf16.mxu0 0
        %2718 = vmatpush1.bf16.xpose.msra.mxu0 %v1370
        %2719 = vmatprep.subr.bf16.mxu0 0
        %2720 = vmatpush1.bf16.xpose.msra.mxu0 %v1371
        %2721 = vmatprep.subr.bf16.mxu0 0
        %2722 = vmatpush1.bf16.xpose.msra.mxu0 %v1372
        %2723 = vmatprep.subr.bf16.mxu0 0
        %2724 = vmatpush1.bf16.xpose.msra.mxu0 %v1373
        %2725 = vmatprep.subr.bf16.mxu0 0
        %2726 = vmatpush1.bf16.xpose.msra.mxu0 %v1374
        %2727 = vmatprep.subr.bf16.mxu0 0
        %2728 = vmatpush1.bf16.xpose.msra.mxu0 0
        %2729 = vmatprep.subr.bf16.mxu0 0
        %2730 = vmatpush1.bf16.xpose.msra.mxu0 0
        %2731 = vmatprep.subr.bf16.mxu0 0
        %2732 = vmatpush1.bf16.xpose.msra.mxu0 0
        %2733 = vmatprep.subr.bf16.mxu0 0
        %2734 = vmatpush1.bf16.xpose.msra.mxu0 0
        %2735 = vmatprep.subr.bf16.mxu0 0
        %2736 = vmatpush1.bf16.xpose.msra.mxu0 0
        %2737 = vmatprep.subr.bf16.mxu0 0
        %2738 = vmatpush1.bf16.xpose.msra.mxu0 0
        %2739 = vmatprep.subr.bf16.mxu0 0
        %2740 = vmatpush1.bf16.xpose.msra.mxu0 0
        %2741 = vmatprep.subr.bf16.mxu0 0
        %2742 = vmatpush1.bf16.xpose.msra.mxu0 0
        %2743 = vmatprep.mubr.bf16.mxu0 0
        %2744 = vmatmul.mubr.bf16.gmra.mrb[0].mxu0 %v2670
        %v2745 = vpop.f32.mrb[0].mxu0
        %v2746 = vadd.f32 0.0, %v2745
        %v2747 = vpop.f32.mrb[0].mxu0
        %v2748 = vpop.f32.mrb[0].mxu0
        %v2749 = vpop.f32.mrb[0].mxu0
        %2750 = vdwg.mxu0
        %v2751 = vrot.slane %v2706, 4
        %v2752 = vmax.f32 %v2706, %v2751
        %v2753 = vrot.slane %v2752, 2
        %v2754 = vmax.f32 %v2752, %v2753
        %v2755 = vrot.slane %v2754, 1
        %v2756 = vmax.f32 %v2754, %v2755
        %v2757 = vrot.slane %v2746, 4
        %v2758 = vmax.f32 %v2746, %v2757
        %v2759 = vrot.slane %v2758, 2
        %v2760 = vmax.f32 %v2758, %v2759
        %v2761 = vrot.slane %v2760, 1
        %v2762 = vmax.f32 %v2760, %v2761
        %v2763 = vsub.f32 %v2706, %v2756
        %v2764 = vsub.f32 %v2746, %v2762
        %v2765 = vmul.f32 %v2763, 1.442695
        %v2766 = vpow.pop %v2765
        %v2767 = vmul.f32 %v2764, 1.442695
        %v2768 = vpow.pop %v2767
        %v2769 = vrot.slane %v2766, 4
        %v2770 = vadd.f32 %v2766, %v2769
        %v2771 = vrot.slane %v2770, 2
        %v2772 = vadd.f32 %v2770, %v2771
        %v2773 = vrot.slane %v2772, 1
        %v2774 = vadd.f32 %v2772, %v2773
        %v2775 = vrot.slane %v2768, 4
        %v2776 = vadd.f32 %v2768, %v2775
        %v2777 = vrot.slane %v2776, 2
        %v2778 = vadd.f32 %v2776, %v2777
        %v2779 = vrot.slane %v2778, 1
        %v2780 = vadd.f32 %v2778, %v2779
        %v2781 = vrcp.pop %v2774
        %v2782 = vrcp.pop %v2780
        %v2783 = vmul.f32 %v2766, %v2781
        %v2784 = vmul.f32 %v2768, %v2782
        %2785 = vadd.xlane.f32.xlu0 %v2783
        %v2786 = vpop.xlane.xlu0 %2785
        %2787 = vadd.xlane.f32.xlu0 %v2784
        %v2788 = vpop.xlane.xlu0 %2787
        %v2789 = vadd.f32 %v2786, 1e-06
        %v2790 = vadd.f32 %v2788, 1e-06
        %v2791 = vrcp.pop %v2789
        %v2792 = vrcp.pop %v2790
        %v2793 = vmul.f32 %v2783, %v2791
        %v2794 = vmul.f32 %v2784, %v2792
        %v2795 = vpack.c.bf16 %v2793, %v2793
        %v2796 = vpack.c.bf16 %v2794, %v2794
        %2797 = vmatprep.subr.bf16.mxu0 0
        %2798 = vmatpush1.bf16.msra.mxu0 %v1375
        %2799 = vmatprep.subr.bf16.mxu0 0
        %2800 = vmatpush1.bf16.msra.mxu0 %v1376
        %2801 = vmatprep.subr.bf16.mxu0 0
        %2802 = vmatpush1.bf16.msra.mxu0 %v1377
        %2803 = vmatprep.subr.bf16.mxu0 0
        %2804 = vmatpush1.bf16.msra.mxu0 %v1378
        %2805 = vmatprep.subr.bf16.mxu0 0
        %2806 = vmatpush1.bf16.msra.mxu0 %v1379
        %2807 = vmatprep.subr.bf16.mxu0 0
        %2808 = vmatpush1.bf16.msra.mxu0 %v1380
        %2809 = vmatprep.subr.bf16.mxu0 0
        %2810 = vmatpush1.bf16.msra.mxu0 %v1381
        %2811 = vmatprep.subr.bf16.mxu0 0
        %2812 = vmatpush1.bf16.msra.mxu0 %v1382
        %2813 = vmatprep.subr.bf16.mxu0 0
        %2814 = vmatpush1.bf16.msra.mxu0 0
        %2815 = vmatprep.subr.bf16.mxu0 0
        %2816 = vmatpush1.bf16.msra.mxu0 0
        %2817 = vmatprep.subr.bf16.mxu0 0
        %2818 = vmatpush1.bf16.msra.mxu0 0
        %2819 = vmatprep.subr.bf16.mxu0 0
        %2820 = vmatpush1.bf16.msra.mxu0 0
        %2821 = vmatprep.subr.bf16.mxu0 0
        %2822 = vmatpush1.bf16.msra.mxu0 0
        %2823 = vmatprep.subr.bf16.mxu0 0
        %2824 = vmatpush1.bf16.msra.mxu0 0
        %2825 = vmatprep.subr.bf16.mxu0 0
        %2826 = vmatpush1.bf16.msra.mxu0 0
        %2827 = vmatprep.subr.bf16.mxu0 0
        %2828 = vmatpush1.bf16.msra.mxu0 0
        %2829 = vmatprep.mubr.bf16.mxu0 0
        %2830 = vmatmul.mubr.bf16.gmra.mrb[0].mxu0 %v2795
        %v2831 = vpop.f32.mrb[0].mxu0
        %v2832 = vadd.f32 0.0, %v2831
        %v2833 = vpop.f32.mrb[0].mxu0
        %v2834 = vpop.f32.mrb[0].mxu0
        %v2835 = vpop.f32.mrb[0].mxu0
        %2836 = vdwg.mxu0
        %2837 = vmatprep.subr.bf16.mxu0 0
        %2838 = vmatpush1.bf16.msra.mxu0 %v1383
        %2839 = vmatprep.subr.bf16.mxu0 0
        %2840 = vmatpush1.bf16.msra.mxu0 %v1384
        %2841 = vmatprep.subr.bf16.mxu0 0
        %2842 = vmatpush1.bf16.msra.mxu0 %v1385
        %2843 = vmatprep.subr.bf16.mxu0 0
        %2844 = vmatpush1.bf16.msra.mxu0 %v1386
        %2845 = vmatprep.subr.bf16.mxu0 0
        %2846 = vmatpush1.bf16.msra.mxu0 %v1387
        %2847 = vmatprep.subr.bf16.mxu0 0
        %2848 = vmatpush1.bf16.msra.mxu0 %v1388
        %2849 = vmatprep.subr.bf16.mxu0 0
        %2850 = vmatpush1.bf16.msra.mxu0 %v1389
        %2851 = vmatprep.subr.bf16.mxu0 0
        %2852 = vmatpush1.bf16.msra.mxu0 %v1390
        %2853 = vmatprep.subr.bf16.mxu0 0
        %2854 = vmatpush1.bf16.msra.mxu0 0
        %2855 = vmatprep.subr.bf16.mxu0 0
        %2856 = vmatpush1.bf16.msra.mxu0 0
        %2857 = vmatprep.subr.bf16.mxu0 0
        %2858 = vmatpush1.bf16.msra.mxu0 0
        %2859 = vmatprep.subr.bf16.mxu0 0
        %2860 = vmatpush1.bf16.msra.mxu0 0
        %2861 = vmatprep.subr.bf16.mxu0 0
        %2862 = vmatpush1.bf16.msra.mxu0 0
        %2863 = vmatprep.subr.bf16.mxu0 0
        %2864 = vmatpush1.bf16.msra.mxu0 0
        %2865 = vmatprep.subr.bf16.mxu0 0
        %2866 = vmatpush1.bf16.msra.mxu0 0
        %2867 = vmatprep.subr.bf16.mxu0 0
        %2868 = vmatpush1.bf16.msra.mxu0 0
        %2869 = vmatprep.mubr.bf16.mxu0 0
        %2870 = vmatmul.mubr.bf16.gmra.mrb[0].mxu0 %v2796
        %v2871 = vpop.f32.mrb[0].mxu0
        %v2872 = vadd.f32 0.0, %v2871
        %v2873 = vpop.f32.mrb[0].mxu0
        %v2874 = vpop.f32.mrb[0].mxu0
        %v2875 = vpop.f32.mrb[0].mxu0
        %2876 = vdwg.mxu0
        %v2877 = vpack.c.bf16 %v2872, %v2832
        %2878 = vmatprep.subr.bf16.mxu0 %v607
        %2879 = vmatpush1.bf16.msra.mxu0 %v606
        %2880 = vmatprep.subr.bf16.mxu0 %v615
        %2881 = vmatpush1.bf16.msra.mxu0 %v614
        %2882 = vmatprep.subr.bf16.mxu0 %v623
        %2883 = vmatpush1.bf16.msra.mxu0 %v622
        %2884 = vmatprep.subr.bf16.mxu0 %v631
        %2885 = vmatpush1.bf16.msra.mxu0 %v630
        %2886 = vmatprep.subr.bf16.mxu0 %v639
        %2887 = vmatpush1.bf16.msra.mxu0 %v638
        %2888 = vmatprep.subr.bf16.mxu0 %v647
        %2889 = vmatpush1.bf16.msra.mxu0 %v646
        %2890 = vmatprep.subr.bf16.mxu0 %v655
        %2891 = vmatpush1.bf16.msra.mxu0 %v654
        %2892 = vmatprep.subr.bf16.mxu0 %v663
        %2893 = vmatpush1.bf16.msra.mxu0 %v662
        %2894 = vmatprep.subr.bf16.mxu0 0
        %2895 = vmatpush1.bf16.msra.mxu0 0
        %2896 = vmatprep.subr.bf16.mxu0 0
        %2897 = vmatpush1.bf16.msra.mxu0 0
        %2898 = vmatprep.subr.bf16.mxu0 0
        %2899 = vmatpush1.bf16.msra.mxu0 0
        %2900 = vmatprep.subr.bf16.mxu0 0
        %2901 = vmatpush1.bf16.msra.mxu0 0
        %2902 = vmatprep.subr.bf16.mxu0 0
        %2903 = vmatpush1.bf16.msra.mxu0 0
        %2904 = vmatprep.subr.bf16.mxu0 0
        %2905 = vmatpush1.bf16.msra.mxu0 0
        %2906 = vmatprep.subr.bf16.mxu0 0
        %2907 = vmatpush1.bf16.msra.mxu0 0
        %2908 = vmatprep.subr.bf16.mxu0 0
        %2909 = vmatpush1.bf16.msra.mxu0 0
        %2910 = vmatprep.mubr.bf16.mxu0 0
        %2911 = vmatmul.mubr.bf16.gmra.mrb[0].mxu0 %v2877
        %v2912 = vpop.f32.mrb[0].mxu0
        %v2913 = vadd.f32 0.0, %v2912
        %v2914 = vpop.f32.mrb[0].mxu0
        %v2915 = vadd.f32 0.0, %v2914
        %v2916 = vpop.f32.mrb[0].mxu0
        %v2917 = vadd.f32 0.0, %v2916
        %v2918 = vpop.f32.mrb[0].mxu0
        %v2919 = vadd.f32 0.0, %v2918
        %2920 = vdwg.mxu0
        %2921 = vmatprep.subr.bf16.mxu0 0
        %2922 = vmatpush1.bf16.msra.mxu0 %v608
        %2923 = vmatprep.subr.bf16.mxu0 0
        %2924 = vmatpush1.bf16.msra.mxu0 %v616
        %2925 = vmatprep.subr.bf16.mxu0 0
        %2926 = vmatpush1.bf16.msra.mxu0 %v624
        %2927 = vmatprep.subr.bf16.mxu0 0
        %2928 = vmatpush1.bf16.msra.mxu0 %v632
        %2929 = vmatprep.subr.bf16.mxu0 0
        %2930 = vmatpush1.bf16.msra.mxu0 %v640
        %2931 = vmatprep.subr.bf16.mxu0 0
        %2932 = vmatpush1.bf16.msra.mxu0 %v648
        %2933 = vmatprep.subr.bf16.mxu0 0
        %2934 = vmatpush1.bf16.msra.mxu0 %v656
        %2935 = vmatprep.subr.bf16.mxu0 0
        %2936 = vmatpush1.bf16.msra.mxu0 %v664
        %2937 = vmatprep.subr.bf16.mxu0 0
        %2938 = vmatpush1.bf16.msra.mxu0 0
        %2939 = vmatprep.subr.bf16.mxu0 0
        %2940 = vmatpush1.bf16.msra.mxu0 0
        %2941 = vmatprep.subr.bf16.mxu0 0
        %2942 = vmatpush1.bf16.msra.mxu0 0
        %2943 = vmatprep.subr.bf16.mxu0 0
        %2944 = vmatpush1.bf16.msra.mxu0 0
        %2945 = vmatprep.subr.bf16.mxu0 0
        %2946 = vmatpush1.bf16.msra.mxu0 0
        %2947 = vmatprep.subr.bf16.mxu0 0
        %2948 = vmatpush1.bf16.msra.mxu0 0
        %2949 = vmatprep.subr.bf16.mxu0 0
        %2950 = vmatpush1.bf16.msra.mxu0 0
        %2951 = vmatprep.subr.bf16.mxu0 0
        %2952 = vmatpush1.bf16.msra.mxu0 0
        %2953 = vmatprep.mubr.bf16.mxu0 0
        %2954 = vmatmul.mubr.bf16.gmra.mrb[0].mxu0 %v2877
        %v2955 = vpop.f32.mrb[0].mxu0
        %v2956 = vadd.f32 0.0, %v2955
        %v2957 = vpop.f32.mrb[0].mxu0
        %v2958 = vpop.f32.mrb[0].mxu0
        %v2959 = vadd.f32 0.0, %v2958
        %v2960 = vpop.f32.mrb[0].mxu0
        %2961 = vdwg.mxu0
        %v2962 = vpack.c.bf16 %v2600, %v2599
        %2963 = vmatprep.subr.bf16.mxu0 %v610
        %2964 = vmatpush1.bf16.msra.mxu0 %v609
        %2965 = vmatprep.subr.bf16.mxu0 %v618
        %2966 = vmatpush1.bf16.msra.mxu0 %v617
        %2967 = vmatprep.subr.bf16.mxu0 %v626
        %2968 = vmatpush1.bf16.msra.mxu0 %v625
        %2969 = vmatprep.subr.bf16.mxu0 %v634
        %2970 = vmatpush1.bf16.msra.mxu0 %v633
        %2971 = vmatprep.subr.bf16.mxu0 %v642
        %2972 = vmatpush1.bf16.msra.mxu0 %v641
        %2973 = vmatprep.subr.bf16.mxu0 %v650
        %2974 = vmatpush1.bf16.msra.mxu0 %v649
        %2975 = vmatprep.subr.bf16.mxu0 %v658
        %2976 = vmatpush1.bf16.msra.mxu0 %v657
        %2977 = vmatprep.subr.bf16.mxu0 %v666
        %2978 = vmatpush1.bf16.msra.mxu0 %v665
        %2979 = vmatprep.subr.bf16.mxu0 0
        %2980 = vmatpush1.bf16.msra.mxu0 0
        %2981 = vmatprep.subr.bf16.mxu0 0
        %2982 = vmatpush1.bf16.msra.mxu0 0
        %2983 = vmatprep.subr.bf16.mxu0 0
        %2984 = vmatpush1.bf16.msra.mxu0 0
        %2985 = vmatprep.subr.bf16.mxu0 0
        %2986 = vmatpush1.bf16.msra.mxu0 0
        %2987 = vmatprep.subr.bf16.mxu0 0
        %2988 = vmatpush1.bf16.msra.mxu0 0
        %2989 = vmatprep.subr.bf16.mxu0 0
        %2990 = vmatpush1.bf16.msra.mxu0 0
        %2991 = vmatprep.subr.bf16.mxu0 0
        %2992 = vmatpush1.bf16.msra.mxu0 0
        %2993 = vmatprep.subr.bf16.mxu0 0
        %2994 = vmatpush1.bf16.msra.mxu0 0
        %2995 = vmatprep.mubr.bf16.mxu0 0
        %2996 = vmatmul.mubr.bf16.gmra.mrb[0].mxu0 %v2962
        %v2997 = vpop.f32.mrb[0].mxu0
        %v2998 = vadd.f32 0.0, %v2997
        %v2999 = vpop.f32.mrb[0].mxu0
        %v3000 = vadd.f32 0.0, %v2999
        %v3001 = vpop.f32.mrb[0].mxu0
        %v3002 = vadd.f32 0.0, %v3001
        %v3003 = vpop.f32.mrb[0].mxu0
        %v3004 = vadd.f32 0.0, %v3003
        %3005 = vdwg.mxu0
        %3006 = vmatprep.subr.bf16.mxu0 0
        %3007 = vmatpush1.bf16.msra.mxu0 %v611
        %3008 = vmatprep.subr.bf16.mxu0 0
        %3009 = vmatpush1.bf16.msra.mxu0 %v619
        %3010 = vmatprep.subr.bf16.mxu0 0
        %3011 = vmatpush1.bf16.msra.mxu0 %v627
        %3012 = vmatprep.subr.bf16.mxu0 0
        %3013 = vmatpush1.bf16.msra.mxu0 %v635
        %3014 = vmatprep.subr.bf16.mxu0 0
        %3015 = vmatpush1.bf16.msra.mxu0 %v643
        %3016 = vmatprep.subr.bf16.mxu0 0
        %3017 = vmatpush1.bf16.msra.mxu0 %v651
        %3018 = vmatprep.subr.bf16.mxu0 0
        %3019 = vmatpush1.bf16.msra.mxu0 %v659
        %3020 = vmatprep.subr.bf16.mxu0 0
        %3021 = vmatpush1.bf16.msra.mxu0 %v667
        %3022 = vmatprep.subr.bf16.mxu0 0
        %3023 = vmatpush1.bf16.msra.mxu0 0
        %3024 = vmatprep.subr.bf16.mxu0 0
        %3025 = vmatpush1.bf16.msra.mxu0 0
        %3026 = vmatprep.subr.bf16.mxu0 0
        %3027 = vmatpush1.bf16.msra.mxu0 0
        %3028 = vmatprep.subr.bf16.mxu0 0
        %3029 = vmatpush1.bf16.msra.mxu0 0
        %3030 = vmatprep.subr.bf16.mxu0 0
        %3031 = vmatpush1.bf16.msra.mxu0 0
        %3032 = vmatprep.subr.bf16.mxu0 0
        %3033 = vmatpush1.bf16.msra.mxu0 0
        %3034 = vmatprep.subr.bf16.mxu0 0
        %3035 = vmatpush1.bf16.msra.mxu0 0
        %3036 = vmatprep.subr.bf16.mxu0 0
        %3037 = vmatpush1.bf16.msra.mxu0 0
        %3038 = vmatprep.mubr.bf16.mxu0 0
        %3039 = vmatmul.mubr.bf16.gmra.mrb[0].mxu0 %v2962
        %v3040 = vpop.f32.mrb[0].mxu0
        %v3041 = vadd.f32 0.0, %v3040
        %v3042 = vpop.f32.mrb[0].mxu0
        %v3043 = vpop.f32.mrb[0].mxu0
        %v3044 = vadd.f32 0.0, %v3043
        %v3045 = vpop.f32.mrb[0].mxu0
        %3046 = vdwg.mxu0
        %v3047 = vadd.f32 %v2913, %v2998
        %v3048 = vadd.f32 %v2917, %v3002
        %v3049 = vxor.u32 %v3047, 2147483648
        %v3050 = vxor.u32 %v3048, 2147483648
        %v3051 = vmul.f32 %v3049, 1.442695
        %v3052 = vpow.pop %v3051
        %v3053 = vmul.f32 %v3050, 1.442695
        %v3054 = vpow.pop %v3053
        %v3055 = vadd.f32 %v3052, 1.0
        %v3056 = vadd.f32 %v3054, 1.0
        %v3057 = vrcp.pop %v3055
        %v3058 = vmul.f32 1.0, %v3057
        %v3059 = vrcp.pop %v3056
        %v3060 = vmul.f32 1.0, %v3059
        %v3061 = vadd.f32 %v2915, %v3000
        %v3062 = vadd.f32 %v2919, %v3004
        %v3063 = vxor.u32 %v3061, 2147483648
        %v3064 = vxor.u32 %v3062, 2147483648
        %v3065 = vmul.f32 %v3063, 1.442695
        %v3066 = vpow.pop %v3065
        %v3067 = vmul.f32 %v3064, 1.442695
        %v3068 = vpow.pop %v3067
        %v3069 = vadd.f32 %v3066, 1.0
        %v3070 = vadd.f32 %v3068, 1.0
        %v3071 = vrcp.pop %v3069
        %v3072 = vmul.f32 1.0, %v3071
        %v3073 = vrcp.pop %v3070
        %v3074 = vmul.f32 1.0, %v3073
        %v3075 = vmul.f32 %v3058, %v3041
        %v3076 = vmul.f32 %v3060, %v3044
        %v3077 = vadd.f32 %v2956, %v3075
        %v3078 = vadd.f32 %v2959, %v3076
        %v3079 = vtanh.pop %v3077
        %v3080 = vtanh.pop %v3078
        %v3081 = vsub.f32 1.0, %v3072
        %v3082 = vsub.f32 1.0, %v3074
        %v3083 = vmul.f32 %v3081, %v3079
        %v3084 = vmul.f32 %v3082, %v3080
        %v3085 = vmul.f32 %v3072, %v2599
        %v3086 = vmul.f32 %v3074, %v2600
        %v3087 = vadd.f32 %v3083, %v3085
        %v3088 = vadd.f32 %v3084, %v3086
        %3089 = vadd.xlane.f32.xlu0 %v3087
        %v3090 = vpop.xlane.xlu0 %3089
        %3091 = vadd.xlane.f32.xlu0 %v3088
        %v3092 = vpop.xlane.xlu0 %3091
        %v3093 = vmul.f32 %v3090, %v789
        %v3094 = vmul.f32 %v3092, %v789
        %v3095 = vsub.f32 %v3087, %v3093
        %v3096 = vsub.f32 %v3088, %v3094
        %v3097 = vmul.f32 %v3095, %v3095
        %v3098 = vmul.f32 %v3096, %v3096
        %3099 = vadd.xlane.f32.xlu0 %v3097
        %v3100 = vpop.xlane.xlu0 %3099
        %3101 = vadd.xlane.f32.xlu0 %v3098
        %v3102 = vpop.xlane.xlu0 %3101
        %v3103 = vmul.f32 %v3100, %v789
        %v3104 = vmul.f32 %v3102, %v789
        %v3105 = vadd.f32 %v3103, 1e-05
        %v3106 = vadd.f32 %v3104, 1e-05
        %v3107 = vrsqrt.pop %v3105
        %v3108 = vrsqrt.pop %v3106
        %v3109 = vmul.f32 %v3095, %v3107
        %v3110 = vmul.f32 %v3096, %v3108
        %v3111 = vmul.f32 %v3109, %v413
        %v3112 = vmul.f32 %v3110, %v413
        %v3113 = vadd.f32 %v3111, %v418
        %v3114 = vadd.f32 %v3112, %v418
        %v3115 = vpack.c.bf16 %v3114, %v3113
        %3116 = vmatprep.subr.bf16.mxu0 0
        %3117 = vmatpush1.bf16.msra.mxu0 %v612
        %3118 = vmatprep.subr.bf16.mxu0 0
        %3119 = vmatpush1.bf16.msra.mxu0 %v620
        %3120 = vmatprep.subr.bf16.mxu0 0
        %3121 = vmatpush1.bf16.msra.mxu0 %v628
        %3122 = vmatprep.subr.bf16.mxu0 0
        %3123 = vmatpush1.bf16.msra.mxu0 %v636
        %3124 = vmatprep.subr.bf16.mxu0 0
        %3125 = vmatpush1.bf16.msra.mxu0 %v644
        %3126 = vmatprep.subr.bf16.mxu0 0
        %3127 = vmatpush1.bf16.msra.mxu0 %v652
        %3128 = vmatprep.subr.bf16.mxu0 0
        %3129 = vmatpush1.bf16.msra.mxu0 %v660
        %3130 = vmatprep.subr.bf16.mxu0 0
        %3131 = vmatpush1.bf16.msra.mxu0 %v668
        %3132 = vmatprep.subr.bf16.mxu0 0
        %3133 = vmatpush1.bf16.msra.mxu0 0
        %3134 = vmatprep.subr.bf16.mxu0 0
        %3135 = vmatpush1.bf16.msra.mxu0 0
        %3136 = vmatprep.subr.bf16.mxu0 0
        %3137 = vmatpush1.bf16.msra.mxu0 0
        %3138 = vmatprep.subr.bf16.mxu0 0
        %3139 = vmatpush1.bf16.msra.mxu0 0
        %3140 = vmatprep.subr.bf16.mxu0 0
        %3141 = vmatpush1.bf16.msra.mxu0 0
        %3142 = vmatprep.subr.bf16.mxu0 0
        %3143 = vmatpush1.bf16.msra.mxu0 0
        %3144 = vmatprep.subr.bf16.mxu0 0
        %3145 = vmatpush1.bf16.msra.mxu0 0
        %3146 = vmatprep.subr.bf16.mxu0 0
        %3147 = vmatpush1.bf16.msra.mxu0 0
        %3148 = vmatprep.mubr.bf16.mxu0 0
        %3149 = vmatmul.mubr.bf16.gmra.mrb[0].mxu0 %v3115
        %v3150 = vpop.f32.mrb[0].mxu0
        %v3151 = vadd.f32 %v423, %v3150
        %v3152 = vpop.f32.mrb[0].mxu0
        %v3153 = vpop.f32.mrb[0].mxu0
        %v3154 = vadd.f32 %v423, %v3153
        %v3155 = vpop.f32.mrb[0].mxu0
        %3156 = vdwg.mxu0
        %v3157 = vmax.f32 %v3151, 0.0
        %v3158 = vmax.f32 %v3154, 0.0
        %v3159 = vpack.c.bf16 %v3158, %v3157
        %3160 = vmatprep.subr.bf16.mxu0 0
        %3161 = vmatpush1.bf16.msra.mxu0 %v685
        %3162 = vmatprep.subr.bf16.mxu0 0
        %3163 = vmatpush1.bf16.msra.mxu0 %v686
        %3164 = vmatprep.subr.bf16.mxu0 0
        %3165 = vmatpush1.bf16.msra.mxu0 %v687
        %3166 = vmatprep.subr.bf16.mxu0 0
        %3167 = vmatpush1.bf16.msra.mxu0 %v688
        %3168 = vmatprep.subr.bf16.mxu0 0
        %3169 = vmatpush1.bf16.msra.mxu0 %v689
        %3170 = vmatprep.subr.bf16.mxu0 0
        %3171 = vmatpush1.bf16.msra.mxu0 %v690
        %3172 = vmatprep.subr.bf16.mxu0 0
        %3173 = vmatpush1.bf16.msra.mxu0 %v691
        %3174 = vmatprep.subr.bf16.mxu0 0
        %3175 = vmatpush1.bf16.msra.mxu0 %v692
        %3176 = vmatprep.subr.bf16.mxu0 0
        %3177 = vmatpush1.bf16.msra.mxu0 0
        %3178 = vmatprep.subr.bf16.mxu0 0
        %3179 = vmatpush1.bf16.msra.mxu0 0
        %3180 = vmatprep.subr.bf16.mxu0 0
        %3181 = vmatpush1.bf16.msra.mxu0 0
        %3182 = vmatprep.subr.bf16.mxu0 0
        %3183 = vmatpush1.bf16.msra.mxu0 0
        %3184 = vmatprep.subr.bf16.mxu0 0
        %3185 = vmatpush1.bf16.msra.mxu0 0
        %3186 = vmatprep.subr.bf16.mxu0 0
        %3187 = vmatpush1.bf16.msra.mxu0 0
        %3188 = vmatprep.subr.bf16.mxu0 0
        %3189 = vmatpush1.bf16.msra.mxu0 0
        %3190 = vmatprep.subr.bf16.mxu0 0
        %3191 = vmatpush1.bf16.msra.mxu0 0
        %3192 = vmatprep.mubr.bf16.mxu0 0
        %3193 = vmatmul.mubr.bf16.gmra.mrb[0].mxu0 %v3159
        %v3194 = vpop.f32.mrb[0].mxu0
        %v3195 = vadd.f32 0.0, %v3194
        %v3196 = vpop.f32.mrb[0].mxu0
        %v3197 = vpop.f32.mrb[0].mxu0
        %v3198 = vadd.f32 0.0, %v3197
        %v3199 = vpop.f32.mrb[0].mxu0
        %3200 = vdwg.mxu0
        %v3201 = vadd.f32 %v3087, %v3195
        %v3202 = vadd.f32 %v3088, %v3198
        %v3203 = vadd.f32 %v3201, %v428
        %v3204 = vadd.f32 %v3202, %v428
        %3205 = vst [vmem:[%s384] sm:$0xff] %v3203
        %3206 = vst [vmem:[%s384 + $0x8] sm:$0xff] %v3204
        %3207 = vst [vmem:[%s391] sm:$0xff] %v2783
        %3208 = vst [vmem:[%s391 + $0x8] sm:$0xff] %v2784
        %s3209 = sand.u32 %s176, 1
        %s3210 = scalar_lea.sflag [#allocation4], %s3209
        %s3211 = sand.u32 %s176, 1
        %s3212 = smul.addr %s3211, 16
        %s3213 = scalar_lea.vmem [#allocation11], %s3212
        %s3214 = sand.u32 %s202, 1
        %s3215 = scalar_lea.sflag [#allocation13], %s3214
        %s3216 = sand.u32 %s202, 1
        %s3217 = smul.addr %s3216, 16
        %s3218 = scalar_lea.vmem [#allocation12], %s3217
        // Predicated region
        $region65: #{tpu_custom_call.1} parent=43 // pred_check
          %p3219 = pneg %p186
        $region66: #{tpu_custom_call.1} parent=43 // pred_check_branch
          %3221 = sbr.rel (%p3219) target = $region68
        $region67: #{tpu_custom_call.1} parent=43 // pred_region
          %s3222 = smul.u32 2, %s32
          %s3224 = ssub.s32 256, 256
          %3225 = vsyncadd %s3210, %s3224
          %s3226 = smul.addr %s3222, 128
          %s3227 = scalar_lea.hbm %s6, %s3226
          %s3228 = sshll.u32 %s3213, 4
          %s3229 = int_to_ptr.vmem [resolvable:$true] %s3228
          %3234 = dma.vmem_to_hbm [thread:$0]  %s3229, 256, %s3227, %s3210, 128, 128, 8
        $region68: #{tpu_custom_call.1} parent=43 // pred_fallthru
          _
        // Predicated region
        $region69: #{tpu_custom_call.1} parent=43 // pred_check
          %p3235 = pneg %p212
        $region70: #{tpu_custom_call.1} parent=43 // pred_check_branch
          %3237 = sbr.rel (%p3235) target = $region72
        $region71: #{tpu_custom_call.1} parent=43 // pred_region
          %s3238 = smul.u32 2, %s32
          %s3240 = ssub.s32 256, 256
          %3241 = vsyncadd %s3215, %s3240
          %s3242 = smul.addr %s3238, 128
          %s3243 = scalar_lea.hbm %s7, %s3242
          %s3244 = sshll.u32 %s3218, 4
          %s3245 = int_to_ptr.vmem [resolvable:$true] %s3244
          %3250 = dma.vmem_to_hbm [thread:$0]  %s3245, 256, %s3243, %s3215, 128, 128, 8
        $region72: #{tpu_custom_call.1} parent=43 // pred_fallthru
          _
      $region44: #{tpu_custom_call.1} parent=5 // pred_fallthru
        _
      %p3251 = scmp.le.s32.totalorder 2, %s27
      // Predicated region
      $region73: #{tpu_custom_call.1} parent=5 // pred_check
        %p3252 = pneg %p3251
      $region74: #{tpu_custom_call.1} parent=5 // pred_check_branch
        %3254 = sbr.rel (%p3252) target = $region76
      $region75: #{tpu_custom_call.1} parent=5 // pred_region
        %s3255 = ssub.s32 %s27, 2
        // Predicated region
        $region77: #{tpu_custom_call.1} parent=75 // pred_check
          %p3256 = pneg %p192
        $region78: #{tpu_custom_call.1} parent=75 // pred_check_branch
          %3258 = sbr.rel (%p3256) target = $region80
        $region79: #{tpu_custom_call.1} parent=75 // pred_region
          %s3259 = sand.u32 %s177, 1
          %s3260 = scalar_lea.sflag [#allocation4], %s3259
          %s3261 = sand.u32 %s177, 1
          %s3262 = smul.addr %s3261, 16
          %s3263 = scalar_lea.vmem [#allocation11], %s3262
          %3264 = dma.done %s3260, 256
        $region80: #{tpu_custom_call.1} parent=75 // pred_fallthru
          _
        // Predicated region
        $region81: #{tpu_custom_call.1} parent=75 // pred_check
          %p3265 = pneg %p218
        $region82: #{tpu_custom_call.1} parent=75 // pred_check_branch
          %3267 = sbr.rel (%p3265) target = $region84
        $region83: #{tpu_custom_call.1} parent=75 // pred_region
          %s3268 = sand.u32 %s203, 1
          %s3269 = scalar_lea.sflag [#allocation13], %s3268
          %s3270 = sand.u32 %s203, 1
          %s3271 = smul.addr %s3270, 16
          %s3272 = scalar_lea.vmem [#allocation12], %s3271
          %3273 = dma.done %s3269, 256
        $region84: #{tpu_custom_call.1} parent=75 // pred_fallthru
          _
      $region76: #{tpu_custom_call.1} parent=5 // pred_fallthru
        _
    $region6: #{tpu_custom_call.1} parent=1 // loop_footer
      %s31 = sadd.s32 1, %s27
    $region7: #{tpu_custom_call.1} parent=1 // loop_footer_branch
      %26 = sbr.rel target = $region3
    $region8: #{tpu_custom_call.1} parent=1 // loop_exit
      _
    %3274 = vsyncpa [#allocation3], 1
    %s3275 = scalar_lea.sflag [#allocation3], 1
    %3276 = vsyncpa %s3275, 1
    %3277 = vsyncpa [#allocation6], 1
    %s3278 = scalar_lea.sflag [#allocation6], 1
    %3279 = vsyncpa %s3278, 1
    %3280 = vsyncpa [#allocation9], 1
    %3281 = vsyncpa [#allocation4], 1
    %s3282 = scalar_lea.sflag [#allocation4], 1
    %3283 = vsyncpa %s3282, 1
    %3284 = vsyncpa [#allocation13], 1
    %s3285 = scalar_lea.sflag [#allocation13], 1
    %3286 = vsyncpa %s3285, 1

</llo_original>
